<compile_context>
chip_gen: v7x
topology: tpu7x:2x2x1
jax: 0.10.0
libtpu: 0.0.40
codegen_flags: <defaults>
</compile_context>

<pallas_src>
import functools

import jax
import jax.numpy as jnp
from jax.experimental import pallas as pl
from jax.experimental.pallas import tpu as pltpu


def resnet_block_kernel(x_ref, w1_ref, b1_ref, w2_ref, b2_ref, alpha_ref,
                        o_ref, xbuf_ref, col_ref, acc_ref, *, width, guard, seg):
    # x_ref:    (BT, C, H*W)     float32   (NCHW with spatial flattened)
    # w{1,2}:   (C, 9*C)         bfloat16  column index = (kh*3+kw)*C + ci
    # b{1,2}:   (C, 1)           float32
    # alpha:    (1,)             float32 scalar in SMEM (single shared PReLU slope)
    # o_ref:    (BT, C, H*W)     float32
    # xbuf_ref: (C, BT*seg)      bfloat16  flat H-padded activation (zero guard bands)
    # col_ref:  (9*C, BT*H*W)    bfloat16  im2col patches (matmul RHS)
    # acc_ref:  (C, BT*H*W)      float32   conv accumulator
    bt, C, HW = x_ref.shape
    W = width
    alpha = alpha_ref[0]

    # W-border masks: kw=0 reads column w-1 (invalid at w==0), kw=2 reads w+1 (invalid
    # at w==W-1). Computed once; VPU select per tap, XLU handles the lane shifts.
    wcol = jax.lax.broadcasted_iota(jnp.int32, (1, HW), 1) % W
    not_left = wcol != 0
    not_right = wcol != (W - 1)

    def conv3x3(w_ref):
        # Build im2col RHS: 9 taps x BT samples, each a constant-lane-offset slice of
        # the flat padded buffer, then ONE fused MXU matmul (M=C, K=9*C, N=BT*H*W).
        for b in range(bt):
            istart = b * seg + guard
            for kh in range(3):
                for kw in range(3):
                    k = kh * 3 + kw
                    lo = istart + (kh - 1) * W + (kw - 1)
                    src = xbuf_ref[:, lo:lo + HW]
                    if kw == 0:
                        src = jnp.where(not_left, src, 0)
                    elif kw == 2:
                        src = jnp.where(not_right, src, 0)
                    col_ref[k * C:(k + 1) * C, b * HW:(b + 1) * HW] = src
        acc_ref[...] = jnp.dot(w_ref[...], col_ref[...],
                               preferred_element_type=jnp.float32)

    # Zero only the halo guard bands (top/bottom padding rows + corner under/overflow);
    # the interior is fully overwritten below — no full-buffer memset per grid step.
    zguard = jnp.zeros((C, W + 1), jnp.bfloat16)
    for b in range(bt):
        istart = b * seg + guard                     # 128-lane aligned interior start
        xbuf_ref[:, istart - (W + 1):istart] = zguard
        xbuf_ref[:, istart + HW:istart + HW + W + 1] = zguard
        xbuf_ref[:, istart:istart + HW] = x_ref[b].astype(jnp.bfloat16)

    # conv1 + bias + PReLU (f32 epilogue); activation stays in VMEM (bf16) for conv2.
    conv3x3(w1_ref)
    bias1 = b1_ref[...]
    for b in range(bt):
        istart = b * seg + guard
        y = acc_ref[:, b * HW:(b + 1) * HW] + bias1
        y = jnp.where(y >= 0, y, alpha * y)
        xbuf_ref[:, istart:istart + HW] = y.astype(jnp.bfloat16)

    # conv2 + bias + residual (f32 original input) + PReLU; lane-dense store.
    conv3x3(w2_ref)
    bias2 = b2_ref[...]
    for b in range(bt):
        y = acc_ref[:, b * HW:(b + 1) * HW] + bias2 + x_ref[b]
        o_ref[b] = jnp.where(y >= 0, y, alpha * y).astype(o_ref.dtype)


def resnet_block(x_nchw, w1_oihw, b1, w2_oihw, b2, alpha,
                 *, kernel_size=3, stride=1, padding=1, batch_tile=None):
    """Forward pass of RBPN ResnetBlock (norm=None, PReLU). NCHW in / NCHW out."""
    assert kernel_size == 3 and stride == 1 and padding == (kernel_size - 1) // 2, \
        "only kernel_size=3, stride=1, padding=1 is implemented"

    N, C, H, W = x_nchw.shape
    assert w1_oihw.shape == (C, C, 3, 3) and w2_oihw.shape == (C, C, 3, 3)
    HW = H * W

    if batch_tile is None:
        # Amortize per-grid-step overhead on tiny RBPN maps; with N == 1 on v7x you
        # would instead split H across the grid to feed both TensorCores (see TODO).
        batch_tile = min(N, 4)
    assert N % batch_tile == 0, "N must be divisible by batch_tile"

    # Flat padded-activation geometry: each sample's interior starts 128-lane aligned
    # with >= W+1 zero-guard lanes on both sides (H padding + corner under/overflow).
    guard = ((W + 1 + 127) // 128) * 128
    seg = ((guard + HW + W + 1 + 127) // 128) * 128

    # NCHW-native: free reshape only, no HBM transpose round-trips across the RBPN chain.
    x = x_nchw.reshape(N, C, HW).astype(jnp.float32)

    def pack_weight(w_oihw):
        # OIHW -> (co, kh, kw, ci) -> (C, 9*C); bf16 MXU LHS of the transposed matmul.
        return jnp.transpose(w_oihw, (0, 2, 3, 1)).reshape(C, 9 * C).astype(jnp.bfloat16)

    w1m = pack_weight(w1_oihw)
    w2m = pack_weight(w2_oihw)
    b1v = b1.reshape(C, 1).astype(jnp.float32)
    b2v = b2.reshape(C, 1).astype(jnp.float32)
    a1 = jnp.asarray(alpha, jnp.float32).reshape(1)

    kernel = functools.partial(resnet_block_kernel, width=W, guard=guard, seg=seg)

    out = pl.pallas_call(
        kernel,
        out_shape=jax.ShapeDtypeStruct((N, C, HW), jnp.float32),
        grid_spec=pltpu.PrefetchScalarGridSpec(
            num_scalar_prefetch=0,
            grid=(N // batch_tile,),
            in_specs=[
                pl.BlockSpec((batch_tile, C, HW), lambda g: (g, 0, 0)),   # x (f32)
                # Weights/biases have constant index maps; their double-buffer costs only
                # ~200 KiB at these sizes, so we skip pl.Buffered(1) for portability.
                pl.BlockSpec((C, 9 * C), lambda g: (0, 0)),               # w1 (bf16)
                pl.BlockSpec((C, 1), lambda g: (0, 0)),                   # b1
                pl.BlockSpec((C, 9 * C), lambda g: (0, 0)),               # w2 (bf16)
                pl.BlockSpec((C, 1), lambda g: (0, 0)),                   # b2
                pl.BlockSpec(memory_space=pltpu.MemorySpace.SMEM),        # alpha scalar
            ],
            out_specs=pl.BlockSpec((batch_tile, C, HW), lambda g: (g, 0, 0)),
            scratch_shapes=[
                pltpu.VMEM((C, batch_tile * seg), jnp.bfloat16),          # padded activation
                pltpu.VMEM((9 * C, batch_tile * HW), jnp.bfloat16),       # im2col RHS
                pltpu.VMEM((C, batch_tile * HW), jnp.float32),            # conv accumulator
            ],
        ),
        compiler_params=pltpu.CompilerParams(
            dimension_semantics=("parallel",),    # batch tiles shard across v7x TCs
            vmem_limit_bytes=32 * 1024 * 1024,    # safe on v5e/v6e/v7x at these tile sizes
        ),
    )(x, w1m, b1v, w2m, b2v, a1)

    return out.reshape(N, C, H, W)   # free reshape back to NCHW


def _reference(x, w1, b1, w2, b2, alpha):
    # Pure-JAX reference mirroring the kernel's bf16 MXU operands (f32 accumulation,
    # f32 epilogue, f32 residual).
    def conv(inp, w):
        return jax.lax.conv_general_dilated(
            inp.astype(jnp.bfloat16), w.astype(jnp.bfloat16),
            window_strides=(1, 1), padding=((1, 1), (1, 1)),
            dimension_numbers=("NCHW", "OIHW", "NCHW"),
            preferred_element_type=jnp.float32)

    out = conv(x, w1) + b1[None, :, None, None]
    out = jnp.where(out >= 0, out, alpha * out)
    out = conv(out, w2) + b2[None, :, None, None]
    out = out + x
    return jnp.where(out >= 0, out, alpha * out)


if __name__ == "__main__":
    # RBPN builds ResnetBlock(base_filter=64, 3, 1, 1, activation='prelu', norm=None).
    N, C, H, W = 4, 64, 16, 16
    key = jax.random.PRNGKey(0)
    kx, kw1, kb1, kw2, kb2 = jax.random.split(key, 5)

    x = jax.random.normal(kx, (N, C, H, W), dtype=jnp.float32)
    fan_in = C * 3 * 3
    bound = 1.0 / (fan_in ** 0.5)          # PyTorch Conv2d default init scale
    w1 = jax.random.uniform(kw1, (C, C, 3, 3), jnp.float32, -bound, bound)
    b1 = jax.random.uniform(kb1, (C,), jnp.float32, -bound, bound)
    w2 = jax.random.uniform(kw2, (C, C, 3, 3), jnp.float32, -bound, bound)
    b2 = jax.random.uniform(kb2, (C,), jnp.float32, -bound, bound)
    alpha = jnp.float32(0.25)              # PReLU default init (single shared slope)

    out = jax.block_until_ready(resnet_block(x, w1, b1, w2, b2, alpha, batch_tile=2))
    ref = _reference(x, w1, b1, w2, b2, alpha)

    assert out.shape == (N, C, H, W)
    max_err = float(jnp.max(jnp.abs(out - ref)))
    assert jnp.allclose(out, ref, atol=3e-3, rtol=3e-3), f"max abs err = {max_err}"
    print("KERNEL_OK")
</pallas_src>

<mosaic_0001>
module attributes {stable_mosaic.version = 11 : i64} {
  func.func @resnet_block_kernel(%arg0: i32, %arg1: memref<2x64x256xf32, #tpu.memory_space<vmem>>, %arg2: memref<64x576xbf16, #tpu.memory_space<vmem>>, %arg3: memref<64x1xf32, #tpu.memory_space<vmem>>, %arg4: memref<64x576xbf16, #tpu.memory_space<vmem>>, %arg5: memref<64x1xf32, #tpu.memory_space<vmem>>, %arg6: memref<1xf32, #tpu.memory_space<smem>>, %arg7: memref<2x64x256xf32, #tpu.memory_space<vmem>>, %arg8: memref<64x1024xbf16, #tpu.memory_space<vmem>>, %arg9: memref<576x512xbf16, #tpu.memory_space<vmem>>, %arg10: memref<64x512xf32, #tpu.memory_space<vmem>>) attributes {dimension_semantics = [#tpu.dimension_semantics<parallel>], iteration_bounds = array<i64: 2>, scalar_prefetch = 0 : i64, scratch_operands = 3 : i64, tpu.core_type = #tpu.core_type<tc>, window_params = [{transform_indices = @transform_0, window_bounds = array<i64: 2, 64, 256>}, {pipeline_mode = #tpu.pipeline_mode<synchronous>, transform_indices = @transform_1, window_bounds = array<i64: 64, 576>}, {pipeline_mode = #tpu.pipeline_mode<synchronous>, transform_indices = @transform_2, window_bounds = array<i64: 64, 1>}, {pipeline_mode = #tpu.pipeline_mode<synchronous>, transform_indices = @transform_3, window_bounds = array<i64: 64, 576>}, {pipeline_mode = #tpu.pipeline_mode<synchronous>, transform_indices = @transform_4, window_bounds = array<i64: 64, 1>}, {transform_indices = @transform_5, window_bounds = array<i64: 1>}, {transform_indices = @transform_6, window_bounds = array<i64: 2, 64, 256>}]} {
    %c0 = arith.constant 0 : index
    %0 = memref.load %arg6[%c0] : memref<1xf32, #tpu.memory_space<smem>>
    %1 = tpu.iota {dimensions = array<i32: 1>} : vector<1x256xi32>
    %c16_i32 = arith.constant 16 : i32
    %c0_i32 = arith.constant 0 : i32
    %2 = arith.cmpi eq, %c16_i32, %c0_i32 : i32
    %c1_i32 = arith.constant 1 : i32
    %3 = arith.select %2, %c1_i32, %c16_i32 : i32
    %4 = vector.broadcast %3 : i32 to vector<1x256xi32>
    %5 = arith.remsi %1, %4 : vector<1x256xi32>
    %c0_i32_0 = arith.constant 0 : i32
    %6 = vector.broadcast %c0_i32_0 : i32 to vector<1x256xi32>
    %7 = arith.cmpi ne, %5, %6 : vector<1x256xi32>
    %c0_i32_1 = arith.constant 0 : i32
    %8 = vector.broadcast %c0_i32_1 : i32 to vector<1x256xi32>
    %9 = arith.cmpi slt, %5, %8 : vector<1x256xi32>
    %c0_i32_2 = arith.constant 0 : i32
    %10 = arith.cmpi slt, %3, %c0_i32_2 : i32
    %11 = vector.broadcast %10 : i1 to vector<1x256xi1>
    %12 = vector.broadcast %11 : vector<1x256xi1> to vector<1x256xi1>
    %13 = arith.xori %9, %12 : vector<1x256xi1>
    %14 = arith.andi %13, %7 : vector<1x256xi1>
    %15 = vector.broadcast %3 : i32 to vector<1x256xi32>
    %16 = arith.addi %5, %15 : vector<1x256xi32>
    %17 = arith.select %14, %16, %5 : vector<1x256xi1>, vector<1x256xi32>
    %c0_i32_3 = arith.constant 0 : i32
    %18 = vector.broadcast %c0_i32_3 : i32 to vector<1x256xi32>
    %19 = arith.cmpi ne, %17, %18 : vector<1x256xi32>
    %c15_i32 = arith.constant 15 : i32
    %20 = vector.broadcast %c15_i32 : i32 to vector<1x256xi32>
    %21 = arith.cmpi ne, %17, %20 : vector<1x256xi32>
    %cst = arith.constant 0.000000e+00 : bf16
    %22 = vector.broadcast %cst : bf16 to vector<64x17xbf16>
    %c0_4 = arith.constant 0 : index
    %c111 = arith.constant 111 : index
    %23 = vector.load %arg8[%c0_4, %c111] : memref<64x1024xbf16, #tpu.memory_space<vmem>>, vector<64x17xbf16>
    tpu.vector_store %arg8[%c0_4, %c111], %22 {strides = array<i32>} : memref<64x1024xbf16, #tpu.memory_space<vmem>>, vector<64x17xbf16>,
    %c0_5 = arith.constant 0 : index
    %c384 = arith.constant 384 : index
    %24 = vector.load %arg8[%c0_5, %c384] : memref<64x1024xbf16, #tpu.memory_space<vmem>>, vector<64x17xbf16>
    tpu.vector_store %arg8[%c0_5, %c384], %22 {strides = array<i32>} : memref<64x1024xbf16, #tpu.memory_space<vmem>>, vector<64x17xbf16>,
    %c0_6 = arith.constant 0 : index
    %c0_7 = arith.constant 0 : index
    %c0_8 = arith.constant 0 : index
    %25 = vector.load %arg1[%c0_6, %c0_7, %c0_8] : memref<2x64x256xf32, #tpu.memory_space<vmem>>, vector<1x64x256xf32>
    %26 = vector.shape_cast %25 : vector<1x64x256xf32> to vector<64x256xf32>
    %27 = arith.truncf %26 : vector<64x256xf32> to vector<64x256xbf16>
    %c0_9 = arith.constant 0 : index
    %c128 = arith.constant 128 : index
    %28 = vector.load %arg8[%c0_9, %c128] : memref<64x1024xbf16, #tpu.memory_space<vmem>>, vector<64x256xbf16>
    tpu.vector_store %arg8[%c0_9, %c128], %27 {strides = array<i32>} : memref<64x1024xbf16, #tpu.memory_space<vmem>>, vector<64x256xbf16>,
    %c0_10 = arith.constant 0 : index
    %c623 = arith.constant 623 : index
    %29 = vector.load %arg8[%c0_10, %c623] : memref<64x1024xbf16, #tpu.memory_space<vmem>>, vector<64x17xbf16>
    tpu.vector_store %arg8[%c0_10, %c623], %22 {strides = array<i32>} : memref<64x1024xbf16, #tpu.memory_space<vmem>>, vector<64x17xbf16>,
    %c0_11 = arith.constant 0 : index
    %c896 = arith.constant 896 : index
    %30 = vector.load %arg8[%c0_11, %c896] : memref<64x1024xbf16, #tpu.memory_space<vmem>>, vector<64x17xbf16>
    tpu.vector_store %arg8[%c0_11, %c896], %22 {strides = array<i32>} : memref<64x1024xbf16, #tpu.memory_space<vmem>>, vector<64x17xbf16>,
    %c1 = arith.constant 1 : index
    %c0_12 = arith.constant 0 : index
    %c0_13 = arith.constant 0 : index
    %31 = vector.load %arg1[%c1, %c0_12, %c0_13] : memref<2x64x256xf32, #tpu.memory_space<vmem>>, vector<1x64x256xf32>
    %32 = vector.shape_cast %31 : vector<1x64x256xf32> to vector<64x256xf32>
    %33 = arith.truncf %32 : vector<64x256xf32> to vector<64x256xbf16>
    %c0_14 = arith.constant 0 : index
    %c640 = arith.constant 640 : index
    %34 = vector.load %arg8[%c0_14, %c640] : memref<64x1024xbf16, #tpu.memory_space<vmem>>, vector<64x256xbf16>
    tpu.vector_store %arg8[%c0_14, %c640], %33 {strides = array<i32>} : memref<64x1024xbf16, #tpu.memory_space<vmem>>, vector<64x256xbf16>,
    %c0_15 = arith.constant 0 : index
    %c111_16 = arith.constant 111 : index
    %35 = vector.load %arg8[%c0_15, %c111_16] : memref<64x1024xbf16, #tpu.memory_space<vmem>>, vector<64x256xbf16>
    %c0_i32_17 = arith.constant 0 : i32
    %36 = arith.sitofp %c0_i32_17 : i32 to bf16
    %37 = vector.shape_cast %19 : vector<1x256xi1> to vector<1x256xi1>
    %38 = vector.broadcast %37 : vector<1x256xi1> to vector<64x256xi1>
    %39 = vector.broadcast %36 : bf16 to vector<64x256xbf16>
    %40 = arith.select %38, %35, %39 : vector<64x256xi1>, vector<64x256xbf16>
    %c0_18 = arith.constant 0 : index
    %c0_19 = arith.constant 0 : index
    %41 = vector.load %arg9[%c0_18, %c0_19] : memref<576x512xbf16, #tpu.memory_space<vmem>>, vector<64x256xbf16>
    tpu.vector_store %arg9[%c0_18, %c0_19], %40 {strides = array<i32>} : memref<576x512xbf16, #tpu.memory_space<vmem>>, vector<64x256xbf16>,
    %c0_20 = arith.constant 0 : index
    %c112 = arith.constant 112 : index
    %42 = vector.load %arg8[%c0_20, %c112] : memref<64x1024xbf16, #tpu.memory_space<vmem>>, vector<64x256xbf16>
    %c64 = arith.constant 64 : index
    %c0_21 = arith.constant 0 : index
    %43 = vector.load %arg9[%c64, %c0_21] : memref<576x512xbf16, #tpu.memory_space<vmem>>, vector<64x256xbf16>
    tpu.vector_store %arg9[%c64, %c0_21], %42 {strides = array<i32>} : memref<576x512xbf16, #tpu.memory_space<vmem>>, vector<64x256xbf16>,
    %c0_22 = arith.constant 0 : index
    %c113 = arith.constant 113 : index
    %44 = vector.load %arg8[%c0_22, %c113] : memref<64x1024xbf16, #tpu.memory_space<vmem>>, vector<64x256xbf16>
    %c0_i32_23 = arith.constant 0 : i32
    %45 = arith.sitofp %c0_i32_23 : i32 to bf16
    %46 = vector.shape_cast %21 : vector<1x256xi1> to vector<1x256xi1>
    %47 = vector.broadcast %46 : vector<1x256xi1> to vector<64x256xi1>
    %48 = vector.broadcast %45 : bf16 to vector<64x256xbf16>
    %49 = arith.select %47, %44, %48 : vector<64x256xi1>, vector<64x256xbf16>
    %c128_24 = arith.constant 128 : index
    %c0_25 = arith.constant 0 : index
    %50 = vector.load %arg9[%c128_24, %c0_25] : memref<576x512xbf16, #tpu.memory_space<vmem>>, vector<64x256xbf16>
    tpu.vector_store %arg9[%c128_24, %c0_25], %49 {strides = array<i32>} : memref<576x512xbf16, #tpu.memory_space<vmem>>, vector<64x256xbf16>,
    %c0_26 = arith.constant 0 : index
    %c127 = arith.constant 127 : index
    %51 = vector.load %arg8[%c0_26, %c127] : memref<64x1024xbf16, #tpu.memory_space<vmem>>, vector<64x256xbf16>
    %c0_i32_27 = arith.constant 0 : i32
    %52 = arith.sitofp %c0_i32_27 : i32 to bf16
    %53 = vector.shape_cast %19 : vector<1x256xi1> to vector<1x256xi1>
    %54 = vector.broadcast %53 : vector<1x256xi1> to vector<64x256xi1>
    %55 = vector.broadcast %52 : bf16 to vector<64x256xbf16>
    %56 = arith.select %54, %51, %55 : vector<64x256xi1>, vector<64x256xbf16>
    %c192 = arith.constant 192 : index
    %c0_28 = arith.constant 0 : index
    %57 = vector.load %arg9[%c192, %c0_28] : memref<576x512xbf16, #tpu.memory_space<vmem>>, vector<64x256xbf16>
    tpu.vector_store %arg9[%c192, %c0_28], %56 {strides = array<i32>} : memref<576x512xbf16, #tpu.memory_space<vmem>>, vector<64x256xbf16>,
    %c0_29 = arith.constant 0 : index
    %c128_30 = arith.constant 128 : index
    %58 = vector.load %arg8[%c0_29, %c128_30] : memref<64x1024xbf16, #tpu.memory_space<vmem>>, vector<64x256xbf16>
    %c256 = arith.constant 256 : index
    %c0_31 = arith.constant 0 : index
    %59 = vector.load %arg9[%c256, %c0_31] : memref<576x512xbf16, #tpu.memory_space<vmem>>, vector<64x256xbf16>
    tpu.vector_store %arg9[%c256, %c0_31], %58 {strides = array<i32>} : memref<576x512xbf16, #tpu.memory_space<vmem>>, vector<64x256xbf16>,
    %c0_32 = arith.constant 0 : index
    %c129 = arith.constant 129 : index
    %60 = vector.load %arg8[%c0_32, %c129] : memref<64x1024xbf16, #tpu.memory_space<vmem>>, vector<64x256xbf16>
    %c0_i32_33 = arith.constant 0 : i32
    %61 = arith.sitofp %c0_i32_33 : i32 to bf16
    %62 = vector.shape_cast %21 : vector<1x256xi1> to vector<1x256xi1>
    %63 = vector.broadcast %62 : vector<1x256xi1> to vector<64x256xi1>
    %64 = vector.broadcast %61 : bf16 to vector<64x256xbf16>
    %65 = arith.select %63, %60, %64 : vector<64x256xi1>, vector<64x256xbf16>
    %c320 = arith.constant 320 : index
    %c0_34 = arith.constant 0 : index
    %66 = vector.load %arg9[%c320, %c0_34] : memref<576x512xbf16, #tpu.memory_space<vmem>>, vector<64x256xbf16>
    tpu.vector_store %arg9[%c320, %c0_34], %65 {strides = array<i32>} : memref<576x512xbf16, #tpu.memory_space<vmem>>, vector<64x256xbf16>,
    %c0_35 = arith.constant 0 : index
    %c143 = arith.constant 143 : index
    %67 = vector.load %arg8[%c0_35, %c143] : memref<64x1024xbf16, #tpu.memory_space<vmem>>, vector<64x256xbf16>
    %c0_i32_36 = arith.constant 0 : i32
    %68 = arith.sitofp %c0_i32_36 : i32 to bf16
    %69 = vector.shape_cast %19 : vector<1x256xi1> to vector<1x256xi1>
    %70 = vector.broadcast %69 : vector<1x256xi1> to vector<64x256xi1>
    %71 = vector.broadcast %68 : bf16 to vector<64x256xbf16>
    %72 = arith.select %70, %67, %71 : vector<64x256xi1>, vector<64x256xbf16>
    %c384_37 = arith.constant 384 : index
    %c0_38 = arith.constant 0 : index
    %73 = vector.load %arg9[%c384_37, %c0_38] : memref<576x512xbf16, #tpu.memory_space<vmem>>, vector<64x256xbf16>
    tpu.vector_store %arg9[%c384_37, %c0_38], %72 {strides = array<i32>} : memref<576x512xbf16, #tpu.memory_space<vmem>>, vector<64x256xbf16>,
    %c0_39 = arith.constant 0 : index
    %c144 = arith.constant 144 : index
    %74 = vector.load %arg8[%c0_39, %c144] : memref<64x1024xbf16, #tpu.memory_space<vmem>>, vector<64x256xbf16>
    %c448 = arith.constant 448 : index
    %c0_40 = arith.constant 0 : index
    %75 = vector.load %arg9[%c448, %c0_40] : memref<576x512xbf16, #tpu.memory_space<vmem>>, vector<64x256xbf16>
    tpu.vector_store %arg9[%c448, %c0_40], %74 {strides = array<i32>} : memref<576x512xbf16, #tpu.memory_space<vmem>>, vector<64x256xbf16>,
    %c0_41 = arith.constant 0 : index
    %c145 = arith.constant 145 : index
    %76 = vector.load %arg8[%c0_41, %c145] : memref<64x1024xbf16, #tpu.memory_space<vmem>>, vector<64x256xbf16>
    %c0_i32_42 = arith.constant 0 : i32
    %77 = arith.sitofp %c0_i32_42 : i32 to bf16
    %78 = vector.shape_cast %21 : vector<1x256xi1> to vector<1x256xi1>
    %79 = vector.broadcast %78 : vector<1x256xi1> to vector<64x256xi1>
    %80 = vector.broadcast %77 : bf16 to vector<64x256xbf16>
    %81 = arith.select %79, %76, %80 : vector<64x256xi1>, vector<64x256xbf16>
    %c512 = arith.constant 512 : index
    %c0_43 = arith.constant 0 : index
    %82 = vector.load %arg9[%c512, %c0_43] : memref<576x512xbf16, #tpu.memory_space<vmem>>, vector<64x256xbf16>
    tpu.vector_store %arg9[%c512, %c0_43], %81 {strides = array<i32>} : memref<576x512xbf16, #tpu.memory_space<vmem>>, vector<64x256xbf16>,
    %c0_44 = arith.constant 0 : index
    %c623_45 = arith.constant 623 : index
    %83 = vector.load %arg8[%c0_44, %c623_45] : memref<64x1024xbf16, #tpu.memory_space<vmem>>, vector<64x256xbf16>
    %c0_i32_46 = arith.constant 0 : i32
    %84 = arith.sitofp %c0_i32_46 : i32 to bf16
    %85 = vector.shape_cast %19 : vector<1x256xi1> to vector<1x256xi1>
    %86 = vector.broadcast %85 : vector<1x256xi1> to vector<64x256xi1>
    %87 = vector.broadcast %84 : bf16 to vector<64x256xbf16>
    %88 = arith.select %86, %83, %87 : vector<64x256xi1>, vector<64x256xbf16>
    %c0_47 = arith.constant 0 : index
    %c256_48 = arith.constant 256 : index
    %89 = vector.load %arg9[%c0_47, %c256_48] : memref<576x512xbf16, #tpu.memory_space<vmem>>, vector<64x256xbf16>
    tpu.vector_store %arg9[%c0_47, %c256_48], %88 {strides = array<i32>} : memref<576x512xbf16, #tpu.memory_space<vmem>>, vector<64x256xbf16>,
    %c0_49 = arith.constant 0 : index
    %c624 = arith.constant 624 : index
    %90 = vector.load %arg8[%c0_49, %c624] : memref<64x1024xbf16, #tpu.memory_space<vmem>>, vector<64x256xbf16>
    %c64_50 = arith.constant 64 : index
    %c256_51 = arith.constant 256 : index
    %91 = vector.load %arg9[%c64_50, %c256_51] : memref<576x512xbf16, #tpu.memory_space<vmem>>, vector<64x256xbf16>
    tpu.vector_store %arg9[%c64_50, %c256_51], %90 {strides = array<i32>} : memref<576x512xbf16, #tpu.memory_space<vmem>>, vector<64x256xbf16>,
    %c0_52 = arith.constant 0 : index
    %c625 = arith.constant 625 : index
    %92 = vector.load %arg8[%c0_52, %c625] : memref<64x1024xbf16, #tpu.memory_space<vmem>>, vector<64x256xbf16>
    %c0_i32_53 = arith.constant 0 : i32
    %93 = arith.sitofp %c0_i32_53 : i32 to bf16
    %94 = vector.shape_cast %21 : vector<1x256xi1> to vector<1x256xi1>
    %95 = vector.broadcast %94 : vector<1x256xi1> to vector<64x256xi1>
    %96 = vector.broadcast %93 : bf16 to vector<64x256xbf16>
    %97 = arith.select %95, %92, %96 : vector<64x256xi1>, vector<64x256xbf16>
    %c128_54 = arith.constant 128 : index
    %c256_55 = arith.constant 256 : index
    %98 = vector.load %arg9[%c128_54, %c256_55] : memref<576x512xbf16, #tpu.memory_space<vmem>>, vector<64x256xbf16>
    tpu.vector_store %arg9[%c128_54, %c256_55], %97 {strides = array<i32>} : memref<576x512xbf16, #tpu.memory_space<vmem>>, vector<64x256xbf16>,
    %c0_56 = arith.constant 0 : index
    %c639 = arith.constant 639 : index
    %99 = vector.load %arg8[%c0_56, %c639] : memref<64x1024xbf16, #tpu.memory_space<vmem>>, vector<64x256xbf16>
    %c0_i32_57 = arith.constant 0 : i32
    %100 = arith.sitofp %c0_i32_57 : i32 to bf16
    %101 = vector.shape_cast %19 : vector<1x256xi1> to vector<1x256xi1>
    %102 = vector.broadcast %101 : vector<1x256xi1> to vector<64x256xi1>
    %103 = vector.broadcast %100 : bf16 to vector<64x256xbf16>
    %104 = arith.select %102, %99, %103 : vector<64x256xi1>, vector<64x256xbf16>
    %c192_58 = arith.constant 192 : index
    %c256_59 = arith.constant 256 : index
    %105 = vector.load %arg9[%c192_58, %c256_59] : memref<576x512xbf16, #tpu.memory_space<vmem>>, vector<64x256xbf16>
    tpu.vector_store %arg9[%c192_58, %c256_59], %104 {strides = array<i32>} : memref<576x512xbf16, #tpu.memory_space<vmem>>, vector<64x256xbf16>,
    %c0_60 = arith.constant 0 : index
    %c640_61 = arith.constant 640 : index
    %106 = vector.load %arg8[%c0_60, %c640_61] : memref<64x1024xbf16, #tpu.memory_space<vmem>>, vector<64x256xbf16>
    %c256_62 = arith.constant 256 : index
    %c256_63 = arith.constant 256 : index
    %107 = vector.load %arg9[%c256_62, %c256_63] : memref<576x512xbf16, #tpu.memory_space<vmem>>, vector<64x256xbf16>
    tpu.vector_store %arg9[%c256_62, %c256_63], %106 {strides = array<i32>} : memref<576x512xbf16, #tpu.memory_space<vmem>>, vector<64x256xbf16>,
    %c0_64 = arith.constant 0 : index
    %c641 = arith.constant 641 : index
    %108 = vector.load %arg8[%c0_64, %c641] : memref<64x1024xbf16, #tpu.memory_space<vmem>>, vector<64x256xbf16>
    %c0_i32_65 = arith.constant 0 : i32
    %109 = arith.sitofp %c0_i32_65 : i32 to bf16
    %110 = vector.shape_cast %21 : vector<1x256xi1> to vector<1x256xi1>
    %111 = vector.broadcast %110 : vector<1x256xi1> to vector<64x256xi1>
    %112 = vector.broadcast %109 : bf16 to vector<64x256xbf16>
    %113 = arith.select %111, %108, %112 : vector<64x256xi1>, vector<64x256xbf16>
    %c320_66 = arith.constant 320 : index
    %c256_67 = arith.constant 256 : index
    %114 = vector.load %arg9[%c320_66, %c256_67] : memref<576x512xbf16, #tpu.memory_space<vmem>>, vector<64x256xbf16>
    tpu.vector_store %arg9[%c320_66, %c256_67], %113 {strides = array<i32>} : memref<576x512xbf16, #tpu.memory_space<vmem>>, vector<64x256xbf16>,
    %c0_68 = arith.constant 0 : index
    %c655 = arith.constant 655 : index
    %115 = vector.load %arg8[%c0_68, %c655] : memref<64x1024xbf16, #tpu.memory_space<vmem>>, vector<64x256xbf16>
    %c0_i32_69 = arith.constant 0 : i32
    %116 = arith.sitofp %c0_i32_69 : i32 to bf16
    %117 = vector.shape_cast %19 : vector<1x256xi1> to vector<1x256xi1>
    %118 = vector.broadcast %117 : vector<1x256xi1> to vector<64x256xi1>
    %119 = vector.broadcast %116 : bf16 to vector<64x256xbf16>
    %120 = arith.select %118, %115, %119 : vector<64x256xi1>, vector<64x256xbf16>
    %c384_70 = arith.constant 384 : index
    %c256_71 = arith.constant 256 : index
    %121 = vector.load %arg9[%c384_70, %c256_71] : memref<576x512xbf16, #tpu.memory_space<vmem>>, vector<64x256xbf16>
    tpu.vector_store %arg9[%c384_70, %c256_71], %120 {strides = array<i32>} : memref<576x512xbf16, #tpu.memory_space<vmem>>, vector<64x256xbf16>,
    %c0_72 = arith.constant 0 : index
    %c656 = arith.constant 656 : index
    %122 = vector.load %arg8[%c0_72, %c656] : memref<64x1024xbf16, #tpu.memory_space<vmem>>, vector<64x256xbf16>
    %c448_73 = arith.constant 448 : index
    %c256_74 = arith.constant 256 : index
    %123 = vector.load %arg9[%c448_73, %c256_74] : memref<576x512xbf16, #tpu.memory_space<vmem>>, vector<64x256xbf16>
    tpu.vector_store %arg9[%c448_73, %c256_74], %122 {strides = array<i32>} : memref<576x512xbf16, #tpu.memory_space<vmem>>, vector<64x256xbf16>,
    %c0_75 = arith.constant 0 : index
    %c657 = arith.constant 657 : index
    %124 = vector.load %arg8[%c0_75, %c657] : memref<64x1024xbf16, #tpu.memory_space<vmem>>, vector<64x256xbf16>
    %c0_i32_76 = arith.constant 0 : i32
    %125 = arith.sitofp %c0_i32_76 : i32 to bf16
    %126 = vector.shape_cast %21 : vector<1x256xi1> to vector<1x256xi1>
    %127 = vector.broadcast %126 : vector<1x256xi1> to vector<64x256xi1>
    %128 = vector.broadcast %125 : bf16 to vector<64x256xbf16>
    %129 = arith.select %127, %124, %128 : vector<64x256xi1>, vector<64x256xbf16>
    %c512_77 = arith.constant 512 : index
    %c256_78 = arith.constant 256 : index
    %130 = vector.load %arg9[%c512_77, %c256_78] : memref<576x512xbf16, #tpu.memory_space<vmem>>, vector<64x256xbf16>
    tpu.vector_store %arg9[%c512_77, %c256_78], %129 {strides = array<i32>} : memref<576x512xbf16, #tpu.memory_space<vmem>>, vector<64x256xbf16>,
    %c0_79 = arith.constant 0 : index
    %c0_80 = arith.constant 0 : index
    %131 = vector.load %arg2[%c0_79, %c0_80] : memref<64x576xbf16, #tpu.memory_space<vmem>>, vector<64x576xbf16>
    %c0_81 = arith.constant 0 : index
    %c0_82 = arith.constant 0 : index
    %132 = vector.load %arg9[%c0_81, %c0_82] : memref<576x512xbf16, #tpu.memory_space<vmem>>, vector<576x512xbf16>
    %cst_83 = arith.constant dense<0.000000e+00> : vector<64x512xf32>
    %133 = tpu.matmul %131, %132, %cst_83 {dimension_numbers = #tpu.dot_dimension_numbers<[1], [0], [0], [1], [0, 0, 1, 1], [], []>} : vector<64x576xbf16>, vector<576x512xbf16>, vector<64x512xf32> -> vector<64x512xf32>
    %c0_84 = arith.constant 0 : index
    %c0_85 = arith.constant 0 : index
    %134 = vector.load %arg10[%c0_84, %c0_85] : memref<64x512xf32, #tpu.memory_space<vmem>>, vector<64x512xf32>
    tpu.vector_store %arg10[%c0_84, %c0_85], %133 {strides = array<i32>} : memref<64x512xf32, #tpu.memory_space<vmem>>, vector<64x512xf32>,
    %c0_86 = arith.constant 0 : index
    %c0_87 = arith.constant 0 : index
    %135 = vector.load %arg3[%c0_86, %c0_87] : memref<64x1xf32, #tpu.memory_space<vmem>>, vector<64x1xf32>
    %c0_88 = arith.constant 0 : index
    %c0_89 = arith.constant 0 : index
    %136 = vector.load %arg10[%c0_88, %c0_89] : memref<64x512xf32, #tpu.memory_space<vmem>>, vector<64x256xf32>
    %137 = vector.broadcast %135 : vector<64x1xf32> to vector<64x256xf32>
    %138 = arith.addf %136, %137 : vector<64x256xf32>
    %cst_90 = arith.constant 0.000000e+00 : f32
    %139 = vector.broadcast %cst_90 : f32 to vector<64x256xf32>
    %140 = arith.cmpf oge, %138, %139 : vector<64x256xf32>
    %141 = vector.broadcast %0 : f32 to vector<64x256xf32>
    %142 = arith.mulf %141, %138 : vector<64x256xf32>
    %143 = arith.select %140, %138, %142 : vector<64x256xi1>, vector<64x256xf32>
    %144 = arith.truncf %143 : vector<64x256xf32> to vector<64x256xbf16>
    %c0_91 = arith.constant 0 : index
    %c128_92 = arith.constant 128 : index
    %145 = vector.load %arg8[%c0_91, %c128_92] : memref<64x1024xbf16, #tpu.memory_space<vmem>>, vector<64x256xbf16>
    tpu.vector_store %arg8[%c0_91, %c128_92], %144 {strides = array<i32>} : memref<64x1024xbf16, #tpu.memory_space<vmem>>, vector<64x256xbf16>,
    %c0_93 = arith.constant 0 : index
    %c256_94 = arith.constant 256 : index
    %146 = vector.load %arg10[%c0_93, %c256_94] : memref<64x512xf32, #tpu.memory_space<vmem>>, vector<64x256xf32>
    %147 = vector.broadcast %135 : vector<64x1xf32> to vector<64x256xf32>
    %148 = arith.addf %146, %147 : vector<64x256xf32>
    %cst_95 = arith.constant 0.000000e+00 : f32
    %149 = vector.broadcast %cst_95 : f32 to vector<64x256xf32>
    %150 = arith.cmpf oge, %148, %149 : vector<64x256xf32>
    %151 = vector.broadcast %0 : f32 to vector<64x256xf32>
    %152 = arith.mulf %151, %148 : vector<64x256xf32>
    %153 = arith.select %150, %148, %152 : vector<64x256xi1>, vector<64x256xf32>
    %154 = arith.truncf %153 : vector<64x256xf32> to vector<64x256xbf16>
    %c0_96 = arith.constant 0 : index
    %c640_97 = arith.constant 640 : index
    %155 = vector.load %arg8[%c0_96, %c640_97] : memref<64x1024xbf16, #tpu.memory_space<vmem>>, vector<64x256xbf16>
    tpu.vector_store %arg8[%c0_96, %c640_97], %154 {strides = array<i32>} : memref<64x1024xbf16, #tpu.memory_space<vmem>>, vector<64x256xbf16>,
    %c0_98 = arith.constant 0 : index
    %c111_99 = arith.constant 111 : index
    %156 = vector.load %arg8[%c0_98, %c111_99] : memref<64x1024xbf16, #tpu.memory_space<vmem>>, vector<64x256xbf16>
    %c0_i32_100 = arith.constant 0 : i32
    %157 = arith.sitofp %c0_i32_100 : i32 to bf16
    %158 = vector.shape_cast %19 : vector<1x256xi1> to vector<1x256xi1>
    %159 = vector.broadcast %158 : vector<1x256xi1> to vector<64x256xi1>
    %160 = vector.broadcast %157 : bf16 to vector<64x256xbf16>
    %161 = arith.select %159, %156, %160 : vector<64x256xi1>, vector<64x256xbf16>
    %c0_101 = arith.constant 0 : index
    %c0_102 = arith.constant 0 : index
    %162 = vector.load %arg9[%c0_101, %c0_102] : memref<576x512xbf16, #tpu.memory_space<vmem>>, vector<64x256xbf16>
    tpu.vector_store %arg9[%c0_101, %c0_102], %161 {strides = array<i32>} : memref<576x512xbf16, #tpu.memory_space<vmem>>, vector<64x256xbf16>,
    %c0_103 = arith.constant 0 : index
    %c112_104 = arith.constant 112 : index
    %163 = vector.load %arg8[%c0_103, %c112_104] : memref<64x1024xbf16, #tpu.memory_space<vmem>>, vector<64x256xbf16>
    %c64_105 = arith.constant 64 : index
    %c0_106 = arith.constant 0 : index
    %164 = vector.load %arg9[%c64_105, %c0_106] : memref<576x512xbf16, #tpu.memory_space<vmem>>, vector<64x256xbf16>
    tpu.vector_store %arg9[%c64_105, %c0_106], %163 {strides = array<i32>} : memref<576x512xbf16, #tpu.memory_space<vmem>>, vector<64x256xbf16>,
    %c0_107 = arith.constant 0 : index
    %c113_108 = arith.constant 113 : index
    %165 = vector.load %arg8[%c0_107, %c113_108] : memref<64x1024xbf16, #tpu.memory_space<vmem>>, vector<64x256xbf16>
    %c0_i32_109 = arith.constant 0 : i32
    %166 = arith.sitofp %c0_i32_109 : i32 to bf16
    %167 = vector.shape_cast %21 : vector<1x256xi1> to vector<1x256xi1>
    %168 = vector.broadcast %167 : vector<1x256xi1> to vector<64x256xi1>
    %169 = vector.broadcast %166 : bf16 to vector<64x256xbf16>
    %170 = arith.select %168, %165, %169 : vector<64x256xi1>, vector<64x256xbf16>
    %c128_110 = arith.constant 128 : index
    %c0_111 = arith.constant 0 : index
    %171 = vector.load %arg9[%c128_110, %c0_111] : memref<576x512xbf16, #tpu.memory_space<vmem>>, vector<64x256xbf16>
    tpu.vector_store %arg9[%c128_110, %c0_111], %170 {strides = array<i32>} : memref<576x512xbf16, #tpu.memory_space<vmem>>, vector<64x256xbf16>,
    %c0_112 = arith.constant 0 : index
    %c127_113 = arith.constant 127 : index
    %172 = vector.load %arg8[%c0_112, %c127_113] : memref<64x1024xbf16, #tpu.memory_space<vmem>>, vector<64x256xbf16>
    %c0_i32_114 = arith.constant 0 : i32
    %173 = arith.sitofp %c0_i32_114 : i32 to bf16
    %174 = vector.shape_cast %19 : vector<1x256xi1> to vector<1x256xi1>
    %175 = vector.broadcast %174 : vector<1x256xi1> to vector<64x256xi1>
    %176 = vector.broadcast %173 : bf16 to vector<64x256xbf16>
    %177 = arith.select %175, %172, %176 : vector<64x256xi1>, vector<64x256xbf16>
    %c192_115 = arith.constant 192 : index
    %c0_116 = arith.constant 0 : index
    %178 = vector.load %arg9[%c192_115, %c0_116] : memref<576x512xbf16, #tpu.memory_space<vmem>>, vector<64x256xbf16>
    tpu.vector_store %arg9[%c192_115, %c0_116], %177 {strides = array<i32>} : memref<576x512xbf16, #tpu.memory_space<vmem>>, vector<64x256xbf16>,
    %c0_117 = arith.constant 0 : index
    %c128_118 = arith.constant 128 : index
    %179 = vector.load %arg8[%c0_117, %c128_118] : memref<64x1024xbf16, #tpu.memory_space<vmem>>, vector<64x256xbf16>
    %c256_119 = arith.constant 256 : index
    %c0_120 = arith.constant 0 : index
    %180 = vector.load %arg9[%c256_119, %c0_120] : memref<576x512xbf16, #tpu.memory_space<vmem>>, vector<64x256xbf16>
    tpu.vector_store %arg9[%c256_119, %c0_120], %179 {strides = array<i32>} : memref<576x512xbf16, #tpu.memory_space<vmem>>, vector<64x256xbf16>,
    %c0_121 = arith.constant 0 : index
    %c129_122 = arith.constant 129 : index
    %181 = vector.load %arg8[%c0_121, %c129_122] : memref<64x1024xbf16, #tpu.memory_space<vmem>>, vector<64x256xbf16>
    %c0_i32_123 = arith.constant 0 : i32
    %182 = arith.sitofp %c0_i32_123 : i32 to bf16
    %183 = vector.shape_cast %21 : vector<1x256xi1> to vector<1x256xi1>
    %184 = vector.broadcast %183 : vector<1x256xi1> to vector<64x256xi1>
    %185 = vector.broadcast %182 : bf16 to vector<64x256xbf16>
    %186 = arith.select %184, %181, %185 : vector<64x256xi1>, vector<64x256xbf16>
    %c320_124 = arith.constant 320 : index
    %c0_125 = arith.constant 0 : index
    %187 = vector.load %arg9[%c320_124, %c0_125] : memref<576x512xbf16, #tpu.memory_space<vmem>>, vector<64x256xbf16>
    tpu.vector_store %arg9[%c320_124, %c0_125], %186 {strides = array<i32>} : memref<576x512xbf16, #tpu.memory_space<vmem>>, vector<64x256xbf16>,
    %c0_126 = arith.constant 0 : index
    %c143_127 = arith.constant 143 : index
    %188 = vector.load %arg8[%c0_126, %c143_127] : memref<64x1024xbf16, #tpu.memory_space<vmem>>, vector<64x256xbf16>
    %c0_i32_128 = arith.constant 0 : i32
    %189 = arith.sitofp %c0_i32_128 : i32 to bf16
    %190 = vector.shape_cast %19 : vector<1x256xi1> to vector<1x256xi1>
    %191 = vector.broadcast %190 : vector<1x256xi1> to vector<64x256xi1>
    %192 = vector.broadcast %189 : bf16 to vector<64x256xbf16>
    %193 = arith.select %191, %188, %192 : vector<64x256xi1>, vector<64x256xbf16>
    %c384_129 = arith.constant 384 : index
    %c0_130 = arith.constant 0 : index
    %194 = vector.load %arg9[%c384_129, %c0_130] : memref<576x512xbf16, #tpu.memory_space<vmem>>, vector<64x256xbf16>
    tpu.vector_store %arg9[%c384_129, %c0_130], %193 {strides = array<i32>} : memref<576x512xbf16, #tpu.memory_space<vmem>>, vector<64x256xbf16>,
    %c0_131 = arith.constant 0 : index
    %c144_132 = arith.constant 144 : index
    %195 = vector.load %arg8[%c0_131, %c144_132] : memref<64x1024xbf16, #tpu.memory_space<vmem>>, vector<64x256xbf16>
    %c448_133 = arith.constant 448 : index
    %c0_134 = arith.constant 0 : index
    %196 = vector.load %arg9[%c448_133, %c0_134] : memref<576x512xbf16, #tpu.memory_space<vmem>>, vector<64x256xbf16>
    tpu.vector_store %arg9[%c448_133, %c0_134], %195 {strides = array<i32>} : memref<576x512xbf16, #tpu.memory_space<vmem>>, vector<64x256xbf16>,
    %c0_135 = arith.constant 0 : index
    %c145_136 = arith.constant 145 : index
    %197 = vector.load %arg8[%c0_135, %c145_136] : memref<64x1024xbf16, #tpu.memory_space<vmem>>, vector<64x256xbf16>
    %c0_i32_137 = arith.constant 0 : i32
    %198 = arith.sitofp %c0_i32_137 : i32 to bf16
    %199 = vector.shape_cast %21 : vector<1x256xi1> to vector<1x256xi1>
    %200 = vector.broadcast %199 : vector<1x256xi1> to vector<64x256xi1>
    %201 = vector.broadcast %198 : bf16 to vector<64x256xbf16>
    %202 = arith.select %200, %197, %201 : vector<64x256xi1>, vector<64x256xbf16>
    %c512_138 = arith.constant 512 : index
    %c0_139 = arith.constant 0 : index
    %203 = vector.load %arg9[%c512_138, %c0_139] : memref<576x512xbf16, #tpu.memory_space<vmem>>, vector<64x256xbf16>
    tpu.vector_store %arg9[%c512_138, %c0_139], %202 {strides = array<i32>} : memref<576x512xbf16, #tpu.memory_space<vmem>>, vector<64x256xbf16>,
    %c0_140 = arith.constant 0 : index
    %c623_141 = arith.constant 623 : index
    %204 = vector.load %arg8[%c0_140, %c623_141] : memref<64x1024xbf16, #tpu.memory_space<vmem>>, vector<64x256xbf16>
    %c0_i32_142 = arith.constant 0 : i32
    %205 = arith.sitofp %c0_i32_142 : i32 to bf16
    %206 = vector.shape_cast %19 : vector<1x256xi1> to vector<1x256xi1>
    %207 = vector.broadcast %206 : vector<1x256xi1> to vector<64x256xi1>
    %208 = vector.broadcast %205 : bf16 to vector<64x256xbf16>
    %209 = arith.select %207, %204, %208 : vector<64x256xi1>, vector<64x256xbf16>
    %c0_143 = arith.constant 0 : index
    %c256_144 = arith.constant 256 : index
    %210 = vector.load %arg9[%c0_143, %c256_144] : memref<576x512xbf16, #tpu.memory_space<vmem>>, vector<64x256xbf16>
    tpu.vector_store %arg9[%c0_143, %c256_144], %209 {strides = array<i32>} : memref<576x512xbf16, #tpu.memory_space<vmem>>, vector<64x256xbf16>,
    %c0_145 = arith.constant 0 : index
    %c624_146 = arith.constant 624 : index
    %211 = vector.load %arg8[%c0_145, %c624_146] : memref<64x1024xbf16, #tpu.memory_space<vmem>>, vector<64x256xbf16>
    %c64_147 = arith.constant 64 : index
    %c256_148 = arith.constant 256 : index
    %212 = vector.load %arg9[%c64_147, %c256_148] : memref<576x512xbf16, #tpu.memory_space<vmem>>, vector<64x256xbf16>
    tpu.vector_store %arg9[%c64_147, %c256_148], %211 {strides = array<i32>} : memref<576x512xbf16, #tpu.memory_space<vmem>>, vector<64x256xbf16>,
    %c0_149 = arith.constant 0 : index
    %c625_150 = arith.constant 625 : index
    %213 = vector.load %arg8[%c0_149, %c625_150] : memref<64x1024xbf16, #tpu.memory_space<vmem>>, vector<64x256xbf16>
    %c0_i32_151 = arith.constant 0 : i32
    %214 = arith.sitofp %c0_i32_151 : i32 to bf16
    %215 = vector.shape_cast %21 : vector<1x256xi1> to vector<1x256xi1>
    %216 = vector.broadcast %215 : vector<1x256xi1> to vector<64x256xi1>
    %217 = vector.broadcast %214 : bf16 to vector<64x256xbf16>
    %218 = arith.select %216, %213, %217 : vector<64x256xi1>, vector<64x256xbf16>
    %c128_152 = arith.constant 128 : index
    %c256_153 = arith.constant 256 : index
    %219 = vector.load %arg9[%c128_152, %c256_153] : memref<576x512xbf16, #tpu.memory_space<vmem>>, vector<64x256xbf16>
    tpu.vector_store %arg9[%c128_152, %c256_153], %218 {strides = array<i32>} : memref<576x512xbf16, #tpu.memory_space<vmem>>, vector<64x256xbf16>,
    %c0_154 = arith.constant 0 : index
    %c639_155 = arith.constant 639 : index
    %220 = vector.load %arg8[%c0_154, %c639_155] : memref<64x1024xbf16, #tpu.memory_space<vmem>>, vector<64x256xbf16>
    %c0_i32_156 = arith.constant 0 : i32
    %221 = arith.sitofp %c0_i32_156 : i32 to bf16
    %222 = vector.shape_cast %19 : vector<1x256xi1> to vector<1x256xi1>
    %223 = vector.broadcast %222 : vector<1x256xi1> to vector<64x256xi1>
    %224 = vector.broadcast %221 : bf16 to vector<64x256xbf16>
    %225 = arith.select %223, %220, %224 : vector<64x256xi1>, vector<64x256xbf16>
    %c192_157 = arith.constant 192 : index
    %c256_158 = arith.constant 256 : index
    %226 = vector.load %arg9[%c192_157, %c256_158] : memref<576x512xbf16, #tpu.memory_space<vmem>>, vector<64x256xbf16>
    tpu.vector_store %arg9[%c192_157, %c256_158], %225 {strides = array<i32>} : memref<576x512xbf16, #tpu.memory_space<vmem>>, vector<64x256xbf16>,
    %c0_159 = arith.constant 0 : index
    %c640_160 = arith.constant 640 : index
    %227 = vector.load %arg8[%c0_159, %c640_160] : memref<64x1024xbf16, #tpu.memory_space<vmem>>, vector<64x256xbf16>
    %c256_161 = arith.constant 256 : index
    %c256_162 = arith.constant 256 : index
    %228 = vector.load %arg9[%c256_161, %c256_162] : memref<576x512xbf16, #tpu.memory_space<vmem>>, vector<64x256xbf16>
    tpu.vector_store %arg9[%c256_161, %c256_162], %227 {strides = array<i32>} : memref<576x512xbf16, #tpu.memory_space<vmem>>, vector<64x256xbf16>,
    %c0_163 = arith.constant 0 : index
    %c641_164 = arith.constant 641 : index
    %229 = vector.load %arg8[%c0_163, %c641_164] : memref<64x1024xbf16, #tpu.memory_space<vmem>>, vector<64x256xbf16>
    %c0_i32_165 = arith.constant 0 : i32
    %230 = arith.sitofp %c0_i32_165 : i32 to bf16
    %231 = vector.shape_cast %21 : vector<1x256xi1> to vector<1x256xi1>
    %232 = vector.broadcast %231 : vector<1x256xi1> to vector<64x256xi1>
    %233 = vector.broadcast %230 : bf16 to vector<64x256xbf16>
    %234 = arith.select %232, %229, %233 : vector<64x256xi1>, vector<64x256xbf16>
    %c320_166 = arith.constant 320 : index
    %c256_167 = arith.constant 256 : index
    %235 = vector.load %arg9[%c320_166, %c256_167] : memref<576x512xbf16, #tpu.memory_space<vmem>>, vector<64x256xbf16>
    tpu.vector_store %arg9[%c320_166, %c256_167], %234 {strides = array<i32>} : memref<576x512xbf16, #tpu.memory_space<vmem>>, vector<64x256xbf16>,
    %c0_168 = arith.constant 0 : index
    %c655_169 = arith.constant 655 : index
    %236 = vector.load %arg8[%c0_168, %c655_169] : memref<64x1024xbf16, #tpu.memory_space<vmem>>, vector<64x256xbf16>
    %c0_i32_170 = arith.constant 0 : i32
    %237 = arith.sitofp %c0_i32_170 : i32 to bf16
    %238 = vector.shape_cast %19 : vector<1x256xi1> to vector<1x256xi1>
    %239 = vector.broadcast %238 : vector<1x256xi1> to vector<64x256xi1>
    %240 = vector.broadcast %237 : bf16 to vector<64x256xbf16>
    %241 = arith.select %239, %236, %240 : vector<64x256xi1>, vector<64x256xbf16>
    %c384_171 = arith.constant 384 : index
    %c256_172 = arith.constant 256 : index
    %242 = vector.load %arg9[%c384_171, %c256_172] : memref<576x512xbf16, #tpu.memory_space<vmem>>, vector<64x256xbf16>
    tpu.vector_store %arg9[%c384_171, %c256_172], %241 {strides = array<i32>} : memref<576x512xbf16, #tpu.memory_space<vmem>>, vector<64x256xbf16>,
    %c0_173 = arith.constant 0 : index
    %c656_174 = arith.constant 656 : index
    %243 = vector.load %arg8[%c0_173, %c656_174] : memref<64x1024xbf16, #tpu.memory_space<vmem>>, vector<64x256xbf16>
    %c448_175 = arith.constant 448 : index
    %c256_176 = arith.constant 256 : index
    %244 = vector.load %arg9[%c448_175, %c256_176] : memref<576x512xbf16, #tpu.memory_space<vmem>>, vector<64x256xbf16>
    tpu.vector_store %arg9[%c448_175, %c256_176], %243 {strides = array<i32>} : memref<576x512xbf16, #tpu.memory_space<vmem>>, vector<64x256xbf16>,
    %c0_177 = arith.constant 0 : index
    %c657_178 = arith.constant 657 : index
    %245 = vector.load %arg8[%c0_177, %c657_178] : memref<64x1024xbf16, #tpu.memory_space<vmem>>, vector<64x256xbf16>
    %c0_i32_179 = arith.constant 0 : i32
    %246 = arith.sitofp %c0_i32_179 : i32 to bf16
    %247 = vector.shape_cast %21 : vector<1x256xi1> to vector<1x256xi1>
    %248 = vector.broadcast %247 : vector<1x256xi1> to vector<64x256xi1>
    %249 = vector.broadcast %246 : bf16 to vector<64x256xbf16>
    %250 = arith.select %248, %245, %249 : vector<64x256xi1>, vector<64x256xbf16>
    %c512_180 = arith.constant 512 : index
    %c256_181 = arith.constant 256 : index
    %251 = vector.load %arg9[%c512_180, %c256_181] : memref<576x512xbf16, #tpu.memory_space<vmem>>, vector<64x256xbf16>
    tpu.vector_store %arg9[%c512_180, %c256_181], %250 {strides = array<i32>} : memref<576x512xbf16, #tpu.memory_space<vmem>>, vector<64x256xbf16>,
    %c0_182 = arith.constant 0 : index
    %c0_183 = arith.constant 0 : index
    %252 = vector.load %arg4[%c0_182, %c0_183] : memref<64x576xbf16, #tpu.memory_space<vmem>>, vector<64x576xbf16>
    %c0_184 = arith.constant 0 : index
    %c0_185 = arith.constant 0 : index
    %253 = vector.load %arg9[%c0_184, %c0_185] : memref<576x512xbf16, #tpu.memory_space<vmem>>, vector<576x512xbf16>
    %cst_186 = arith.constant dense<0.000000e+00> : vector<64x512xf32>
    %254 = tpu.matmul %252, %253, %cst_186 {dimension_numbers = #tpu.dot_dimension_numbers<[1], [0], [0], [1], [0, 0, 1, 1], [], []>} : vector<64x576xbf16>, vector<576x512xbf16>, vector<64x512xf32> -> vector<64x512xf32>
    %c0_187 = arith.constant 0 : index
    %c0_188 = arith.constant 0 : index
    %255 = vector.load %arg10[%c0_187, %c0_188] : memref<64x512xf32, #tpu.memory_space<vmem>>, vector<64x512xf32>
    tpu.vector_store %arg10[%c0_187, %c0_188], %254 {strides = array<i32>} : memref<64x512xf32, #tpu.memory_space<vmem>>, vector<64x512xf32>,
    %c0_189 = arith.constant 0 : index
    %c0_190 = arith.constant 0 : index
    %256 = vector.load %arg5[%c0_189, %c0_190] : memref<64x1xf32, #tpu.memory_space<vmem>>, vector<64x1xf32>
    %c0_191 = arith.constant 0 : index
    %c0_192 = arith.constant 0 : index
    %257 = vector.load %arg10[%c0_191, %c0_192] : memref<64x512xf32, #tpu.memory_space<vmem>>, vector<64x256xf32>
    %258 = vector.broadcast %256 : vector<64x1xf32> to vector<64x256xf32>
    %259 = arith.addf %257, %258 : vector<64x256xf32>
    %c0_193 = arith.constant 0 : index
    %c0_194 = arith.constant 0 : index
    %c0_195 = arith.constant 0 : index
    %260 = vector.load %arg1[%c0_193, %c0_194, %c0_195] : memref<2x64x256xf32, #tpu.memory_space<vmem>>, vector<1x64x256xf32>
    %261 = vector.shape_cast %260 : vector<1x64x256xf32> to vector<64x256xf32>
    %262 = arith.addf %259, %261 : vector<64x256xf32>
    %cst_196 = arith.constant 0.000000e+00 : f32
    %263 = vector.broadcast %cst_196 : f32 to vector<64x256xf32>
    %264 = arith.cmpf oge, %262, %263 : vector<64x256xf32>
    %265 = vector.broadcast %0 : f32 to vector<64x256xf32>
    %266 = arith.mulf %265, %262 : vector<64x256xf32>
    %267 = arith.select %264, %262, %266 : vector<64x256xi1>, vector<64x256xf32>
    %c0_197 = arith.constant 0 : index
    %c0_198 = arith.constant 0 : index
    %c0_199 = arith.constant 0 : index
    %268 = vector.load %arg7[%c0_197, %c0_198, %c0_199] : memref<2x64x256xf32, #tpu.memory_space<vmem>>, vector<1x64x256xf32>
    %269 = vector.shape_cast %268 : vector<1x64x256xf32> to vector<64x256xf32>
    %270 = vector.shape_cast %267 : vector<64x256xf32> to vector<1x64x256xf32>
    tpu.vector_store %arg7[%c0_197, %c0_198, %c0_199], %270 {strides = array<i32>} : memref<2x64x256xf32, #tpu.memory_space<vmem>>, vector<1x64x256xf32>,
    %c0_200 = arith.constant 0 : index
    %c256_201 = arith.constant 256 : index
    %271 = vector.load %arg10[%c0_200, %c256_201] : memref<64x512xf32, #tpu.memory_space<vmem>>, vector<64x256xf32>
    %272 = vector.broadcast %256 : vector<64x1xf32> to vector<64x256xf32>
    %273 = arith.addf %271, %272 : vector<64x256xf32>
    %c1_202 = arith.constant 1 : index
    %c0_203 = arith.constant 0 : index
    %c0_204 = arith.constant 0 : index
    %274 = vector.load %arg1[%c1_202, %c0_203, %c0_204] : memref<2x64x256xf32, #tpu.memory_space<vmem>>, vector<1x64x256xf32>
    %275 = vector.shape_cast %274 : vector<1x64x256xf32> to vector<64x256xf32>
    %276 = arith.addf %273, %275 : vector<64x256xf32>
    %cst_205 = arith.constant 0.000000e+00 : f32
    %277 = vector.broadcast %cst_205 : f32 to vector<64x256xf32>
    %278 = arith.cmpf oge, %276, %277 : vector<64x256xf32>
    %279 = vector.broadcast %0 : f32 to vector<64x256xf32>
    %280 = arith.mulf %279, %276 : vector<64x256xf32>
    %281 = arith.select %278, %276, %280 : vector<64x256xi1>, vector<64x256xf32>
    %c1_206 = arith.constant 1 : index
    %c0_207 = arith.constant 0 : index
    %c0_208 = arith.constant 0 : index
    %282 = vector.load %arg7[%c1_206, %c0_207, %c0_208] : memref<2x64x256xf32, #tpu.memory_space<vmem>>, vector<1x64x256xf32>
    %283 = vector.shape_cast %282 : vector<1x64x256xf32> to vector<64x256xf32>
    %284 = vector.shape_cast %281 : vector<64x256xf32> to vector<1x64x256xf32>
    tpu.vector_store %arg7[%c1_206, %c0_207, %c0_208], %284 {strides = array<i32>} : memref<2x64x256xf32, #tpu.memory_space<vmem>>, vector<1x64x256xf32>,
    return
  }
  func.func @transform_0(%arg0: i32) -> (i32, i32, i32) {
    %c0_i32 = arith.constant 0 : i32
    %c0_i32_0 = arith.constant 0 : i32
    %c0_i32_1 = arith.constant 0 : i32
    return %arg0, %c0_i32, %c0_i32_0 : i32, i32, i32
  }
  func.func @transform_1(%arg0: i32) -> (i32, i32) {
    %c0_i32 = arith.constant 0 : i32
    %c0_i32_0 = arith.constant 0 : i32
    %c0_i32_1 = arith.constant 0 : i32
    return %c0_i32, %c0_i32_0 : i32, i32
  }
  func.func @transform_2(%arg0: i32) -> (i32, i32) {
    %c0_i32 = arith.constant 0 : i32
    %c0_i32_0 = arith.constant 0 : i32
    %c0_i32_1 = arith.constant 0 : i32
    return %c0_i32, %c0_i32_0 : i32, i32
  }
  func.func @transform_3(%arg0: i32) -> (i32, i32) {
    %c0_i32 = arith.constant 0 : i32
    %c0_i32_0 = arith.constant 0 : i32
    %c0_i32_1 = arith.constant 0 : i32
    return %c0_i32, %c0_i32_0 : i32, i32
  }
  func.func @transform_4(%arg0: i32) -> (i32, i32) {
    %c0_i32 = arith.constant 0 : i32
    %c0_i32_0 = arith.constant 0 : i32
    %c0_i32_1 = arith.constant 0 : i32
    return %c0_i32, %c0_i32_0 : i32, i32
  }
  func.func @transform_5(%arg0: i32) -> i32 {
    %c0_i32 = arith.constant 0 : i32
    %c0_i32_0 = arith.constant 0 : i32
    return %c0_i32 : i32
  }
  func.func @transform_6(%arg0: i32) -> (i32, i32, i32) {
    %c0_i32 = arith.constant 0 : i32
    %c0_i32_0 = arith.constant 0 : i32
    %c0_i32_1 = arith.constant 0 : i32
    return %arg0, %c0_i32, %c0_i32_0 : i32, i32, i32
  }
}

</mosaic_0001>

<llo_original>
// kernel: tpu_custom_call.1
$region0: #{tpu_custom_call.1}
  #allocation0 [shape = 'u32[]', space=smem, size = 0x4, offset = 0x4, fixed_abs, tag = 'smem constant byte address 0x4 - core index']
  #allocation1 [shape = 'u32[144,128]{1,0:T(1,128)}', space=vmem, size = 0x12000, scoped, tag = 'internal scratch']
  #allocation2 [shape = 'bf16[64,1024]{1,0:T(16,128)(2,1)}', space=vmem, size = 0x20000, scoped, tag = 'scratch operand']
  #allocation3 [shape = 'bf16[576,512]{1,0:T(16,128)(2,1)}', space=vmem, size = 0x90000, scoped, tag = 'scratch operand']
  #allocation4 [shape = 'f32[64,512]{1,0:T(8,128)}', space=vmem, size = 0x20000, scoped, tag = 'scratch operand']
  #allocation5 [shape = 'f32[1]{0:T(128)S(6)}', space=smem, size = 0x200, scoped, tag = 'scoped memory for tpu_custom_call.1']
  %s0 = inlined_call_operand.hbm [shape: f32[4,64,256], index: 0, kind: input, shape index: {}]
  %s1 = inlined_call_operand.hbm [shape: bf16[64,576], index: 1, kind: input, shape index: {}]
  %s2 = inlined_call_operand.vmem [shape: f32[64,1], index: 2, kind: input, shape index: {}]
  %s3 = inlined_call_operand.hbm [shape: bf16[64,576], index: 3, kind: input, shape index: {}]
  %s4 = inlined_call_operand.vmem [shape: f32[64,1], index: 4, kind: input, shape index: {}]
  %s5 = inlined_call_operand.<no memory space> [shape: f32[1], index: 5, kind: input, shape index: {}]
  %s6 = inlined_call_operand.hbm [shape: f32[4,64,256], index: 6, kind: output, shape index: {}]
  %s7 = sld [smem:[#allocation0]]
  $region69: #{tpu_custom_call.1} parent=0
    _
  %s9 = ssub.s32 1, %s7
  %s10 = scalar_select 0, %s9, %s7
  %11 = sst [smem:[#allocation5]] %s5
  $region1: #{tpu_custom_call.1} parent=0
    #allocation6 [shape = 'u8[262144]{0}', space=vmem, size = 0x40000, scoped, tag = 'input window, operand 0']
    #allocation7 [shape = 's32[2]{0}', space=sflag, size = 0x8, scoped, tag = 'scoped memory for tpu_custom_call.1']
    #allocation8 [shape = 's32[2]{0}', space=sflag, size = 0x8, scoped, tag = 'scoped memory for tpu_custom_call.1']
    #allocation9 [shape = 'u8[81920]{0}', space=vmem, size = 0x14000, scoped, tag = 'input window, operand 1, single buffered']
    #allocation10 [shape = 's32[1]{0}', space=sflag, size = 0x4, scoped, tag = 'scoped memory for tpu_custom_call.1']
    #allocation11 [shape = 'u8[81920]{0}', space=vmem, size = 0x14000, scoped, tag = 'input window, operand 3, single buffered']
    #allocation12 [shape = 'u8[262144]{0}', space=vmem, size = 0x40000, scoped, tag = 'output window, operand 0']
    %12 = vsyncpa [#allocation7], 0
    %s13 = scalar_lea.sflag [#allocation7], 1
    %14 = vsyncpa %s13, 0
    %15 = vsyncpa [#allocation10], 0
    %16 = vsyncpa [#allocation8], 0
    %s17 = scalar_lea.sflag [#allocation8], 1
    %18 = vsyncpa %s17, 0
    loop: start=0, step=1, limit=4
    $region2: #{tpu_custom_call.1} parent=1 // loop_pre_header
      _
    $region3: #{tpu_custom_call.1} parent=1 // loop_header
      %s20 = sphi 0, %s24
      %p21 = scmp.ge.s32.totalorder %s20, 4
      %s30 = sphi 0, %s32
      %s33 = sphi 0, %s30
      %s34 = sphi 0, %s33
      %s50 = sphi 0, %s34
      %s54 = sphi 0, %s54
      %s56 = sphi 0, %s54
      %s57 = sphi 0, %s56
      %s71 = sphi 0, %s57
      %s75 = sphi 0, %s75
      %s77 = sphi 0, %s75
      %s78 = sphi 0, %s77
      %s92 = sphi 0, %s78
      %s96 = sphi 0, %s96
      %s98 = sphi 0, %s96
      %s99 = sphi 0, %s98
      %s113 = sphi 0, %s99
      %s117 = sphi 0, %s117
      %s119 = sphi 0, %s117
      %s120 = sphi 0, %s119
      %s134 = sphi 0, %s120
      %s138 = sphi 0, %s138
      %s140 = sphi 0, %s138
      %s141 = sphi 0, %s140
      %s155 = sphi 0, %s141
      %s161 = sphi 0, %s163
      %s164 = sphi 0, %s161
      %s165 = sphi 0, %s164
      %s181 = sphi 0, %s165
    $region4: #{tpu_custom_call.1} parent=1 // loop_header_branch
      %23 = sbr.rel (%p21) target = $region8
    $region5: #{tpu_custom_call.1} parent=1 // loop_body
      %s25 = ssub.s32 %s20, 1
      %s26 = ssub.s32 %s20, 2
      %s27 = sadd.s32 %s20, 1
      %s28 = ssub.s32 %s20, %s27
      %p29 = scmp.eq.s32.totalorder %s28, 0
      %s31 = sadd.s32 %s30, 1
      %s32 = scalar_select %p29, %s30, %s31
      %p35 = pneg %p29
      %p36 = scmp.eq.s32.totalorder %s20, 1
      %p37 = por %p35, %p36
      %p38 = scmp.ne.s32.totalorder %s30, %s33
      %p39 = scmp.eq.s32.totalorder %s20, 0
      %p40 = por %p38, %p39
      %p41 = scmp.ne.s32.totalorder %s30, %s33
      %p42 = scmp.eq.s32.totalorder %s25, 1
      %p43 = por %p41, %p42
      %p44 = scmp.ne.s32.totalorder %s33, %s34
      %p45 = scmp.eq.s32.totalorder %s25, 0
      %p46 = por %p44, %p45
      %p47 = scmp.ne.s32.totalorder %s33, %s34
      %p48 = scmp.eq.s32.totalorder %s26, 1
      %p49 = por %p47, %p48
      %p51 = scmp.ne.s32.totalorder %s34, %s50
      %p52 = scmp.eq.s32.totalorder %s26, 0
      %p53 = por %p51, %p52
      %s55 = sadd.s32 %s54, 1
      %p58 = scmp.eq.s32.totalorder %s20, 1
      %p59 = scmp.ne.s32.totalorder %s54, %s56
      %p60 = scmp.eq.s32.totalorder %s20, 0
      %p61 = por %p59, %p60
      %p62 = scmp.ne.s32.totalorder %s54, %s56
      %p63 = scmp.eq.s32.totalorder %s25, 1
      %p64 = por %p62, %p63
      %p65 = scmp.ne.s32.totalorder %s56, %s57
      %p66 = scmp.eq.s32.totalorder %s25, 0
      %p67 = por %p65, %p66
      %p68 = scmp.ne.s32.totalorder %s56, %s57
      %p69 = scmp.eq.s32.totalorder %s26, 1
      %p70 = por %p68, %p69
      %p72 = scmp.ne.s32.totalorder %s57, %s71
      %p73 = scmp.eq.s32.totalorder %s26, 0
      %p74 = por %p72, %p73
      %s76 = sadd.s32 %s75, 1
      %p79 = scmp.eq.s32.totalorder %s20, 1
      %p80 = scmp.ne.s32.totalorder %s75, %s77
      %p81 = scmp.eq.s32.totalorder %s20, 0
      %p82 = por %p80, %p81
      %p83 = scmp.ne.s32.totalorder %s75, %s77
      %p84 = scmp.eq.s32.totalorder %s25, 1
      %p85 = por %p83, %p84
      %p86 = scmp.ne.s32.totalorder %s77, %s78
      %p87 = scmp.eq.s32.totalorder %s25, 0
      %p88 = por %p86, %p87
      %p89 = scmp.ne.s32.totalorder %s77, %s78
      %p90 = scmp.eq.s32.totalorder %s26, 1
      %p91 = por %p89, %p90
      %p93 = scmp.ne.s32.totalorder %s78, %s92
      %p94 = scmp.eq.s32.totalorder %s26, 0
      %p95 = por %p93, %p94
      %s97 = sadd.s32 %s96, 1
      %p100 = scmp.eq.s32.totalorder %s20, 1
      %p101 = scmp.ne.s32.totalorder %s96, %s98
      %p102 = scmp.eq.s32.totalorder %s20, 0
      %p103 = por %p101, %p102
      %p104 = scmp.ne.s32.totalorder %s96, %s98
      %p105 = scmp.eq.s32.totalorder %s25, 1
      %p106 = por %p104, %p105
      %p107 = scmp.ne.s32.totalorder %s98, %s99
      %p108 = scmp.eq.s32.totalorder %s25, 0
      %p109 = por %p107, %p108
      %p110 = scmp.ne.s32.totalorder %s98, %s99
      %p111 = scmp.eq.s32.totalorder %s26, 1
      %p112 = por %p110, %p111
      %p114 = scmp.ne.s32.totalorder %s99, %s113
      %p115 = scmp.eq.s32.totalorder %s26, 0
      %p116 = por %p114, %p115
      %s118 = sadd.s32 %s117, 1
      %p121 = scmp.eq.s32.totalorder %s20, 1
      %p122 = scmp.ne.s32.totalorder %s117, %s119
      %p123 = scmp.eq.s32.totalorder %s20, 0
      %p124 = por %p122, %p123
      %p125 = scmp.ne.s32.totalorder %s117, %s119
      %p126 = scmp.eq.s32.totalorder %s25, 1
      %p127 = por %p125, %p126
      %p128 = scmp.ne.s32.totalorder %s119, %s120
      %p129 = scmp.eq.s32.totalorder %s25, 0
      %p130 = por %p128, %p129
      %p131 = scmp.ne.s32.totalorder %s119, %s120
      %p132 = scmp.eq.s32.totalorder %s26, 1
      %p133 = por %p131, %p132
      %p135 = scmp.ne.s32.totalorder %s120, %s134
      %p136 = scmp.eq.s32.totalorder %s26, 0
      %p137 = por %p135, %p136
      %s139 = sadd.s32 %s138, 1
      %p142 = scmp.eq.s32.totalorder %s20, 1
      %p143 = scmp.ne.s32.totalorder %s138, %s140
      %p144 = scmp.eq.s32.totalorder %s20, 0
      %p145 = por %p143, %p144
      %p146 = scmp.ne.s32.totalorder %s138, %s140
      %p147 = scmp.eq.s32.totalorder %s25, 1
      %p148 = por %p146, %p147
      %p149 = scmp.ne.s32.totalorder %s140, %s141
      %p150 = scmp.eq.s32.totalorder %s25, 0
      %p151 = por %p149, %p150
      %p152 = scmp.ne.s32.totalorder %s140, %s141
      %p153 = scmp.eq.s32.totalorder %s26, 1
      %p154 = por %p152, %p153
      %p156 = scmp.ne.s32.totalorder %s141, %s155
      %p157 = scmp.eq.s32.totalorder %s26, 0
      %p158 = por %p156, %p157
      %s159 = ssub.s32 %s20, %s27
      %p160 = scmp.eq.s32.totalorder %s159, 0
      %s162 = sadd.s32 %s161, 1
      %s163 = scalar_select %p160, %s161, %s162
      %p166 = pneg %p160
      %p167 = scmp.eq.s32.totalorder %s20, 1
      %p168 = por %p166, %p167
      %p169 = scmp.ne.s32.totalorder %s161, %s164
      %p170 = scmp.eq.s32.totalorder %s20, 0
      %p171 = por %p169, %p170
      %p172 = scmp.ne.s32.totalorder %s161, %s164
      %p173 = scmp.eq.s32.totalorder %s25, 1
      %p174 = por %p172, %p173
      %p175 = scmp.ne.s32.totalorder %s164, %s165
      %p176 = scmp.eq.s32.totalorder %s25, 0
      %p177 = por %p175, %p176
      %p178 = scmp.ne.s32.totalorder %s164, %s165
      %p179 = scmp.eq.s32.totalorder %s26, 1
      %p180 = por %p178, %p179
      %p182 = scmp.ne.s32.totalorder %s165, %s181
      %p183 = scmp.eq.s32.totalorder %s26, 0
      %p184 = por %p182, %p183
      %p185 = scmp.le.s32.totalorder 1, %s20
      %p186 = scmp.lt.s32.totalorder %s20, 3
      %p187 = pnand %p185, %p186
      %p188 = pneg %p187
      // Predicated region
      $region9: #{tpu_custom_call.1} parent=5 // pred_check
        _
      $region10: #{tpu_custom_call.1} parent=5 // pred_check_branch
        %190 = sbr.rel (%p187) target = $region12
      $region11: #{tpu_custom_call.1} parent=5 // pred_region
        %s191 = ssub.s32 %s20, 1
        // Predicated region
        $region13: #{tpu_custom_call.1} parent=11 // pred_check
          %p192 = pneg %p67
        $region14: #{tpu_custom_call.1} parent=11 // pred_check_branch
          %194 = sbr.rel (%p192) target = $region16
        $region15: #{tpu_custom_call.1} parent=11 // pred_region
          %s196 = ssub.s32 2560, 2560
          %197 = vsyncadd [#allocation10], %s196
          %s198 = sshll.u32 [#allocation9], 4
          %s199 = int_to_ptr.vmem [resolvable:$true] %s198
          %204 = dma.hbm_to_vmem [thread:$0]  %s1, 2560, %s199, [#allocation10], 320, 320, 20
        $region16: #{tpu_custom_call.1} parent=11 // pred_fallthru
          _
        // Predicated region
        $region17: #{tpu_custom_call.1} parent=11 // pred_check
          %p205 = pneg %p88
        $region18: #{tpu_custom_call.1} parent=11 // pred_check_branch
          %207 = sbr.rel (%p205) target = $region20
        $region19: #{tpu_custom_call.1} parent=11 // pred_region
          _
        $region20: #{tpu_custom_call.1} parent=11 // pred_fallthru
          _
        // Predicated region
        $region21: #{tpu_custom_call.1} parent=11 // pred_check
          %p208 = pneg %p109
        $region22: #{tpu_custom_call.1} parent=11 // pred_check_branch
          %210 = sbr.rel (%p208) target = $region24
        $region23: #{tpu_custom_call.1} parent=11 // pred_region
          %s212 = ssub.s32 2560, 2560
          %213 = vsyncadd [#allocation10], %s212
          %s214 = sshll.u32 [#allocation11], 4
          %s215 = int_to_ptr.vmem [resolvable:$true] %s214
          %220 = dma.hbm_to_vmem [thread:$0]  %s3, 2560, %s215, [#allocation10], 320, 320, 20
        $region24: #{tpu_custom_call.1} parent=11 // pred_fallthru
          _
        // Predicated region
        $region25: #{tpu_custom_call.1} parent=11 // pred_check
          %p221 = pneg %p130
        $region26: #{tpu_custom_call.1} parent=11 // pred_check_branch
          %223 = sbr.rel (%p221) target = $region28
        $region27: #{tpu_custom_call.1} parent=11 // pred_region
          _
        $region28: #{tpu_custom_call.1} parent=11 // pred_fallthru
          _
        // Predicated region
        $region29: #{tpu_custom_call.1} parent=11 // pred_check
          %p224 = pneg %p151
        $region30: #{tpu_custom_call.1} parent=11 // pred_check_branch
          %226 = sbr.rel (%p224) target = $region32
        $region31: #{tpu_custom_call.1} parent=11 // pred_region
          _
        $region32: #{tpu_custom_call.1} parent=11 // pred_fallthru
          _
      $region12: #{tpu_custom_call.1} parent=5 // pred_fallthru
        _
      %p227 = scmp.lt.s32.totalorder %s20, 2
      // Predicated region
      $region33: #{tpu_custom_call.1} parent=5 // pred_check
        %p228 = pneg %p227
      $region34: #{tpu_custom_call.1} parent=5 // pred_check_branch
        %230 = sbr.rel (%p228) target = $region36
      $region35: #{tpu_custom_call.1} parent=5 // pred_region
        // Predicated region
        $region37: #{tpu_custom_call.1} parent=35 // pred_check
          %p231 = pneg %p40
        $region38: #{tpu_custom_call.1} parent=35 // pred_check_branch
          %233 = sbr.rel (%p231) target = $region40
        $region39: #{tpu_custom_call.1} parent=35 // pred_region
          %s234 = sand.u32 %s30, 1
          %s235 = scalar_lea.sflag [#allocation7], %s234
          %s236 = sand.u32 %s30, 1
          %s237 = smul.addr %s236, 256
          %s238 = scalar_lea.vmem [#allocation6], %s237
          %s239 = smul.u32 2, %s20
          %s241 = ssub.s32 4096, 4096
          %242 = vsyncadd %s235, %s241
          %s243 = smul.addr %s239, 16
          %s244 = smul.addr %s243, 128
          %s245 = scalar_lea.hbm %s0, %s244
          %s246 = sshll.u32 %s238, 4
          %s247 = int_to_ptr.vmem [resolvable:$true] %s246
          %252 = dma.hbm_to_vmem [thread:$0]  %s245, 4096, %s247, %s235, 256, 256, 16
        $region40: #{tpu_custom_call.1} parent=35 // pred_fallthru
          _
      $region36: #{tpu_custom_call.1} parent=5 // pred_fallthru
        _
      %p253 = scmp.le.s32.totalorder 1, %s20
      %p254 = scmp.lt.s32.totalorder %s20, 3
      %p255 = pnand %p253, %p254
      %p256 = pneg %p255
      // Predicated region
      $region41: #{tpu_custom_call.1} parent=5 // pred_check
        _
      $region42: #{tpu_custom_call.1} parent=5 // pred_check_branch
        %258 = sbr.rel (%p255) target = $region44
      $region43: #{tpu_custom_call.1} parent=5 // pred_region
        %s259 = ssub.s32 %s20, 1
        %s260 = sand.u32 %s33, 1
        %s261 = scalar_lea.sflag [#allocation7], %s260
        %s262 = sand.u32 %s33, 1
        %s263 = smul.addr %s262, 256
        %s264 = scalar_lea.vmem [#allocation6], %s263
        // Predicated region
        $region45: #{tpu_custom_call.1} parent=43 // pred_check
          %p265 = pneg %p46
        $region46: #{tpu_custom_call.1} parent=43 // pred_check_branch
          %267 = sbr.rel (%p265) target = $region48
        $region47: #{tpu_custom_call.1} parent=43 // pred_region
          %268 = dma.done %s261, 4096
        $region48: #{tpu_custom_call.1} parent=43 // pred_fallthru
          _
        // Predicated region
        $region49: #{tpu_custom_call.1} parent=43 // pred_check
          %p269 = pneg %p67
        $region50: #{tpu_custom_call.1} parent=43 // pred_check_branch
          %271 = sbr.rel (%p269) target = $region52
        $region51: #{tpu_custom_call.1} parent=43 // pred_region
          %272 = dma.done [#allocation10], 2560
        $region52: #{tpu_custom_call.1} parent=43 // pred_fallthru
          _
        // Predicated region
        $region53: #{tpu_custom_call.1} parent=43 // pred_check
          %p273 = pneg %p109
        $region54: #{tpu_custom_call.1} parent=43 // pred_check_branch
          %275 = sbr.rel (%p273) target = $region56
        $region55: #{tpu_custom_call.1} parent=43 // pred_region
          %276 = dma.done [#allocation10], 2560
        $region56: #{tpu_custom_call.1} parent=43 // pred_fallthru
          _
        %s277 = sand.u32 %s33, 1
        %s278 = scalar_lea.sflag [#allocation7], %s277
        %s279 = sand.u32 %s33, 1
        %s280 = smul.addr %s279, 256
        %s281 = scalar_lea.vmem [#allocation6], %s280
        %p282 = pneg %p46
        %p283 = pneg %p43
        %p284 = pneg %p67
        %p285 = pneg %p64
        %p286 = pneg %p88
        %p287 = pneg %p85
        %p288 = pneg %p109
        %p289 = pneg %p106
        %p290 = pneg %p130
        %p291 = pneg %p127
        %p292 = pneg %p151
        %p293 = pneg %p148
        %p294 = pneg %p177
        %p295 = pneg %p174
        %s296 = sand.u32 %s164, 1
        %s297 = scalar_lea.sflag [#allocation8], %s296
        %s298 = sand.u32 %s164, 1
        %s299 = smul.addr %s298, 256
        %s300 = scalar_lea.vmem [#allocation12], %s299
        %s301 = smul.u32 2, %s25
        %s302 = smul.u32 2, %s25
        %s306 = sld [smem:[#allocation5]]
        %v307 = vlaneseq
        %v308 = vand.u32 %v307, 127
        %v309 = vadd.s32 %v308, 128
        %vm310 = vcmp.lt.s32.totalorder %v308, 0
        %v311 = vsub.s32 0, %v308
        %v312 = vsel %vm310, %v311, %v308
        %v313 = vshrl.u32 %v312, 4
        %v314 = vand.u32 %v312, 15
        %v315 = vsub.s32 0, %v314
        %v316 = vsel %vm310, %v315, %v314
        %vm317 = vcmp.lt.s32.totalorder %v309, 0
        %v318 = vsub.s32 0, %v309
        %v319 = vsel %vm317, %v318, %v309
        %v320 = vshrl.u32 %v319, 4
        %v321 = vand.u32 %v319, 15
        %v322 = vsub.s32 0, %v321
        %v323 = vsel %vm317, %v322, %v321
        %vm324 = vcmp.ne.s32.totalorder %v316, 0
        %vm325 = vcmp.ne.s32.totalorder %v323, 0
        %vm326 = vcmp.lt.s32.totalorder %v316, 0
        %vm327 = vcmp.lt.s32.totalorder %v323, 0
        %vm328 = vmand %vm326, %vm324
        %vm329 = vmand %vm327, %vm325
        %v330 = vadd.s32 %v316, 16
        %v331 = vadd.s32 %v323, 16
        %v332 = vsel %vm328, %v330, %v316
        %v333 = vsel %vm329, %v331, %v323
        %vm334 = vcmp.ne.s32.totalorder %v332, 0
        %vm335 = vcmp.ne.s32.totalorder %v333, 0
        %vm336 = vcmp.ne.s32.totalorder %v332, 15
        %vm337 = vcmp.ne.s32.totalorder %v333, 15
        %vm338 = vcmask 1048440
        %339 = vst.msk [vmem:[#allocation2] sm:$0xff] %vm338, 0
        %340 = vst.msk [vmem:[#allocation2 + $0x40] sm:$0xff] %vm338, 0
        %341 = vst.msk [vmem:[#allocation2 + $0x80] sm:$0xff] %vm338, 0
        %342 = vst.msk [vmem:[#allocation2 + $0xc0] sm:$0xff] %vm338, 0
        %vm343 = vcmask 138240
        %344 = vst.msk [vmem:[#allocation2 + $0x18] sm:$0xff] %vm343, 0
        %345 = vst.msk [vmem:[#allocation2 + $0x58] sm:$0xff] %vm343, 0
        %346 = vst.msk [vmem:[#allocation2 + $0x98] sm:$0xff] %vm343, 0
        %347 = vst.msk [vmem:[#allocation2 + $0xd8] sm:$0xff] %vm343, 0
        %v348 = vld [vmem:[%s264] sm:$0xff]
        %v349 = vld [vmem:[%s264 + $0x8] sm:$0xff]
        %v350 = vld [vmem:[%s264 + $0x10] sm:$0xff]
        %v351 = vld [vmem:[%s264 + $0x18] sm:$0xff]
        %v352 = vld [vmem:[%s264 + $0x20] sm:$0xff]
        %v353 = vld [vmem:[%s264 + $0x28] sm:$0xff]
        %v354 = vld [vmem:[%s264 + $0x30] sm:$0xff]
        %v355 = vld [vmem:[%s264 + $0x38] sm:$0xff]
        %v356 = vld [vmem:[%s264 + $0x40] sm:$0xff]
        %v357 = vld [vmem:[%s264 + $0x48] sm:$0xff]
        %v358 = vld [vmem:[%s264 + $0x50] sm:$0xff]
        %v359 = vld [vmem:[%s264 + $0x58] sm:$0xff]
        %v360 = vld [vmem:[%s264 + $0x60] sm:$0xff]
        %v361 = vld [vmem:[%s264 + $0x68] sm:$0xff]
        %v362 = vld [vmem:[%s264 + $0x70] sm:$0xff]
        %v363 = vld [vmem:[%s264 + $0x78] sm:$0xff]
        %v364 = vpack.c.bf16 %v350, %v348
        %v365 = vpack.c.bf16 %v351, %v349
        %v366 = vpack.c.bf16 %v354, %v352
        %v367 = vpack.c.bf16 %v355, %v353
        %v368 = vpack.c.bf16 %v358, %v356
        %v369 = vpack.c.bf16 %v359, %v357
        %v370 = vpack.c.bf16 %v362, %v360
        %v371 = vpack.c.bf16 %v363, %v361
        %372 = vst [vmem:[#allocation2 + $0x8] sm:$0xff] %v364
        %373 = vst [vmem:[#allocation2 + $0x10] sm:$0xff] %v365
        %374 = vst [vmem:[#allocation2 + $0x48] sm:$0xff] %v366
        %375 = vst [vmem:[#allocation2 + $0x50] sm:$0xff] %v367
        %376 = vst [vmem:[#allocation2 + $0x88] sm:$0xff] %v368
        %377 = vst [vmem:[#allocation2 + $0x90] sm:$0xff] %v369
        %378 = vst [vmem:[#allocation2 + $0xc8] sm:$0xff] %v370
        %379 = vst [vmem:[#allocation2 + $0xd0] sm:$0xff] %v371
        %380 = vst.msk [vmem:[#allocation2 + $0x20] sm:$0xff] %vm338, 0
        %381 = vst.msk [vmem:[#allocation2 + $0x60] sm:$0xff] %vm338, 0
        %382 = vst.msk [vmem:[#allocation2 + $0xa0] sm:$0xff] %vm338, 0
        %383 = vst.msk [vmem:[#allocation2 + $0xe0] sm:$0xff] %vm338, 0
        %384 = vst.msk [vmem:[#allocation2 + $0x38] sm:$0xff] %vm343, 0
        %385 = vst.msk [vmem:[#allocation2 + $0x78] sm:$0xff] %vm343, 0
        %386 = vst.msk [vmem:[#allocation2 + $0xb8] sm:$0xff] %vm343, 0
        %387 = vst.msk [vmem:[#allocation2 + $0xf8] sm:$0xff] %vm343, 0
        %s388 = scalar_lea.vmem %s264, 128 [#allocation6]
        %v389 = vld [vmem:[%s388] sm:$0xff]
        %v390 = vld [vmem:[%s388 + $0x8] sm:$0xff]
        %v391 = vld [vmem:[%s388 + $0x10] sm:$0xff]
        %v392 = vld [vmem:[%s388 + $0x18] sm:$0xff]
        %v393 = vld [vmem:[%s388 + $0x20] sm:$0xff]
        %v394 = vld [vmem:[%s388 + $0x28] sm:$0xff]
        %v395 = vld [vmem:[%s388 + $0x30] sm:$0xff]
        %v396 = vld [vmem:[%s388 + $0x38] sm:$0xff]
        %v397 = vld [vmem:[%s388 + $0x40] sm:$0xff]
        %v398 = vld [vmem:[%s388 + $0x48] sm:$0xff]
        %v399 = vld [vmem:[%s388 + $0x50] sm:$0xff]
        %v400 = vld [vmem:[%s388 + $0x58] sm:$0xff]
        %v401 = vld [vmem:[%s388 + $0x60] sm:$0xff]
        %v402 = vld [vmem:[%s388 + $0x68] sm:$0xff]
        %v403 = vld [vmem:[%s388 + $0x70] sm:$0xff]
        %v404 = vld [vmem:[%s388 + $0x78] sm:$0xff]
        %v405 = vpack.c.bf16 %v391, %v389
        %v406 = vpack.c.bf16 %v392, %v390
        %v407 = vpack.c.bf16 %v395, %v393
        %v408 = vpack.c.bf16 %v396, %v394
        %v409 = vpack.c.bf16 %v399, %v397
        %v410 = vpack.c.bf16 %v400, %v398
        %v411 = vpack.c.bf16 %v403, %v401
        %v412 = vpack.c.bf16 %v404, %v402
        %413 = vst [vmem:[#allocation2 + $0x28] sm:$0xff] %v405
        %414 = vst [vmem:[#allocation2 + $0x30] sm:$0xff] %v406
        %415 = vst [vmem:[#allocation2 + $0x68] sm:$0xff] %v407
        %416 = vst [vmem:[#allocation2 + $0x70] sm:$0xff] %v408
        %417 = vst [vmem:[#allocation2 + $0xa8] sm:$0xff] %v409
        %418 = vst [vmem:[#allocation2 + $0xb0] sm:$0xff] %v410
        %419 = vst [vmem:[#allocation2 + $0xe8] sm:$0xff] %v411
        %420 = vst [vmem:[#allocation2 + $0xf0] sm:$0xff] %v412
        %v421 = vld [vmem:[#allocation2] sm:$0xff]
        %v422 = vld [vmem:[#allocation2 + $0x8] sm:$0xff]
        %v423 = vld [vmem:[#allocation2 + $0x10] sm:$0xff]
        %v424 = vld [vmem:[#allocation2 + $0x40] sm:$0xff]
        %v425 = vld [vmem:[#allocation2 + $0x48] sm:$0xff]
        %v426 = vld [vmem:[#allocation2 + $0x50] sm:$0xff]
        %v427 = vld [vmem:[#allocation2 + $0x80] sm:$0xff]
        %v428 = vld [vmem:[#allocation2 + $0x88] sm:$0xff]
        %v429 = vld [vmem:[#allocation2 + $0x90] sm:$0xff]
        %v430 = vld [vmem:[#allocation2 + $0xc0] sm:$0xff]
        %v431 = vld [vmem:[#allocation2 + $0xc8] sm:$0xff]
        %v432 = vld [vmem:[#allocation2 + $0xd0] sm:$0xff]
        %v433 = vsel %vm334, 1, 0
        %v434 = vsel %vm335, 1, 0
        %vm435 = vcmp.eq.s32.totalorder %v433, 1
        %vm436 = vcmp.eq.s32.totalorder %v434, 1
        %vm437 = vmpackc.low %vm436, %vm435
        %v438 = vsel %vm437, 65537, 0
        %v439 = vlaneseq
        %v440 = vshrl.u32 %v439, 7
        %v441 = vsub.s32 0, %v440
        %v442 = vrot.slane %v438, %v441
        %v443 = vlaneseq
        %v444 = vshrl.u32 %v443, 7
        %v445 = vsub.s32 4, %v444
        %v446 = vrot.slane %v438, %v445
        %447 = vrot.lane.b32.xlu0 %v442, 111
        %v448 = vpop.permute.xlu0 %447
        %449 = vrot.lane.b32.xlu0 %v446, 111
        %v450 = vpop.permute.xlu0 %449
        %vm451 = vcmask 908288
        %v452 = vsel %vm451, %v448, %v450
        %vm453 = vcmp.ne.s16.totalorder %v448, 0
        %vm454 = vcmp.ne.s16.totalorder %v452, 0
        %vm455 = vcmp.ne.s16.totalorder %v450, 0
        %v456 = vsel %vm453, %v421, 0
        %v457 = vsel %vm454, %v422, 0
        %v458 = vsel %vm455, %v423, 0
        %v459 = vsel %vm453, %v424, 0
        %v460 = vsel %vm454, %v425, 0
        %v461 = vsel %vm455, %v426, 0
        %v462 = vsel %vm453, %v427, 0
        %v463 = vsel %vm454, %v428, 0
        %v464 = vsel %vm455, %v429, 0
        %v465 = vsel %vm453, %v430, 0
        %v466 = vsel %vm454, %v431, 0
        %v467 = vsel %vm455, %v432, 0
        %480 = vrot.lane.b32.xlu0 %v456, 17
        %v481 = vpop.permute.xlu0 %480
        %482 = vrot.lane.b32.xlu0 %v457, 17
        %v483 = vpop.permute.xlu0 %482
        %484 = vrot.lane.b32.xlu0 %v458, 17
        %v485 = vpop.permute.xlu0 %484
        %486 = vrot.lane.b32.xlu0 %v459, 17
        %v487 = vpop.permute.xlu0 %486
        %488 = vrot.lane.b32.xlu0 %v460, 17
        %v489 = vpop.permute.xlu0 %488
        %490 = vrot.lane.b32.xlu0 %v461, 17
        %v491 = vpop.permute.xlu0 %490
        %492 = vrot.lane.b32.xlu0 %v462, 17
        %v493 = vpop.permute.xlu0 %492
        %494 = vrot.lane.b32.xlu0 %v463, 17
        %v495 = vpop.permute.xlu0 %494
        %496 = vrot.lane.b32.xlu0 %v464, 17
        %v497 = vpop.permute.xlu0 %496
        %498 = vrot.lane.b32.xlu0 %v465, 17
        %v499 = vpop.permute.xlu0 %498
        %500 = vrot.lane.b32.xlu0 %v466, 17
        %v501 = vpop.permute.xlu0 %500
        %502 = vrot.lane.b32.xlu0 %v467, 17
        %v503 = vpop.permute.xlu0 %502
        %vm504 = vcmask 138240
        %v505 = vsel %vm504, %v481, %v483
        %v506 = vsel %vm504, %v483, %v485
        %v507 = vsel %vm504, %v487, %v489
        %v508 = vsel %vm504, %v489, %v491
        %v509 = vsel %vm504, %v493, %v495
        %v510 = vsel %vm504, %v495, %v497
        %v511 = vsel %vm504, %v499, %v501
        %v512 = vsel %vm504, %v501, %v503
        %521 = vst [vmem:[#allocation3] sm:$0xff] %v505
        %522 = vst [vmem:[#allocation3 + $0x8] sm:$0xff] %v506
        %523 = vst [vmem:[#allocation3 + $0x20] sm:$0xff] %v507
        %524 = vst [vmem:[#allocation3 + $0x28] sm:$0xff] %v508
        %525 = vst [vmem:[#allocation3 + $0x40] sm:$0xff] %v509
        %526 = vst [vmem:[#allocation3 + $0x48] sm:$0xff] %v510
        %527 = vst [vmem:[#allocation3 + $0x60] sm:$0xff] %v511
        %528 = vst [vmem:[#allocation3 + $0x68] sm:$0xff] %v512
        %v529 = vld [vmem:[#allocation2] sm:$0xff]
        %v530 = vld [vmem:[#allocation2 + $0x8] sm:$0xff]
        %v531 = vld [vmem:[#allocation2 + $0x10] sm:$0xff]
        %v532 = vld [vmem:[#allocation2 + $0x40] sm:$0xff]
        %v533 = vld [vmem:[#allocation2 + $0x48] sm:$0xff]
        %v534 = vld [vmem:[#allocation2 + $0x50] sm:$0xff]
        %v535 = vld [vmem:[#allocation2 + $0x80] sm:$0xff]
        %v536 = vld [vmem:[#allocation2 + $0x88] sm:$0xff]
        %v537 = vld [vmem:[#allocation2 + $0x90] sm:$0xff]
        %v538 = vld [vmem:[#allocation2 + $0xc0] sm:$0xff]
        %v539 = vld [vmem:[#allocation2 + $0xc8] sm:$0xff]
        %v540 = vld [vmem:[#allocation2 + $0xd0] sm:$0xff]
        %553 = vrot.lane.b32.xlu0 %v529, 16
        %v554 = vpop.permute.xlu0 %553
        %555 = vrot.lane.b32.xlu0 %v530, 16
        %v556 = vpop.permute.xlu0 %555
        %557 = vrot.lane.b32.xlu0 %v531, 16
        %v558 = vpop.permute.xlu0 %557
        %559 = vrot.lane.b32.xlu0 %v532, 16
        %v560 = vpop.permute.xlu0 %559
        %561 = vrot.lane.b32.xlu0 %v533, 16
        %v562 = vpop.permute.xlu0 %561
        %563 = vrot.lane.b32.xlu0 %v534, 16
        %v564 = vpop.permute.xlu0 %563
        %565 = vrot.lane.b32.xlu0 %v535, 16
        %v566 = vpop.permute.xlu0 %565
        %567 = vrot.lane.b32.xlu0 %v536, 16
        %v568 = vpop.permute.xlu0 %567
        %569 = vrot.lane.b32.xlu0 %v537, 16
        %v570 = vpop.permute.xlu0 %569
        %571 = vrot.lane.b32.xlu0 %v538, 16
        %v572 = vpop.permute.xlu0 %571
        %573 = vrot.lane.b32.xlu0 %v539, 16
        %v574 = vpop.permute.xlu0 %573
        %575 = vrot.lane.b32.xlu0 %v540, 16
        %v576 = vpop.permute.xlu0 %575
        %vm577 = vcmask 130048
        %v578 = vsel %vm577, %v554, %v556
        %v579 = vsel %vm577, %v556, %v558
        %v580 = vsel %vm577, %v560, %v562
        %v581 = vsel %vm577, %v562, %v564
        %v582 = vsel %vm577, %v566, %v568
        %v583 = vsel %vm577, %v568, %v570
        %v584 = vsel %vm577, %v572, %v574
        %v585 = vsel %vm577, %v574, %v576
        %594 = vst [vmem:[#allocation3 + $0x80] sm:$0xff] %v578
        %595 = vst [vmem:[#allocation3 + $0x88] sm:$0xff] %v579
        %596 = vst [vmem:[#allocation3 + $0xa0] sm:$0xff] %v580
        %597 = vst [vmem:[#allocation3 + $0xa8] sm:$0xff] %v581
        %598 = vst [vmem:[#allocation3 + $0xc0] sm:$0xff] %v582
        %599 = vst [vmem:[#allocation3 + $0xc8] sm:$0xff] %v583
        %600 = vst [vmem:[#allocation3 + $0xe0] sm:$0xff] %v584
        %601 = vst [vmem:[#allocation3 + $0xe8] sm:$0xff] %v585
        %v602 = vld [vmem:[#allocation2] sm:$0xff]
        %v603 = vld [vmem:[#allocation2 + $0x8] sm:$0xff]
        %v604 = vld [vmem:[#allocation2 + $0x10] sm:$0xff]
        %v605 = vld [vmem:[#allocation2 + $0x40] sm:$0xff]
        %v606 = vld [vmem:[#allocation2 + $0x48] sm:$0xff]
        %v607 = vld [vmem:[#allocation2 + $0x50] sm:$0xff]
        %v608 = vld [vmem:[#allocation2 + $0x80] sm:$0xff]
        %v609 = vld [vmem:[#allocation2 + $0x88] sm:$0xff]
        %v610 = vld [vmem:[#allocation2 + $0x90] sm:$0xff]
        %v611 = vld [vmem:[#allocation2 + $0xc0] sm:$0xff]
        %v612 = vld [vmem:[#allocation2 + $0xc8] sm:$0xff]
        %v613 = vld [vmem:[#allocation2 + $0xd0] sm:$0xff]
        %v614 = vsel %vm336, 1, 0
        %v615 = vsel %vm337, 1, 0
        %vm616 = vcmp.eq.s32.totalorder %v614, 1
        %vm617 = vcmp.eq.s32.totalorder %v615, 1
        %vm618 = vmpackc.low %vm617, %vm616
        %v619 = vsel %vm618, 65537, 0
        %v620 = vlaneseq
        %v621 = vshrl.u32 %v620, 7
        %v622 = vsub.s32 0, %v621
        %v623 = vrot.slane %v619, %v622
        %v624 = vlaneseq
        %v625 = vshrl.u32 %v624, 7
        %v626 = vsub.s32 4, %v625
        %v627 = vrot.slane %v619, %v626
        %628 = vrot.lane.b32.xlu0 %v623, 113
        %v629 = vpop.permute.xlu0 %628
        %630 = vrot.lane.b32.xlu0 %v627, 113
        %v631 = vpop.permute.xlu0 %630
        %vm632 = vcmask 924672
        %v633 = vsel %vm632, %v629, %v631
        %vm634 = vcmp.ne.s16.totalorder %v629, 0
        %vm635 = vcmp.ne.s16.totalorder %v633, 0
        %vm636 = vcmp.ne.s16.totalorder %v631, 0
        %v637 = vsel %vm634, %v602, 0
        %v638 = vsel %vm635, %v603, 0
        %v639 = vsel %vm636, %v604, 0
        %v640 = vsel %vm634, %v605, 0
        %v641 = vsel %vm635, %v606, 0
        %v642 = vsel %vm636, %v607, 0
        %v643 = vsel %vm634, %v608, 0
        %v644 = vsel %vm635, %v609, 0
        %v645 = vsel %vm636, %v610, 0
        %v646 = vsel %vm634, %v611, 0
        %v647 = vsel %vm635, %v612, 0
        %v648 = vsel %vm636, %v613, 0
        %661 = vrot.lane.b32.xlu0 %v637, 15
        %v662 = vpop.permute.xlu0 %661
        %663 = vrot.lane.b32.xlu0 %v638, 15
        %v664 = vpop.permute.xlu0 %663
        %665 = vrot.lane.b32.xlu0 %v639, 15
        %v666 = vpop.permute.xlu0 %665
        %667 = vrot.lane.b32.xlu0 %v640, 15
        %v668 = vpop.permute.xlu0 %667
        %669 = vrot.lane.b32.xlu0 %v641, 15
        %v670 = vpop.permute.xlu0 %669
        %671 = vrot.lane.b32.xlu0 %v642, 15
        %v672 = vpop.permute.xlu0 %671
        %673 = vrot.lane.b32.xlu0 %v643, 15
        %v674 = vpop.permute.xlu0 %673
        %675 = vrot.lane.b32.xlu0 %v644, 15
        %v676 = vpop.permute.xlu0 %675
        %677 = vrot.lane.b32.xlu0 %v645, 15
        %v678 = vpop.permute.xlu0 %677
        %679 = vrot.lane.b32.xlu0 %v646, 15
        %v680 = vpop.permute.xlu0 %679
        %681 = vrot.lane.b32.xlu0 %v647, 15
        %v682 = vpop.permute.xlu0 %681
        %683 = vrot.lane.b32.xlu0 %v648, 15
        %v684 = vpop.permute.xlu0 %683
        %vm685 = vcmask 121856
        %v686 = vsel %vm685, %v662, %v664
        %v687 = vsel %vm685, %v664, %v666
        %v688 = vsel %vm685, %v668, %v670
        %v689 = vsel %vm685, %v670, %v672
        %v690 = vsel %vm685, %v674, %v676
        %v691 = vsel %vm685, %v676, %v678
        %v692 = vsel %vm685, %v680, %v682
        %v693 = vsel %vm685, %v682, %v684
        %702 = vst [vmem:[#allocation3 + $0x100] sm:$0xff] %v686
        %703 = vst [vmem:[#allocation3 + $0x108] sm:$0xff] %v687
        %704 = vst [vmem:[#allocation3 + $0x120] sm:$0xff] %v688
        %705 = vst [vmem:[#allocation3 + $0x128] sm:$0xff] %v689
        %706 = vst [vmem:[#allocation3 + $0x140] sm:$0xff] %v690
        %707 = vst [vmem:[#allocation3 + $0x148] sm:$0xff] %v691
        %708 = vst [vmem:[#allocation3 + $0x160] sm:$0xff] %v692
        %709 = vst [vmem:[#allocation3 + $0x168] sm:$0xff] %v693
        %v710 = vld [vmem:[#allocation2] sm:$0xff]
        %v711 = vld [vmem:[#allocation2 + $0x8] sm:$0xff]
        %v712 = vld [vmem:[#allocation2 + $0x10] sm:$0xff]
        %v713 = vld [vmem:[#allocation2 + $0x40] sm:$0xff]
        %v714 = vld [vmem:[#allocation2 + $0x48] sm:$0xff]
        %v715 = vld [vmem:[#allocation2 + $0x50] sm:$0xff]
        %v716 = vld [vmem:[#allocation2 + $0x80] sm:$0xff]
        %v717 = vld [vmem:[#allocation2 + $0x88] sm:$0xff]
        %v718 = vld [vmem:[#allocation2 + $0x90] sm:$0xff]
        %v719 = vld [vmem:[#allocation2 + $0xc0] sm:$0xff]
        %v720 = vld [vmem:[#allocation2 + $0xc8] sm:$0xff]
        %v721 = vld [vmem:[#allocation2 + $0xd0] sm:$0xff]
        %722 = vrot.lane.b32.xlu0 %v442, 127
        %v723 = vpop.permute.xlu0 %722
        %724 = vrot.lane.b32.xlu0 %v446, 127
        %v725 = vpop.permute.xlu0 %724
        %vm726 = vcmask 1039360
        %v727 = vsel %vm726, %v723, %v725
        %vm728 = vcmp.ne.s16.totalorder %v723, 0
        %vm729 = vcmp.ne.s16.totalorder %v727, 0
        %vm730 = vcmp.ne.s16.totalorder %v725, 0
        %v731 = vsel %vm728, %v710, 0
        %v732 = vsel %vm729, %v711, 0
        %v733 = vsel %vm730, %v712, 0
        %v734 = vsel %vm728, %v713, 0
        %v735 = vsel %vm729, %v714, 0
        %v736 = vsel %vm730, %v715, 0
        %v737 = vsel %vm728, %v716, 0
        %v738 = vsel %vm729, %v717, 0
        %v739 = vsel %vm730, %v718, 0
        %v740 = vsel %vm728, %v719, 0
        %v741 = vsel %vm729, %v720, 0
        %v742 = vsel %vm730, %v721, 0
        %755 = vrot.lane.b32.xlu0 %v731, 1
        %v756 = vpop.permute.xlu0 %755
        %757 = vrot.lane.b32.xlu0 %v732, 1
        %v758 = vpop.permute.xlu0 %757
        %759 = vrot.lane.b32.xlu0 %v733, 1
        %v760 = vpop.permute.xlu0 %759
        %761 = vrot.lane.b32.xlu0 %v734, 1
        %v762 = vpop.permute.xlu0 %761
        %763 = vrot.lane.b32.xlu0 %v735, 1
        %v764 = vpop.permute.xlu0 %763
        %765 = vrot.lane.b32.xlu0 %v736, 1
        %v766 = vpop.permute.xlu0 %765
        %767 = vrot.lane.b32.xlu0 %v737, 1
        %v768 = vpop.permute.xlu0 %767
        %769 = vrot.lane.b32.xlu0 %v738, 1
        %v770 = vpop.permute.xlu0 %769
        %771 = vrot.lane.b32.xlu0 %v739, 1
        %v772 = vpop.permute.xlu0 %771
        %773 = vrot.lane.b32.xlu0 %v740, 1
        %v774 = vpop.permute.xlu0 %773
        %775 = vrot.lane.b32.xlu0 %v741, 1
        %v776 = vpop.permute.xlu0 %775
        %777 = vrot.lane.b32.xlu0 %v742, 1
        %v778 = vpop.permute.xlu0 %777
        %vm779 = vcmask 7168
        %v780 = vsel %vm779, %v756, %v758
        %v781 = vsel %vm779, %v758, %v760
        %v782 = vsel %vm779, %v762, %v764
        %v783 = vsel %vm779, %v764, %v766
        %v784 = vsel %vm779, %v768, %v770
        %v785 = vsel %vm779, %v770, %v772
        %v786 = vsel %vm779, %v774, %v776
        %v787 = vsel %vm779, %v776, %v778
        %796 = vst [vmem:[#allocation3 + $0x180] sm:$0xff] %v780
        %797 = vst [vmem:[#allocation3 + $0x188] sm:$0xff] %v781
        %798 = vst [vmem:[#allocation3 + $0x1a0] sm:$0xff] %v782
        %799 = vst [vmem:[#allocation3 + $0x1a8] sm:$0xff] %v783
        %800 = vst [vmem:[#allocation3 + $0x1c0] sm:$0xff] %v784
        %801 = vst [vmem:[#allocation3 + $0x1c8] sm:$0xff] %v785
        %802 = vst [vmem:[#allocation3 + $0x1e0] sm:$0xff] %v786
        %803 = vst [vmem:[#allocation3 + $0x1e8] sm:$0xff] %v787
        %v804 = vld [vmem:[#allocation2 + $0x8] sm:$0xff]
        %v805 = vld [vmem:[#allocation2 + $0x10] sm:$0xff]
        %v806 = vld [vmem:[#allocation2 + $0x48] sm:$0xff]
        %v807 = vld [vmem:[#allocation2 + $0x50] sm:$0xff]
        %v808 = vld [vmem:[#allocation2 + $0x88] sm:$0xff]
        %v809 = vld [vmem:[#allocation2 + $0x90] sm:$0xff]
        %v810 = vld [vmem:[#allocation2 + $0xc8] sm:$0xff]
        %v811 = vld [vmem:[#allocation2 + $0xd0] sm:$0xff]
        %812 = vst [vmem:[#allocation3 + $0x200] sm:$0xff] %v804
        %813 = vst [vmem:[#allocation3 + $0x208] sm:$0xff] %v805
        %814 = vst [vmem:[#allocation3 + $0x220] sm:$0xff] %v806
        %815 = vst [vmem:[#allocation3 + $0x228] sm:$0xff] %v807
        %816 = vst [vmem:[#allocation3 + $0x240] sm:$0xff] %v808
        %817 = vst [vmem:[#allocation3 + $0x248] sm:$0xff] %v809
        %818 = vst [vmem:[#allocation3 + $0x260] sm:$0xff] %v810
        %819 = vst [vmem:[#allocation3 + $0x268] sm:$0xff] %v811
        %v820 = vld [vmem:[#allocation2 + $0x8] sm:$0xff]
        %v821 = vld [vmem:[#allocation2 + $0x10] sm:$0xff]
        %v822 = vld [vmem:[#allocation2 + $0x18] sm:$0xff]
        %v823 = vld [vmem:[#allocation2 + $0x48] sm:$0xff]
        %v824 = vld [vmem:[#allocation2 + $0x50] sm:$0xff]
        %v825 = vld [vmem:[#allocation2 + $0x58] sm:$0xff]
        %v826 = vld [vmem:[#allocation2 + $0x88] sm:$0xff]
        %v827 = vld [vmem:[#allocation2 + $0x90] sm:$0xff]
        %v828 = vld [vmem:[#allocation2 + $0x98] sm:$0xff]
        %v829 = vld [vmem:[#allocation2 + $0xc8] sm:$0xff]
        %v830 = vld [vmem:[#allocation2 + $0xd0] sm:$0xff]
        %v831 = vld [vmem:[#allocation2 + $0xd8] sm:$0xff]
        %832 = vrot.lane.b32.xlu0 %v623, 1
        %v833 = vpop.permute.xlu0 %832
        %834 = vrot.lane.b32.xlu0 %v627, 1
        %v835 = vpop.permute.xlu0 %834
        %v836 = vsel %vm779, %v833, %v835
        %vm837 = vcmp.ne.s16.totalorder %v833, 0
        %vm838 = vcmp.ne.s16.totalorder %v836, 0
        %vm839 = vcmp.ne.s16.totalorder %v835, 0
        %v840 = vsel %vm837, %v820, 0
        %v841 = vsel %vm838, %v821, 0
        %v842 = vsel %vm839, %v822, 0
        %v843 = vsel %vm837, %v823, 0
        %v844 = vsel %vm838, %v824, 0
        %v845 = vsel %vm839, %v825, 0
        %v846 = vsel %vm837, %v826, 0
        %v847 = vsel %vm838, %v827, 0
        %v848 = vsel %vm839, %v828, 0
        %v849 = vsel %vm837, %v829, 0
        %v850 = vsel %vm838, %v830, 0
        %v851 = vsel %vm839, %v831, 0
        %864 = vrot.lane.b32.xlu0 %v840, 127
        %v865 = vpop.permute.xlu0 %864
        %866 = vrot.lane.b32.xlu0 %v841, 127
        %v867 = vpop.permute.xlu0 %866
        %868 = vrot.lane.b32.xlu0 %v842, 127
        %v869 = vpop.permute.xlu0 %868
        %870 = vrot.lane.b32.xlu0 %v843, 127
        %v871 = vpop.permute.xlu0 %870
        %872 = vrot.lane.b32.xlu0 %v844, 127
        %v873 = vpop.permute.xlu0 %872
        %874 = vrot.lane.b32.xlu0 %v845, 127
        %v875 = vpop.permute.xlu0 %874
        %876 = vrot.lane.b32.xlu0 %v846, 127
        %v877 = vpop.permute.xlu0 %876
        %878 = vrot.lane.b32.xlu0 %v847, 127
        %v879 = vpop.permute.xlu0 %878
        %880 = vrot.lane.b32.xlu0 %v848, 127
        %v881 = vpop.permute.xlu0 %880
        %882 = vrot.lane.b32.xlu0 %v849, 127
        %v883 = vpop.permute.xlu0 %882
        %884 = vrot.lane.b32.xlu0 %v850, 127
        %v885 = vpop.permute.xlu0 %884
        %886 = vrot.lane.b32.xlu0 %v851, 127
        %v887 = vpop.permute.xlu0 %886
        %v888 = vsel %vm726, %v865, %v867
        %v889 = vsel %vm726, %v867, %v869
        %v890 = vsel %vm726, %v871, %v873
        %v891 = vsel %vm726, %v873, %v875
        %v892 = vsel %vm726, %v877, %v879
        %v893 = vsel %vm726, %v879, %v881
        %v894 = vsel %vm726, %v883, %v885
        %v895 = vsel %vm726, %v885, %v887
        %904 = vst [vmem:[#allocation3 + $0x280] sm:$0xff] %v888
        %905 = vst [vmem:[#allocation3 + $0x288] sm:$0xff] %v889
        %906 = vst [vmem:[#allocation3 + $0x2a0] sm:$0xff] %v890
        %907 = vst [vmem:[#allocation3 + $0x2a8] sm:$0xff] %v891
        %908 = vst [vmem:[#allocation3 + $0x2c0] sm:$0xff] %v892
        %909 = vst [vmem:[#allocation3 + $0x2c8] sm:$0xff] %v893
        %910 = vst [vmem:[#allocation3 + $0x2e0] sm:$0xff] %v894
        %911 = vst [vmem:[#allocation3 + $0x2e8] sm:$0xff] %v895
        %v912 = vld [vmem:[#allocation2 + $0x8] sm:$0xff]
        %v913 = vld [vmem:[#allocation2 + $0x10] sm:$0xff]
        %v914 = vld [vmem:[#allocation2 + $0x18] sm:$0xff]
        %v915 = vld [vmem:[#allocation2 + $0x48] sm:$0xff]
        %v916 = vld [vmem:[#allocation2 + $0x50] sm:$0xff]
        %v917 = vld [vmem:[#allocation2 + $0x58] sm:$0xff]
        %v918 = vld [vmem:[#allocation2 + $0x88] sm:$0xff]
        %v919 = vld [vmem:[#allocation2 + $0x90] sm:$0xff]
        %v920 = vld [vmem:[#allocation2 + $0x98] sm:$0xff]
        %v921 = vld [vmem:[#allocation2 + $0xc8] sm:$0xff]
        %v922 = vld [vmem:[#allocation2 + $0xd0] sm:$0xff]
        %v923 = vld [vmem:[#allocation2 + $0xd8] sm:$0xff]
        %924 = vrot.lane.b32.xlu0 %v442, 15
        %v925 = vpop.permute.xlu0 %924
        %926 = vrot.lane.b32.xlu0 %v446, 15
        %v927 = vpop.permute.xlu0 %926
        %v928 = vsel %vm685, %v925, %v927
        %vm929 = vcmp.ne.s16.totalorder %v925, 0
        %vm930 = vcmp.ne.s16.totalorder %v928, 0
        %vm931 = vcmp.ne.s16.totalorder %v927, 0
        %v932 = vsel %vm929, %v912, 0
        %v933 = vsel %vm930, %v913, 0
        %v934 = vsel %vm931, %v914, 0
        %v935 = vsel %vm929, %v915, 0
        %v936 = vsel %vm930, %v916, 0
        %v937 = vsel %vm931, %v917, 0
        %v938 = vsel %vm929, %v918, 0
        %v939 = vsel %vm930, %v919, 0
        %v940 = vsel %vm931, %v920, 0
        %v941 = vsel %vm929, %v921, 0
        %v942 = vsel %vm930, %v922, 0
        %v943 = vsel %vm931, %v923, 0
        %956 = vrot.lane.b32.xlu0 %v932, 113
        %v957 = vpop.permute.xlu0 %956
        %958 = vrot.lane.b32.xlu0 %v933, 113
        %v959 = vpop.permute.xlu0 %958
        %960 = vrot.lane.b32.xlu0 %v934, 113
        %v961 = vpop.permute.xlu0 %960
        %962 = vrot.lane.b32.xlu0 %v935, 113
        %v963 = vpop.permute.xlu0 %962
        %964 = vrot.lane.b32.xlu0 %v936, 113
        %v965 = vpop.permute.xlu0 %964
        %966 = vrot.lane.b32.xlu0 %v937, 113
        %v967 = vpop.permute.xlu0 %966
        %968 = vrot.lane.b32.xlu0 %v938, 113
        %v969 = vpop.permute.xlu0 %968
        %970 = vrot.lane.b32.xlu0 %v939, 113
        %v971 = vpop.permute.xlu0 %970
        %972 = vrot.lane.b32.xlu0 %v940, 113
        %v973 = vpop.permute.xlu0 %972
        %974 = vrot.lane.b32.xlu0 %v941, 113
        %v975 = vpop.permute.xlu0 %974
        %976 = vrot.lane.b32.xlu0 %v942, 113
        %v977 = vpop.permute.xlu0 %976
        %978 = vrot.lane.b32.xlu0 %v943, 113
        %v979 = vpop.permute.xlu0 %978
        %v980 = vsel %vm632, %v957, %v959
        %v981 = vsel %vm632, %v959, %v961
        %v982 = vsel %vm632, %v963, %v965
        %v983 = vsel %vm632, %v965, %v967
        %v984 = vsel %vm632, %v969, %v971
        %v985 = vsel %vm632, %v971, %v973
        %v986 = vsel %vm632, %v975, %v977
        %v987 = vsel %vm632, %v977, %v979
        %996 = vst [vmem:[#allocation3 + $0x300] sm:$0xff] %v980
        %997 = vst [vmem:[#allocation3 + $0x308] sm:$0xff] %v981
        %998 = vst [vmem:[#allocation3 + $0x320] sm:$0xff] %v982
        %999 = vst [vmem:[#allocation3 + $0x328] sm:$0xff] %v983
        %1000 = vst [vmem:[#allocation3 + $0x340] sm:$0xff] %v984
        %1001 = vst [vmem:[#allocation3 + $0x348] sm:$0xff] %v985
        %1002 = vst [vmem:[#allocation3 + $0x360] sm:$0xff] %v986
        %1003 = vst [vmem:[#allocation3 + $0x368] sm:$0xff] %v987
        %v1004 = vld [vmem:[#allocation2 + $0x8] sm:$0xff]
        %v1005 = vld [vmem:[#allocation2 + $0x10] sm:$0xff]
        %v1006 = vld [vmem:[#allocation2 + $0x18] sm:$0xff]
        %v1007 = vld [vmem:[#allocation2 + $0x48] sm:$0xff]
        %v1008 = vld [vmem:[#allocation2 + $0x50] sm:$0xff]
        %v1009 = vld [vmem:[#allocation2 + $0x58] sm:$0xff]
        %v1010 = vld [vmem:[#allocation2 + $0x88] sm:$0xff]
        %v1011 = vld [vmem:[#allocation2 + $0x90] sm:$0xff]
        %v1012 = vld [vmem:[#allocation2 + $0x98] sm:$0xff]
        %v1013 = vld [vmem:[#allocation2 + $0xc8] sm:$0xff]
        %v1014 = vld [vmem:[#allocation2 + $0xd0] sm:$0xff]
        %v1015 = vld [vmem:[#allocation2 + $0xd8] sm:$0xff]
        %1028 = vrot.lane.b32.xlu0 %v1004, 112
        %v1029 = vpop.permute.xlu0 %1028
        %1030 = vrot.lane.b32.xlu0 %v1005, 112
        %v1031 = vpop.permute.xlu0 %1030
        %1032 = vrot.lane.b32.xlu0 %v1006, 112
        %v1033 = vpop.permute.xlu0 %1032
        %1034 = vrot.lane.b32.xlu0 %v1007, 112
        %v1035 = vpop.permute.xlu0 %1034
        %1036 = vrot.lane.b32.xlu0 %v1008, 112
        %v1037 = vpop.permute.xlu0 %1036
        %1038 = vrot.lane.b32.xlu0 %v1009, 112
        %v1039 = vpop.permute.xlu0 %1038
        %1040 = vrot.lane.b32.xlu0 %v1010, 112
        %v1041 = vpop.permute.xlu0 %1040
        %1042 = vrot.lane.b32.xlu0 %v1011, 112
        %v1043 = vpop.permute.xlu0 %1042
        %1044 = vrot.lane.b32.xlu0 %v1012, 112
        %v1045 = vpop.permute.xlu0 %1044
        %1046 = vrot.lane.b32.xlu0 %v1013, 112
        %v1047 = vpop.permute.xlu0 %1046
        %1048 = vrot.lane.b32.xlu0 %v1014, 112
        %v1049 = vpop.permute.xlu0 %1048
        %1050 = vrot.lane.b32.xlu0 %v1015, 112
        %v1051 = vpop.permute.xlu0 %1050
        %vm1052 = vcmask 916480
        %v1053 = vsel %vm1052, %v1029, %v1031
        %v1054 = vsel %vm1052, %v1031, %v1033
        %v1055 = vsel %vm1052, %v1035, %v1037
        %v1056 = vsel %vm1052, %v1037, %v1039
        %v1057 = vsel %vm1052, %v1041, %v1043
        %v1058 = vsel %vm1052, %v1043, %v1045
        %v1059 = vsel %vm1052, %v1047, %v1049
        %v1060 = vsel %vm1052, %v1049, %v1051
        %1069 = vst [vmem:[#allocation3 + $0x380] sm:$0xff] %v1053
        %1070 = vst [vmem:[#allocation3 + $0x388] sm:$0xff] %v1054
        %1071 = vst [vmem:[#allocation3 + $0x3a0] sm:$0xff] %v1055
        %1072 = vst [vmem:[#allocation3 + $0x3a8] sm:$0xff] %v1056
        %1073 = vst [vmem:[#allocation3 + $0x3c0] sm:$0xff] %v1057
        %1074 = vst [vmem:[#allocation3 + $0x3c8] sm:$0xff] %v1058
        %1075 = vst [vmem:[#allocation3 + $0x3e0] sm:$0xff] %v1059
        %1076 = vst [vmem:[#allocation3 + $0x3e8] sm:$0xff] %v1060
        %v1077 = vld [vmem:[#allocation2 + $0x8] sm:$0xff]
        %v1078 = vld [vmem:[#allocation2 + $0x10] sm:$0xff]
        %v1079 = vld [vmem:[#allocation2 + $0x18] sm:$0xff]
        %v1080 = vld [vmem:[#allocation2 + $0x48] sm:$0xff]
        %v1081 = vld [vmem:[#allocation2 + $0x50] sm:$0xff]
        %v1082 = vld [vmem:[#allocation2 + $0x58] sm:$0xff]
        %v1083 = vld [vmem:[#allocation2 + $0x88] sm:$0xff]
        %v1084 = vld [vmem:[#allocation2 + $0x90] sm:$0xff]
        %v1085 = vld [vmem:[#allocation2 + $0x98] sm:$0xff]
        %v1086 = vld [vmem:[#allocation2 + $0xc8] sm:$0xff]
        %v1087 = vld [vmem:[#allocation2 + $0xd0] sm:$0xff]
        %v1088 = vld [vmem:[#allocation2 + $0xd8] sm:$0xff]
        %1089 = vrot.lane.b32.xlu0 %v623, 17
        %v1090 = vpop.permute.xlu0 %1089
        %1091 = vrot.lane.b32.xlu0 %v627, 17
        %v1092 = vpop.permute.xlu0 %1091
        %v1093 = vsel %vm504, %v1090, %v1092
        %vm1094 = vcmp.ne.s16.totalorder %v1090, 0
        %vm1095 = vcmp.ne.s16.totalorder %v1093, 0
        %vm1096 = vcmp.ne.s16.totalorder %v1092, 0
        %v1097 = vsel %vm1094, %v1077, 0
        %v1098 = vsel %vm1095, %v1078, 0
        %v1099 = vsel %vm1096, %v1079, 0
        %v1100 = vsel %vm1094, %v1080, 0
        %v1101 = vsel %vm1095, %v1081, 0
        %v1102 = vsel %vm1096, %v1082, 0
        %v1103 = vsel %vm1094, %v1083, 0
        %v1104 = vsel %vm1095, %v1084, 0
        %v1105 = vsel %vm1096, %v1085, 0
        %v1106 = vsel %vm1094, %v1086, 0
        %v1107 = vsel %vm1095, %v1087, 0
        %v1108 = vsel %vm1096, %v1088, 0
        %1121 = vrot.lane.b32.xlu0 %v1097, 111
        %v1122 = vpop.permute.xlu0 %1121
        %1123 = vrot.lane.b32.xlu0 %v1098, 111
        %v1124 = vpop.permute.xlu0 %1123
        %1125 = vrot.lane.b32.xlu0 %v1099, 111
        %v1126 = vpop.permute.xlu0 %1125
        %1127 = vrot.lane.b32.xlu0 %v1100, 111
        %v1128 = vpop.permute.xlu0 %1127
        %1129 = vrot.lane.b32.xlu0 %v1101, 111
        %v1130 = vpop.permute.xlu0 %1129
        %1131 = vrot.lane.b32.xlu0 %v1102, 111
        %v1132 = vpop.permute.xlu0 %1131
        %1133 = vrot.lane.b32.xlu0 %v1103, 111
        %v1134 = vpop.permute.xlu0 %1133
        %1135 = vrot.lane.b32.xlu0 %v1104, 111
        %v1136 = vpop.permute.xlu0 %1135
        %1137 = vrot.lane.b32.xlu0 %v1105, 111
        %v1138 = vpop.permute.xlu0 %1137
        %1139 = vrot.lane.b32.xlu0 %v1106, 111
        %v1140 = vpop.permute.xlu0 %1139
        %1141 = vrot.lane.b32.xlu0 %v1107, 111
        %v1142 = vpop.permute.xlu0 %1141
        %1143 = vrot.lane.b32.xlu0 %v1108, 111
        %v1144 = vpop.permute.xlu0 %1143
        %v1145 = vsel %vm451, %v1122, %v1124
        %v1146 = vsel %vm451, %v1124, %v1126
        %v1147 = vsel %vm451, %v1128, %v1130
        %v1148 = vsel %vm451, %v1130, %v1132
        %v1149 = vsel %vm451, %v1134, %v1136
        %v1150 = vsel %vm451, %v1136, %v1138
        %v1151 = vsel %vm451, %v1140, %v1142
        %v1152 = vsel %vm451, %v1142, %v1144
        %1161 = vst [vmem:[#allocation3 + $0x400] sm:$0xff] %v1145
        %1162 = vst [vmem:[#allocation3 + $0x408] sm:$0xff] %v1146
        %1163 = vst [vmem:[#allocation3 + $0x420] sm:$0xff] %v1147
        %1164 = vst [vmem:[#allocation3 + $0x428] sm:$0xff] %v1148
        %1165 = vst [vmem:[#allocation3 + $0x440] sm:$0xff] %v1149
        %1166 = vst [vmem:[#allocation3 + $0x448] sm:$0xff] %v1150
        %1167 = vst [vmem:[#allocation3 + $0x460] sm:$0xff] %v1151
        %1168 = vst [vmem:[#allocation3 + $0x468] sm:$0xff] %v1152
        %v1169 = vld [vmem:[#allocation2 + $0x20] sm:$0xff]
        %v1170 = vld [vmem:[#allocation2 + $0x28] sm:$0xff]
        %v1171 = vld [vmem:[#allocation2 + $0x30] sm:$0xff]
        %v1172 = vld [vmem:[#allocation2 + $0x60] sm:$0xff]
        %v1173 = vld [vmem:[#allocation2 + $0x68] sm:$0xff]
        %v1174 = vld [vmem:[#allocation2 + $0x70] sm:$0xff]
        %v1175 = vld [vmem:[#allocation2 + $0xa0] sm:$0xff]
        %v1176 = vld [vmem:[#allocation2 + $0xa8] sm:$0xff]
        %v1177 = vld [vmem:[#allocation2 + $0xb0] sm:$0xff]
        %v1178 = vld [vmem:[#allocation2 + $0xe0] sm:$0xff]
        %v1179 = vld [vmem:[#allocation2 + $0xe8] sm:$0xff]
        %v1180 = vld [vmem:[#allocation2 + $0xf0] sm:$0xff]
        %v1181 = vsel %vm453, %v1169, 0
        %v1182 = vsel %vm454, %v1170, 0
        %v1183 = vsel %vm455, %v1171, 0
        %v1184 = vsel %vm453, %v1172, 0
        %v1185 = vsel %vm454, %v1173, 0
        %v1186 = vsel %vm455, %v1174, 0
        %v1187 = vsel %vm453, %v1175, 0
        %v1188 = vsel %vm454, %v1176, 0
        %v1189 = vsel %vm455, %v1177, 0
        %v1190 = vsel %vm453, %v1178, 0
        %v1191 = vsel %vm454, %v1179, 0
        %v1192 = vsel %vm455, %v1180, 0
        %1205 = vrot.lane.b32.xlu0 %v1181, 17
        %v1206 = vpop.permute.xlu0 %1205
        %1207 = vrot.lane.b32.xlu0 %v1182, 17
        %v1208 = vpop.permute.xlu0 %1207
        %1209 = vrot.lane.b32.xlu0 %v1183, 17
        %v1210 = vpop.permute.xlu0 %1209
        %1211 = vrot.lane.b32.xlu0 %v1184, 17
        %v1212 = vpop.permute.xlu0 %1211
        %1213 = vrot.lane.b32.xlu0 %v1185, 17
        %v1214 = vpop.permute.xlu0 %1213
        %1215 = vrot.lane.b32.xlu0 %v1186, 17
        %v1216 = vpop.permute.xlu0 %1215
        %1217 = vrot.lane.b32.xlu0 %v1187, 17
        %v1218 = vpop.permute.xlu0 %1217
        %1219 = vrot.lane.b32.xlu0 %v1188, 17
        %v1220 = vpop.permute.xlu0 %1219
        %1221 = vrot.lane.b32.xlu0 %v1189, 17
        %v1222 = vpop.permute.xlu0 %1221
        %1223 = vrot.lane.b32.xlu0 %v1190, 17
        %v1224 = vpop.permute.xlu0 %1223
        %1225 = vrot.lane.b32.xlu0 %v1191, 17
        %v1226 = vpop.permute.xlu0 %1225
        %1227 = vrot.lane.b32.xlu0 %v1192, 17
        %v1228 = vpop.permute.xlu0 %1227
        %v1229 = vsel %vm504, %v1206, %v1208
        %v1230 = vsel %vm504, %v1208, %v1210
        %v1231 = vsel %vm504, %v1212, %v1214
        %v1232 = vsel %vm504, %v1214, %v1216
        %v1233 = vsel %vm504, %v1218, %v1220
        %v1234 = vsel %vm504, %v1220, %v1222
        %v1235 = vsel %vm504, %v1224, %v1226
        %v1236 = vsel %vm504, %v1226, %v1228
        %1245 = vst [vmem:[#allocation3 + $0x10] sm:$0xff] %v1229
        %1246 = vst [vmem:[#allocation3 + $0x18] sm:$0xff] %v1230
        %1247 = vst [vmem:[#allocation3 + $0x30] sm:$0xff] %v1231
        %1248 = vst [vmem:[#allocation3 + $0x38] sm:$0xff] %v1232
        %1249 = vst [vmem:[#allocation3 + $0x50] sm:$0xff] %v1233
        %1250 = vst [vmem:[#allocation3 + $0x58] sm:$0xff] %v1234
        %1251 = vst [vmem:[#allocation3 + $0x70] sm:$0xff] %v1235
        %1252 = vst [vmem:[#allocation3 + $0x78] sm:$0xff] %v1236
        %v1253 = vld [vmem:[#allocation2 + $0x20] sm:$0xff]
        %v1254 = vld [vmem:[#allocation2 + $0x28] sm:$0xff]
        %v1255 = vld [vmem:[#allocation2 + $0x30] sm:$0xff]
        %v1256 = vld [vmem:[#allocation2 + $0x60] sm:$0xff]
        %v1257 = vld [vmem:[#allocation2 + $0x68] sm:$0xff]
        %v1258 = vld [vmem:[#allocation2 + $0x70] sm:$0xff]
        %v1259 = vld [vmem:[#allocation2 + $0xa0] sm:$0xff]
        %v1260 = vld [vmem:[#allocation2 + $0xa8] sm:$0xff]
        %v1261 = vld [vmem:[#allocation2 + $0xb0] sm:$0xff]
        %v1262 = vld [vmem:[#allocation2 + $0xe0] sm:$0xff]
        %v1263 = vld [vmem:[#allocation2 + $0xe8] sm:$0xff]
        %v1264 = vld [vmem:[#allocation2 + $0xf0] sm:$0xff]
        %1277 = vrot.lane.b32.xlu0 %v1253, 16
        %v1278 = vpop.permute.xlu0 %1277
        %1279 = vrot.lane.b32.xlu0 %v1254, 16
        %v1280 = vpop.permute.xlu0 %1279
        %1281 = vrot.lane.b32.xlu0 %v1255, 16
        %v1282 = vpop.permute.xlu0 %1281
        %1283 = vrot.lane.b32.xlu0 %v1256, 16
        %v1284 = vpop.permute.xlu0 %1283
        %1285 = vrot.lane.b32.xlu0 %v1257, 16
        %v1286 = vpop.permute.xlu0 %1285
        %1287 = vrot.lane.b32.xlu0 %v1258, 16
        %v1288 = vpop.permute.xlu0 %1287
        %1289 = vrot.lane.b32.xlu0 %v1259, 16
        %v1290 = vpop.permute.xlu0 %1289
        %1291 = vrot.lane.b32.xlu0 %v1260, 16
        %v1292 = vpop.permute.xlu0 %1291
        %1293 = vrot.lane.b32.xlu0 %v1261, 16
        %v1294 = vpop.permute.xlu0 %1293
        %1295 = vrot.lane.b32.xlu0 %v1262, 16
        %v1296 = vpop.permute.xlu0 %1295
        %1297 = vrot.lane.b32.xlu0 %v1263, 16
        %v1298 = vpop.permute.xlu0 %1297
        %1299 = vrot.lane.b32.xlu0 %v1264, 16
        %v1300 = vpop.permute.xlu0 %1299
        %v1301 = vsel %vm577, %v1278, %v1280
        %v1302 = vsel %vm577, %v1280, %v1282
        %v1303 = vsel %vm577, %v1284, %v1286
        %v1304 = vsel %vm577, %v1286, %v1288
        %v1305 = vsel %vm577, %v1290, %v1292
        %v1306 = vsel %vm577, %v1292, %v1294
        %v1307 = vsel %vm577, %v1296, %v1298
        %v1308 = vsel %vm577, %v1298, %v1300
        %1317 = vst [vmem:[#allocation3 + $0x90] sm:$0xff] %v1301
        %1318 = vst [vmem:[#allocation3 + $0x98] sm:$0xff] %v1302
        %1319 = vst [vmem:[#allocation3 + $0xb0] sm:$0xff] %v1303
        %1320 = vst [vmem:[#allocation3 + $0xb8] sm:$0xff] %v1304
        %1321 = vst [vmem:[#allocation3 + $0xd0] sm:$0xff] %v1305
        %1322 = vst [vmem:[#allocation3 + $0xd8] sm:$0xff] %v1306
        %1323 = vst [vmem:[#allocation3 + $0xf0] sm:$0xff] %v1307
        %1324 = vst [vmem:[#allocation3 + $0xf8] sm:$0xff] %v1308
        %v1325 = vld [vmem:[#allocation2 + $0x20] sm:$0xff]
        %v1326 = vld [vmem:[#allocation2 + $0x28] sm:$0xff]
        %v1327 = vld [vmem:[#allocation2 + $0x30] sm:$0xff]
        %v1328 = vld [vmem:[#allocation2 + $0x60] sm:$0xff]
        %v1329 = vld [vmem:[#allocation2 + $0x68] sm:$0xff]
        %v1330 = vld [vmem:[#allocation2 + $0x70] sm:$0xff]
        %v1331 = vld [vmem:[#allocation2 + $0xa0] sm:$0xff]
        %v1332 = vld [vmem:[#allocation2 + $0xa8] sm:$0xff]
        %v1333 = vld [vmem:[#allocation2 + $0xb0] sm:$0xff]
        %v1334 = vld [vmem:[#allocation2 + $0xe0] sm:$0xff]
        %v1335 = vld [vmem:[#allocation2 + $0xe8] sm:$0xff]
        %v1336 = vld [vmem:[#allocation2 + $0xf0] sm:$0xff]
        %v1337 = vsel %vm634, %v1325, 0
        %v1338 = vsel %vm635, %v1326, 0
        %v1339 = vsel %vm636, %v1327, 0
        %v1340 = vsel %vm634, %v1328, 0
        %v1341 = vsel %vm635, %v1329, 0
        %v1342 = vsel %vm636, %v1330, 0
        %v1343 = vsel %vm634, %v1331, 0
        %v1344 = vsel %vm635, %v1332, 0
        %v1345 = vsel %vm636, %v1333, 0
        %v1346 = vsel %vm634, %v1334, 0
        %v1347 = vsel %vm635, %v1335, 0
        %v1348 = vsel %vm636, %v1336, 0
        %1361 = vrot.lane.b32.xlu0 %v1337, 15
        %v1362 = vpop.permute.xlu0 %1361
        %1363 = vrot.lane.b32.xlu0 %v1338, 15
        %v1364 = vpop.permute.xlu0 %1363
        %1365 = vrot.lane.b32.xlu0 %v1339, 15
        %v1366 = vpop.permute.xlu0 %1365
        %1367 = vrot.lane.b32.xlu0 %v1340, 15
        %v1368 = vpop.permute.xlu0 %1367
        %1369 = vrot.lane.b32.xlu0 %v1341, 15
        %v1370 = vpop.permute.xlu0 %1369
        %1371 = vrot.lane.b32.xlu0 %v1342, 15
        %v1372 = vpop.permute.xlu0 %1371
        %1373 = vrot.lane.b32.xlu0 %v1343, 15
        %v1374 = vpop.permute.xlu0 %1373
        %1375 = vrot.lane.b32.xlu0 %v1344, 15
        %v1376 = vpop.permute.xlu0 %1375
        %1377 = vrot.lane.b32.xlu0 %v1345, 15
        %v1378 = vpop.permute.xlu0 %1377
        %1379 = vrot.lane.b32.xlu0 %v1346, 15
        %v1380 = vpop.permute.xlu0 %1379
        %1381 = vrot.lane.b32.xlu0 %v1347, 15
        %v1382 = vpop.permute.xlu0 %1381
        %1383 = vrot.lane.b32.xlu0 %v1348, 15
        %v1384 = vpop.permute.xlu0 %1383
        %v1385 = vsel %vm685, %v1362, %v1364
        %v1386 = vsel %vm685, %v1364, %v1366
        %v1387 = vsel %vm685, %v1368, %v1370
        %v1388 = vsel %vm685, %v1370, %v1372
        %v1389 = vsel %vm685, %v1374, %v1376
        %v1390 = vsel %vm685, %v1376, %v1378
        %v1391 = vsel %vm685, %v1380, %v1382
        %v1392 = vsel %vm685, %v1382, %v1384
        %1401 = vst [vmem:[#allocation3 + $0x110] sm:$0xff] %v1385
        %1402 = vst [vmem:[#allocation3 + $0x118] sm:$0xff] %v1386
        %1403 = vst [vmem:[#allocation3 + $0x130] sm:$0xff] %v1387
        %1404 = vst [vmem:[#allocation3 + $0x138] sm:$0xff] %v1388
        %1405 = vst [vmem:[#allocation3 + $0x150] sm:$0xff] %v1389
        %1406 = vst [vmem:[#allocation3 + $0x158] sm:$0xff] %v1390
        %1407 = vst [vmem:[#allocation3 + $0x170] sm:$0xff] %v1391
        %1408 = vst [vmem:[#allocation3 + $0x178] sm:$0xff] %v1392
        %v1409 = vld [vmem:[#allocation2 + $0x20] sm:$0xff]
        %v1410 = vld [vmem:[#allocation2 + $0x28] sm:$0xff]
        %v1411 = vld [vmem:[#allocation2 + $0x30] sm:$0xff]
        %v1412 = vld [vmem:[#allocation2 + $0x60] sm:$0xff]
        %v1413 = vld [vmem:[#allocation2 + $0x68] sm:$0xff]
        %v1414 = vld [vmem:[#allocation2 + $0x70] sm:$0xff]
        %v1415 = vld [vmem:[#allocation2 + $0xa0] sm:$0xff]
        %v1416 = vld [vmem:[#allocation2 + $0xa8] sm:$0xff]
        %v1417 = vld [vmem:[#allocation2 + $0xb0] sm:$0xff]
        %v1418 = vld [vmem:[#allocation2 + $0xe0] sm:$0xff]
        %v1419 = vld [vmem:[#allocation2 + $0xe8] sm:$0xff]
        %v1420 = vld [vmem:[#allocation2 + $0xf0] sm:$0xff]
        %v1421 = vsel %vm728, %v1409, 0
        %v1422 = vsel %vm729, %v1410, 0
        %v1423 = vsel %vm730, %v1411, 0
        %v1424 = vsel %vm728, %v1412, 0
        %v1425 = vsel %vm729, %v1413, 0
        %v1426 = vsel %vm730, %v1414, 0
        %v1427 = vsel %vm728, %v1415, 0
        %v1428 = vsel %vm729, %v1416, 0
        %v1429 = vsel %vm730, %v1417, 0
        %v1430 = vsel %vm728, %v1418, 0
        %v1431 = vsel %vm729, %v1419, 0
        %v1432 = vsel %vm730, %v1420, 0
        %1445 = vrot.lane.b32.xlu0 %v1421, 1
        %v1446 = vpop.permute.xlu0 %1445
        %1447 = vrot.lane.b32.xlu0 %v1422, 1
        %v1448 = vpop.permute.xlu0 %1447
        %1449 = vrot.lane.b32.xlu0 %v1423, 1
        %v1450 = vpop.permute.xlu0 %1449
        %1451 = vrot.lane.b32.xlu0 %v1424, 1
        %v1452 = vpop.permute.xlu0 %1451
        %1453 = vrot.lane.b32.xlu0 %v1425, 1
        %v1454 = vpop.permute.xlu0 %1453
        %1455 = vrot.lane.b32.xlu0 %v1426, 1
        %v1456 = vpop.permute.xlu0 %1455
        %1457 = vrot.lane.b32.xlu0 %v1427, 1
        %v1458 = vpop.permute.xlu0 %1457
        %1459 = vrot.lane.b32.xlu0 %v1428, 1
        %v1460 = vpop.permute.xlu0 %1459
        %1461 = vrot.lane.b32.xlu0 %v1429, 1
        %v1462 = vpop.permute.xlu0 %1461
        %1463 = vrot.lane.b32.xlu0 %v1430, 1
        %v1464 = vpop.permute.xlu0 %1463
        %1465 = vrot.lane.b32.xlu0 %v1431, 1
        %v1466 = vpop.permute.xlu0 %1465
        %1467 = vrot.lane.b32.xlu0 %v1432, 1
        %v1468 = vpop.permute.xlu0 %1467
        %v1469 = vsel %vm779, %v1446, %v1448
        %v1470 = vsel %vm779, %v1448, %v1450
        %v1471 = vsel %vm779, %v1452, %v1454
        %v1472 = vsel %vm779, %v1454, %v1456
        %v1473 = vsel %vm779, %v1458, %v1460
        %v1474 = vsel %vm779, %v1460, %v1462
        %v1475 = vsel %vm779, %v1464, %v1466
        %v1476 = vsel %vm779, %v1466, %v1468
        %1485 = vst [vmem:[#allocation3 + $0x190] sm:$0xff] %v1469
        %1486 = vst [vmem:[#allocation3 + $0x198] sm:$0xff] %v1470
        %1487 = vst [vmem:[#allocation3 + $0x1b0] sm:$0xff] %v1471
        %1488 = vst [vmem:[#allocation3 + $0x1b8] sm:$0xff] %v1472
        %1489 = vst [vmem:[#allocation3 + $0x1d0] sm:$0xff] %v1473
        %1490 = vst [vmem:[#allocation3 + $0x1d8] sm:$0xff] %v1474
        %1491 = vst [vmem:[#allocation3 + $0x1f0] sm:$0xff] %v1475
        %1492 = vst [vmem:[#allocation3 + $0x1f8] sm:$0xff] %v1476
        %v1493 = vld [vmem:[#allocation2 + $0x28] sm:$0xff]
        %v1494 = vld [vmem:[#allocation2 + $0x30] sm:$0xff]
        %v1495 = vld [vmem:[#allocation2 + $0x68] sm:$0xff]
        %v1496 = vld [vmem:[#allocation2 + $0x70] sm:$0xff]
        %v1497 = vld [vmem:[#allocation2 + $0xa8] sm:$0xff]
        %v1498 = vld [vmem:[#allocation2 + $0xb0] sm:$0xff]
        %v1499 = vld [vmem:[#allocation2 + $0xe8] sm:$0xff]
        %v1500 = vld [vmem:[#allocation2 + $0xf0] sm:$0xff]
        %1501 = vst [vmem:[#allocation3 + $0x210] sm:$0xff] %v1493
        %1502 = vst [vmem:[#allocation3 + $0x218] sm:$0xff] %v1494
        %1503 = vst [vmem:[#allocation3 + $0x230] sm:$0xff] %v1495
        %1504 = vst [vmem:[#allocation3 + $0x238] sm:$0xff] %v1496
        %1505 = vst [vmem:[#allocation3 + $0x250] sm:$0xff] %v1497
        %1506 = vst [vmem:[#allocation3 + $0x258] sm:$0xff] %v1498
        %1507 = vst [vmem:[#allocation3 + $0x270] sm:$0xff] %v1499
        %1508 = vst [vmem:[#allocation3 + $0x278] sm:$0xff] %v1500
        %v1509 = vld [vmem:[#allocation2 + $0x28] sm:$0xff]
        %v1510 = vld [vmem:[#allocation2 + $0x30] sm:$0xff]
        %v1511 = vld [vmem:[#allocation2 + $0x38] sm:$0xff]
        %v1512 = vld [vmem:[#allocation2 + $0x68] sm:$0xff]
        %v1513 = vld [vmem:[#allocation2 + $0x70] sm:$0xff]
        %v1514 = vld [vmem:[#allocation2 + $0x78] sm:$0xff]
        %v1515 = vld [vmem:[#allocation2 + $0xa8] sm:$0xff]
        %v1516 = vld [vmem:[#allocation2 + $0xb0] sm:$0xff]
        %v1517 = vld [vmem:[#allocation2 + $0xb8] sm:$0xff]
        %v1518 = vld [vmem:[#allocation2 + $0xe8] sm:$0xff]
        %v1519 = vld [vmem:[#allocation2 + $0xf0] sm:$0xff]
        %v1520 = vld [vmem:[#allocation2 + $0xf8] sm:$0xff]
        %v1521 = vsel %vm837, %v1509, 0
        %v1522 = vsel %vm838, %v1510, 0
        %v1523 = vsel %vm839, %v1511, 0
        %v1524 = vsel %vm837, %v1512, 0
        %v1525 = vsel %vm838, %v1513, 0
        %v1526 = vsel %vm839, %v1514, 0
        %v1527 = vsel %vm837, %v1515, 0
        %v1528 = vsel %vm838, %v1516, 0
        %v1529 = vsel %vm839, %v1517, 0
        %v1530 = vsel %vm837, %v1518, 0
        %v1531 = vsel %vm838, %v1519, 0
        %v1532 = vsel %vm839, %v1520, 0
        %1545 = vrot.lane.b32.xlu0 %v1521, 127
        %v1546 = vpop.permute.xlu0 %1545
        %1547 = vrot.lane.b32.xlu0 %v1522, 127
        %v1548 = vpop.permute.xlu0 %1547
        %1549 = vrot.lane.b32.xlu0 %v1523, 127
        %v1550 = vpop.permute.xlu0 %1549
        %1551 = vrot.lane.b32.xlu0 %v1524, 127
        %v1552 = vpop.permute.xlu0 %1551
        %1553 = vrot.lane.b32.xlu0 %v1525, 127
        %v1554 = vpop.permute.xlu0 %1553
        %1555 = vrot.lane.b32.xlu0 %v1526, 127
        %v1556 = vpop.permute.xlu0 %1555
        %1557 = vrot.lane.b32.xlu0 %v1527, 127
        %v1558 = vpop.permute.xlu0 %1557
        %1559 = vrot.lane.b32.xlu0 %v1528, 127
        %v1560 = vpop.permute.xlu0 %1559
        %1561 = vrot.lane.b32.xlu0 %v1529, 127
        %v1562 = vpop.permute.xlu0 %1561
        %1563 = vrot.lane.b32.xlu0 %v1530, 127
        %v1564 = vpop.permute.xlu0 %1563
        %1565 = vrot.lane.b32.xlu0 %v1531, 127
        %v1566 = vpop.permute.xlu0 %1565
        %1567 = vrot.lane.b32.xlu0 %v1532, 127
        %v1568 = vpop.permute.xlu0 %1567
        %v1569 = vsel %vm726, %v1546, %v1548
        %v1570 = vsel %vm726, %v1548, %v1550
        %v1571 = vsel %vm726, %v1552, %v1554
        %v1572 = vsel %vm726, %v1554, %v1556
        %v1573 = vsel %vm726, %v1558, %v1560
        %v1574 = vsel %vm726, %v1560, %v1562
        %v1575 = vsel %vm726, %v1564, %v1566
        %v1576 = vsel %vm726, %v1566, %v1568
        %1585 = vst [vmem:[#allocation3 + $0x290] sm:$0xff] %v1569
        %1586 = vst [vmem:[#allocation3 + $0x298] sm:$0xff] %v1570
        %1587 = vst [vmem:[#allocation3 + $0x2b0] sm:$0xff] %v1571
        %1588 = vst [vmem:[#allocation3 + $0x2b8] sm:$0xff] %v1572
        %1589 = vst [vmem:[#allocation3 + $0x2d0] sm:$0xff] %v1573
        %1590 = vst [vmem:[#allocation3 + $0x2d8] sm:$0xff] %v1574
        %1591 = vst [vmem:[#allocation3 + $0x2f0] sm:$0xff] %v1575
        %1592 = vst [vmem:[#allocation3 + $0x2f8] sm:$0xff] %v1576
        %v1593 = vld [vmem:[#allocation2 + $0x28] sm:$0xff]
        %v1594 = vld [vmem:[#allocation2 + $0x30] sm:$0xff]
        %v1595 = vld [vmem:[#allocation2 + $0x38] sm:$0xff]
        %v1596 = vld [vmem:[#allocation2 + $0x68] sm:$0xff]
        %v1597 = vld [vmem:[#allocation2 + $0x70] sm:$0xff]
        %v1598 = vld [vmem:[#allocation2 + $0x78] sm:$0xff]
        %v1599 = vld [vmem:[#allocation2 + $0xa8] sm:$0xff]
        %v1600 = vld [vmem:[#allocation2 + $0xb0] sm:$0xff]
        %v1601 = vld [vmem:[#allocation2 + $0xb8] sm:$0xff]
        %v1602 = vld [vmem:[#allocation2 + $0xe8] sm:$0xff]
        %v1603 = vld [vmem:[#allocation2 + $0xf0] sm:$0xff]
        %v1604 = vld [vmem:[#allocation2 + $0xf8] sm:$0xff]
        %v1605 = vsel %vm929, %v1593, 0
        %v1606 = vsel %vm930, %v1594, 0
        %v1607 = vsel %vm931, %v1595, 0
        %v1608 = vsel %vm929, %v1596, 0
        %v1609 = vsel %vm930, %v1597, 0
        %v1610 = vsel %vm931, %v1598, 0
        %v1611 = vsel %vm929, %v1599, 0
        %v1612 = vsel %vm930, %v1600, 0
        %v1613 = vsel %vm931, %v1601, 0
        %v1614 = vsel %vm929, %v1602, 0
        %v1615 = vsel %vm930, %v1603, 0
        %v1616 = vsel %vm931, %v1604, 0
        %1629 = vrot.lane.b32.xlu0 %v1605, 113
        %v1630 = vpop.permute.xlu0 %1629
        %1631 = vrot.lane.b32.xlu0 %v1606, 113
        %v1632 = vpop.permute.xlu0 %1631
        %1633 = vrot.lane.b32.xlu0 %v1607, 113
        %v1634 = vpop.permute.xlu0 %1633
        %1635 = vrot.lane.b32.xlu0 %v1608, 113
        %v1636 = vpop.permute.xlu0 %1635
        %1637 = vrot.lane.b32.xlu0 %v1609, 113
        %v1638 = vpop.permute.xlu0 %1637
        %1639 = vrot.lane.b32.xlu0 %v1610, 113
        %v1640 = vpop.permute.xlu0 %1639
        %1641 = vrot.lane.b32.xlu0 %v1611, 113
        %v1642 = vpop.permute.xlu0 %1641
        %1643 = vrot.lane.b32.xlu0 %v1612, 113
        %v1644 = vpop.permute.xlu0 %1643
        %1645 = vrot.lane.b32.xlu0 %v1613, 113
        %v1646 = vpop.permute.xlu0 %1645
        %1647 = vrot.lane.b32.xlu0 %v1614, 113
        %v1648 = vpop.permute.xlu0 %1647
        %1649 = vrot.lane.b32.xlu0 %v1615, 113
        %v1650 = vpop.permute.xlu0 %1649
        %1651 = vrot.lane.b32.xlu0 %v1616, 113
        %v1652 = vpop.permute.xlu0 %1651
        %v1653 = vsel %vm632, %v1630, %v1632
        %v1654 = vsel %vm632, %v1632, %v1634
        %v1655 = vsel %vm632, %v1636, %v1638
        %v1656 = vsel %vm632, %v1638, %v1640
        %v1657 = vsel %vm632, %v1642, %v1644
        %v1658 = vsel %vm632, %v1644, %v1646
        %v1659 = vsel %vm632, %v1648, %v1650
        %v1660 = vsel %vm632, %v1650, %v1652
        %1669 = vst [vmem:[#allocation3 + $0x310] sm:$0xff] %v1653
        %1670 = vst [vmem:[#allocation3 + $0x318] sm:$0xff] %v1654
        %1671 = vst [vmem:[#allocation3 + $0x330] sm:$0xff] %v1655
        %1672 = vst [vmem:[#allocation3 + $0x338] sm:$0xff] %v1656
        %1673 = vst [vmem:[#allocation3 + $0x350] sm:$0xff] %v1657
        %1674 = vst [vmem:[#allocation3 + $0x358] sm:$0xff] %v1658
        %1675 = vst [vmem:[#allocation3 + $0x370] sm:$0xff] %v1659
        %1676 = vst [vmem:[#allocation3 + $0x378] sm:$0xff] %v1660
        %v1677 = vld [vmem:[#allocation2 + $0x28] sm:$0xff]
        %v1678 = vld [vmem:[#allocation2 + $0x30] sm:$0xff]
        %v1679 = vld [vmem:[#allocation2 + $0x38] sm:$0xff]
        %v1680 = vld [vmem:[#allocation2 + $0x68] sm:$0xff]
        %v1681 = vld [vmem:[#allocation2 + $0x70] sm:$0xff]
        %v1682 = vld [vmem:[#allocation2 + $0x78] sm:$0xff]
        %v1683 = vld [vmem:[#allocation2 + $0xa8] sm:$0xff]
        %v1684 = vld [vmem:[#allocation2 + $0xb0] sm:$0xff]
        %v1685 = vld [vmem:[#allocation2 + $0xb8] sm:$0xff]
        %v1686 = vld [vmem:[#allocation2 + $0xe8] sm:$0xff]
        %v1687 = vld [vmem:[#allocation2 + $0xf0] sm:$0xff]
        %v1688 = vld [vmem:[#allocation2 + $0xf8] sm:$0xff]
        %1701 = vrot.lane.b32.xlu0 %v1677, 112
        %v1702 = vpop.permute.xlu0 %1701
        %1703 = vrot.lane.b32.xlu0 %v1678, 112
        %v1704 = vpop.permute.xlu0 %1703
        %1705 = vrot.lane.b32.xlu0 %v1679, 112
        %v1706 = vpop.permute.xlu0 %1705
        %1707 = vrot.lane.b32.xlu0 %v1680, 112
        %v1708 = vpop.permute.xlu0 %1707
        %1709 = vrot.lane.b32.xlu0 %v1681, 112
        %v1710 = vpop.permute.xlu0 %1709
        %1711 = vrot.lane.b32.xlu0 %v1682, 112
        %v1712 = vpop.permute.xlu0 %1711
        %1713 = vrot.lane.b32.xlu0 %v1683, 112
        %v1714 = vpop.permute.xlu0 %1713
        %1715 = vrot.lane.b32.xlu0 %v1684, 112
        %v1716 = vpop.permute.xlu0 %1715
        %1717 = vrot.lane.b32.xlu0 %v1685, 112
        %v1718 = vpop.permute.xlu0 %1717
        %1719 = vrot.lane.b32.xlu0 %v1686, 112
        %v1720 = vpop.permute.xlu0 %1719
        %1721 = vrot.lane.b32.xlu0 %v1687, 112
        %v1722 = vpop.permute.xlu0 %1721
        %1723 = vrot.lane.b32.xlu0 %v1688, 112
        %v1724 = vpop.permute.xlu0 %1723
        %v1725 = vsel %vm1052, %v1702, %v1704
        %v1726 = vsel %vm1052, %v1704, %v1706
        %v1727 = vsel %vm1052, %v1708, %v1710
        %v1728 = vsel %vm1052, %v1710, %v1712
        %v1729 = vsel %vm1052, %v1714, %v1716
        %v1730 = vsel %vm1052, %v1716, %v1718
        %v1731 = vsel %vm1052, %v1720, %v1722
        %v1732 = vsel %vm1052, %v1722, %v1724
        %1741 = vst [vmem:[#allocation3 + $0x390] sm:$0xff] %v1725
        %1742 = vst [vmem:[#allocation3 + $0x398] sm:$0xff] %v1726
        %1743 = vst [vmem:[#allocation3 + $0x3b0] sm:$0xff] %v1727
        %1744 = vst [vmem:[#allocation3 + $0x3b8] sm:$0xff] %v1728
        %1745 = vst [vmem:[#allocation3 + $0x3d0] sm:$0xff] %v1729
        %1746 = vst [vmem:[#allocation3 + $0x3d8] sm:$0xff] %v1730
        %1747 = vst [vmem:[#allocation3 + $0x3f0] sm:$0xff] %v1731
        %1748 = vst [vmem:[#allocation3 + $0x3f8] sm:$0xff] %v1732
        %v1749 = vld [vmem:[#allocation2 + $0x28] sm:$0xff]
        %v1750 = vld [vmem:[#allocation2 + $0x30] sm:$0xff]
        %v1751 = vld [vmem:[#allocation2 + $0x38] sm:$0xff]
        %v1752 = vld [vmem:[#allocation2 + $0x68] sm:$0xff]
        %v1753 = vld [vmem:[#allocation2 + $0x70] sm:$0xff]
        %v1754 = vld [vmem:[#allocation2 + $0x78] sm:$0xff]
        %v1755 = vld [vmem:[#allocation2 + $0xa8] sm:$0xff]
        %v1756 = vld [vmem:[#allocation2 + $0xb0] sm:$0xff]
        %v1757 = vld [vmem:[#allocation2 + $0xb8] sm:$0xff]
        %v1758 = vld [vmem:[#allocation2 + $0xe8] sm:$0xff]
        %v1759 = vld [vmem:[#allocation2 + $0xf0] sm:$0xff]
        %v1760 = vld [vmem:[#allocation2 + $0xf8] sm:$0xff]
        %v1761 = vsel %vm1094, %v1749, 0
        %v1762 = vsel %vm1095, %v1750, 0
        %v1763 = vsel %vm1096, %v1751, 0
        %v1764 = vsel %vm1094, %v1752, 0
        %v1765 = vsel %vm1095, %v1753, 0
        %v1766 = vsel %vm1096, %v1754, 0
        %v1767 = vsel %vm1094, %v1755, 0
        %v1768 = vsel %vm1095, %v1756, 0
        %v1769 = vsel %vm1096, %v1757, 0
        %v1770 = vsel %vm1094, %v1758, 0
        %v1771 = vsel %vm1095, %v1759, 0
        %v1772 = vsel %vm1096, %v1760, 0
        %1785 = vrot.lane.b32.xlu0 %v1761, 111
        %v1786 = vpop.permute.xlu0 %1785
        %1787 = vrot.lane.b32.xlu0 %v1762, 111
        %v1788 = vpop.permute.xlu0 %1787
        %1789 = vrot.lane.b32.xlu0 %v1763, 111
        %v1790 = vpop.permute.xlu0 %1789
        %1791 = vrot.lane.b32.xlu0 %v1764, 111
        %v1792 = vpop.permute.xlu0 %1791
        %1793 = vrot.lane.b32.xlu0 %v1765, 111
        %v1794 = vpop.permute.xlu0 %1793
        %1795 = vrot.lane.b32.xlu0 %v1766, 111
        %v1796 = vpop.permute.xlu0 %1795
        %1797 = vrot.lane.b32.xlu0 %v1767, 111
        %v1798 = vpop.permute.xlu0 %1797
        %1799 = vrot.lane.b32.xlu0 %v1768, 111
        %v1800 = vpop.permute.xlu0 %1799
        %1801 = vrot.lane.b32.xlu0 %v1769, 111
        %v1802 = vpop.permute.xlu0 %1801
        %1803 = vrot.lane.b32.xlu0 %v1770, 111
        %v1804 = vpop.permute.xlu0 %1803
        %1805 = vrot.lane.b32.xlu0 %v1771, 111
        %v1806 = vpop.permute.xlu0 %1805
        %1807 = vrot.lane.b32.xlu0 %v1772, 111
        %v1808 = vpop.permute.xlu0 %1807
        %v1809 = vsel %vm451, %v1786, %v1788
        %v1810 = vsel %vm451, %v1788, %v1790
        %v1811 = vsel %vm451, %v1792, %v1794
        %v1812 = vsel %vm451, %v1794, %v1796
        %v1813 = vsel %vm451, %v1798, %v1800
        %v1814 = vsel %vm451, %v1800, %v1802
        %v1815 = vsel %vm451, %v1804, %v1806
        %v1816 = vsel %vm451, %v1806, %v1808
        %1825 = vst [vmem:[#allocation3 + $0x410] sm:$0xff] %v1809
        %1826 = vst [vmem:[#allocation3 + $0x418] sm:$0xff] %v1810
        %1827 = vst [vmem:[#allocation3 + $0x430] sm:$0xff] %v1811
        %1828 = vst [vmem:[#allocation3 + $0x438] sm:$0xff] %v1812
        %1829 = vst [vmem:[#allocation3 + $0x450] sm:$0xff] %v1813
        %1830 = vst [vmem:[#allocation3 + $0x458] sm:$0xff] %v1814
        %1831 = vst [vmem:[#allocation3 + $0x470] sm:$0xff] %v1815
        %1832 = vst [vmem:[#allocation3 + $0x478] sm:$0xff] %v1816
        %v1833 = vld [vmem:[#allocation9] sm:$0xff]
        %v1834 = vld [vmem:[#allocation9 + $0x8] sm:$0xff]
        %v1835 = vld [vmem:[#allocation9 + $0x10] sm:$0xf]
        %v1836 = vld [vmem:[#allocation9 + $0x14] sm:$0xff]
        %v1837 = vld [vmem:[#allocation9 + $0x1c] sm:$0xff]
        %v1838 = vld [vmem:[#allocation9 + $0x24] sm:$0xf]
        %v1839 = vld [vmem:[#allocation9 + $0x28] sm:$0xff]
        %v1840 = vld [vmem:[#allocation9 + $0x30] sm:$0xff]
        %v1841 = vld [vmem:[#allocation9 + $0x38] sm:$0xf]
        %v1842 = vld [vmem:[#allocation9 + $0x3c] sm:$0xff]
        %v1843 = vld [vmem:[#allocation9 + $0x44] sm:$0xff]
        %v1844 = vld [vmem:[#allocation9 + $0x4c] sm:$0xf]
        %v1845 = vld [vmem:[#allocation9 + $0x50] sm:$0xff]
        %v1846 = vld [vmem:[#allocation9 + $0x58] sm:$0xff]
        %v1847 = vld [vmem:[#allocation9 + $0x60] sm:$0xf]
        %v1848 = vld [vmem:[#allocation9 + $0x64] sm:$0xff]
        %v1849 = vld [vmem:[#allocation9 + $0x6c] sm:$0xff]
        %v1850 = vld [vmem:[#allocation9 + $0x74] sm:$0xf]
        %v1851 = vld [vmem:[#allocation9 + $0x78] sm:$0xff]
        %v1852 = vld [vmem:[#allocation9 + $0x80] sm:$0xff]
        %v1853 = vld [vmem:[#allocation9 + $0x88] sm:$0xf]
        %v1854 = vld [vmem:[#allocation9 + $0x8c] sm:$0xff]
        %v1855 = vld [vmem:[#allocation9 + $0x94] sm:$0xff]
        %v1856 = vld [vmem:[#allocation9 + $0x9c] sm:$0xf]
        %v1857 = vld [vmem:[#allocation3] sm:$0xff]
        %v1858 = vld [vmem:[#allocation3 + $0x8] sm:$0xff]
        %v1859 = vld [vmem:[#allocation3 + $0x10] sm:$0xff]
        %v1860 = vld [vmem:[#allocation3 + $0x18] sm:$0xff]
        %v1861 = vld [vmem:[#allocation3 + $0x20] sm:$0xff]
        %v1862 = vld [vmem:[#allocation3 + $0x28] sm:$0xff]
        %v1863 = vld [vmem:[#allocation3 + $0x30] sm:$0xff]
        %v1864 = vld [vmem:[#allocation3 + $0x38] sm:$0xff]
        %v1865 = vld [vmem:[#allocation3 + $0x40] sm:$0xff]
        %v1866 = vld [vmem:[#allocation3 + $0x48] sm:$0xff]
        %v1867 = vld [vmem:[#allocation3 + $0x50] sm:$0xff]
        %v1868 = vld [vmem:[#allocation3 + $0x58] sm:$0xff]
        %v1869 = vld [vmem:[#allocation3 + $0x60] sm:$0xff]
        %v1870 = vld [vmem:[#allocation3 + $0x68] sm:$0xff]
        %v1871 = vld [vmem:[#allocation3 + $0x70] sm:$0xff]
        %v1872 = vld [vmem:[#allocation3 + $0x78] sm:$0xff]
        %v1873 = vld [vmem:[#allocation3 + $0x80] sm:$0xff]
        %v1874 = vld [vmem:[#allocation3 + $0x88] sm:$0xff]
        %v1875 = vld [vmem:[#allocation3 + $0x90] sm:$0xff]
        %v1876 = vld [vmem:[#allocation3 + $0x98] sm:$0xff]
        %v1877 = vld [vmem:[#allocation3 + $0xa0] sm:$0xff]
        %v1878 = vld [vmem:[#allocation3 + $0xa8] sm:$0xff]
        %v1879 = vld [vmem:[#allocation3 + $0xb0] sm:$0xff]
        %v1880 = vld [vmem:[#allocation3 + $0xb8] sm:$0xff]
        %v1881 = vld [vmem:[#allocation3 + $0xc0] sm:$0xff]
        %v1882 = vld [vmem:[#allocation3 + $0xc8] sm:$0xff]
        %v1883 = vld [vmem:[#allocation3 + $0xd0] sm:$0xff]
        %v1884 = vld [vmem:[#allocation3 + $0xd8] sm:$0xff]
        %v1885 = vld [vmem:[#allocation3 + $0xe0] sm:$0xff]
        %v1886 = vld [vmem:[#allocation3 + $0xe8] sm:$0xff]
        %v1887 = vld [vmem:[#allocation3 + $0xf0] sm:$0xff]
        %v1888 = vld [vmem:[#allocation3 + $0xf8] sm:$0xff]
        %v1889 = vld [vmem:[#allocation3 + $0x100] sm:$0xff]
        %v1890 = vld [vmem:[#allocation3 + $0x108] sm:$0xff]
        %v1891 = vld [vmem:[#allocation3 + $0x110] sm:$0xff]
        %v1892 = vld [vmem:[#allocation3 + $0x118] sm:$0xff]
        %v1893 = vld [vmem:[#allocation3 + $0x120] sm:$0xff]
        %v1894 = vld [vmem:[#allocation3 + $0x128] sm:$0xff]
        %v1895 = vld [vmem:[#allocation3 + $0x130] sm:$0xff]
        %v1896 = vld [vmem:[#allocation3 + $0x138] sm:$0xff]
        %v1897 = vld [vmem:[#allocation3 + $0x140] sm:$0xff]
        %v1898 = vld [vmem:[#allocation3 + $0x148] sm:$0xff]
        %v1899 = vld [vmem:[#allocation3 + $0x150] sm:$0xff]
        %v1900 = vld [vmem:[#allocation3 + $0x158] sm:$0xff]
        %v1901 = vld [vmem:[#allocation3 + $0x160] sm:$0xff]
        %v1902 = vld [vmem:[#allocation3 + $0x168] sm:$0xff]
        %v1903 = vld [vmem:[#allocation3 + $0x170] sm:$0xff]
        %v1904 = vld [vmem:[#allocation3 + $0x178] sm:$0xff]
        %v1905 = vld [vmem:[#allocation3 + $0x180] sm:$0xff]
        %v1906 = vld [vmem:[#allocation3 + $0x188] sm:$0xff]
        %v1907 = vld [vmem:[#allocation3 + $0x190] sm:$0xff]
        %v1908 = vld [vmem:[#allocation3 + $0x198] sm:$0xff]
        %v1909 = vld [vmem:[#allocation3 + $0x1a0] sm:$0xff]
        %v1910 = vld [vmem:[#allocation3 + $0x1a8] sm:$0xff]
        %v1911 = vld [vmem:[#allocation3 + $0x1b0] sm:$0xff]
        %v1912 = vld [vmem:[#allocation3 + $0x1b8] sm:$0xff]
        %v1913 = vld [vmem:[#allocation3 + $0x1c0] sm:$0xff]
        %v1914 = vld [vmem:[#allocation3 + $0x1c8] sm:$0xff]
        %v1915 = vld [vmem:[#allocation3 + $0x1d0] sm:$0xff]
        %v1916 = vld [vmem:[#allocation3 + $0x1d8] sm:$0xff]
        %v1917 = vld [vmem:[#allocation3 + $0x1e0] sm:$0xff]
        %v1918 = vld [vmem:[#allocation3 + $0x1e8] sm:$0xff]
        %v1919 = vld [vmem:[#allocation3 + $0x1f0] sm:$0xff]
        %v1920 = vld [vmem:[#allocation3 + $0x1f8] sm:$0xff]
        %v1921 = vld [vmem:[#allocation3 + $0x200] sm:$0xff]
        %v1922 = vld [vmem:[#allocation3 + $0x208] sm:$0xff]
        %v1923 = vld [vmem:[#allocation3 + $0x210] sm:$0xff]
        %v1924 = vld [vmem:[#allocation3 + $0x218] sm:$0xff]
        %v1925 = vld [vmem:[#allocation3 + $0x220] sm:$0xff]
        %v1926 = vld [vmem:[#allocation3 + $0x228] sm:$0xff]
        %v1927 = vld [vmem:[#allocation3 + $0x230] sm:$0xff]
        %v1928 = vld [vmem:[#allocation3 + $0x238] sm:$0xff]
        %v1929 = vld [vmem:[#allocation3 + $0x240] sm:$0xff]
        %v1930 = vld [vmem:[#allocation3 + $0x248] sm:$0xff]
        %v1931 = vld [vmem:[#allocation3 + $0x250] sm:$0xff]
        %v1932 = vld [vmem:[#allocation3 + $0x258] sm:$0xff]
        %v1933 = vld [vmem:[#allocation3 + $0x260] sm:$0xff]
        %v1934 = vld [vmem:[#allocation3 + $0x268] sm:$0xff]
        %v1935 = vld [vmem:[#allocation3 + $0x270] sm:$0xff]
        %v1936 = vld [vmem:[#allocation3 + $0x278] sm:$0xff]
        %v1937 = vld [vmem:[#allocation3 + $0x280] sm:$0xff]
        %v1938 = vld [vmem:[#allocation3 + $0x288] sm:$0xff]
        %v1939 = vld [vmem:[#allocation3 + $0x290] sm:$0xff]
        %v1940 = vld [vmem:[#allocation3 + $0x298] sm:$0xff]
        %v1941 = vld [vmem:[#allocation3 + $0x2a0] sm:$0xff]
        %v1942 = vld [vmem:[#allocation3 + $0x2a8] sm:$0xff]
        %v1943 = vld [vmem:[#allocation3 + $0x2b0] sm:$0xff]
        %v1944 = vld [vmem:[#allocation3 + $0x2b8] sm:$0xff]
        %v1945 = vld [vmem:[#allocation3 + $0x2c0] sm:$0xff]
        %v1946 = vld [vmem:[#allocation3 + $0x2c8] sm:$0xff]
        %v1947 = vld [vmem:[#allocation3 + $0x2d0] sm:$0xff]
        %v1948 = vld [vmem:[#allocation3 + $0x2d8] sm:$0xff]
        %v1949 = vld [vmem:[#allocation3 + $0x2e0] sm:$0xff]
        %v1950 = vld [vmem:[#allocation3 + $0x2e8] sm:$0xff]
        %v1951 = vld [vmem:[#allocation3 + $0x2f0] sm:$0xff]
        %v1952 = vld [vmem:[#allocation3 + $0x2f8] sm:$0xff]
        %v1953 = vld [vmem:[#allocation3 + $0x300] sm:$0xff]
        %v1954 = vld [vmem:[#allocation3 + $0x308] sm:$0xff]
        %v1955 = vld [vmem:[#allocation3 + $0x310] sm:$0xff]
        %v1956 = vld [vmem:[#allocation3 + $0x318] sm:$0xff]
        %v1957 = vld [vmem:[#allocation3 + $0x320] sm:$0xff]
        %v1958 = vld [vmem:[#allocation3 + $0x328] sm:$0xff]
        %v1959 = vld [vmem:[#allocation3 + $0x330] sm:$0xff]
        %v1960 = vld [vmem:[#allocation3 + $0x338] sm:$0xff]
        %v1961 = vld [vmem:[#allocation3 + $0x340] sm:$0xff]
        %v1962 = vld [vmem:[#allocation3 + $0x348] sm:$0xff]
        %v1963 = vld [vmem:[#allocation3 + $0x350] sm:$0xff]
        %v1964 = vld [vmem:[#allocation3 + $0x358] sm:$0xff]
        %v1965 = vld [vmem:[#allocation3 + $0x360] sm:$0xff]
        %v1966 = vld [vmem:[#allocation3 + $0x368] sm:$0xff]
        %v1967 = vld [vmem:[#allocation3 + $0x370] sm:$0xff]
        %v1968 = vld [vmem:[#allocation3 + $0x378] sm:$0xff]
        %v1969 = vld [vmem:[#allocation3 + $0x380] sm:$0xff]
        %v1970 = vld [vmem:[#allocation3 + $0x388] sm:$0xff]
        %v1971 = vld [vmem:[#allocation3 + $0x390] sm:$0xff]
        %v1972 = vld [vmem:[#allocation3 + $0x398] sm:$0xff]
        %v1973 = vld [vmem:[#allocation3 + $0x3a0] sm:$0xff]
        %v1974 = vld [vmem:[#allocation3 + $0x3a8] sm:$0xff]
        %v1975 = vld [vmem:[#allocation3 + $0x3b0] sm:$0xff]
        %v1976 = vld [vmem:[#allocation3 + $0x3b8] sm:$0xff]
        %v1977 = vld [vmem:[#allocation3 + $0x3c0] sm:$0xff]
        %v1978 = vld [vmem:[#allocation3 + $0x3c8] sm:$0xff]
        %v1979 = vld [vmem:[#allocation3 + $0x3d0] sm:$0xff]
        %v1980 = vld [vmem:[#allocation3 + $0x3d8] sm:$0xff]
        %v1981 = vld [vmem:[#allocation3 + $0x3e0] sm:$0xff]
        %v1982 = vld [vmem:[#allocation3 + $0x3e8] sm:$0xff]
        %v1983 = vld [vmem:[#allocation3 + $0x3f0] sm:$0xff]
        %v1984 = vld [vmem:[#allocation3 + $0x3f8] sm:$0xff]
        %v1985 = vld [vmem:[#allocation3 + $0x400] sm:$0xff]
        %v1986 = vld [vmem:[#allocation3 + $0x408] sm:$0xff]
        %v1987 = vld [vmem:[#allocation3 + $0x410] sm:$0xff]
        %v1988 = vld [vmem:[#allocation3 + $0x418] sm:$0xff]
        %v1989 = vld [vmem:[#allocation3 + $0x420] sm:$0xff]
        %v1990 = vld [vmem:[#allocation3 + $0x428] sm:$0xff]
        %v1991 = vld [vmem:[#allocation3 + $0x430] sm:$0xff]
        %v1992 = vld [vmem:[#allocation3 + $0x438] sm:$0xff]
        %v1993 = vld [vmem:[#allocation3 + $0x440] sm:$0xff]
        %v1994 = vld [vmem:[#allocation3 + $0x448] sm:$0xff]
        %v1995 = vld [vmem:[#allocation3 + $0x450] sm:$0xff]
        %v1996 = vld [vmem:[#allocation3 + $0x458] sm:$0xff]
        %v1997 = vld [vmem:[#allocation3 + $0x460] sm:$0xff]
        %v1998 = vld [vmem:[#allocation3 + $0x468] sm:$0xff]
        %v1999 = vld [vmem:[#allocation3 + $0x470] sm:$0xff]
        %v2000 = vld [vmem:[#allocation3 + $0x478] sm:$0xff]
        %v2025 = vunpack.c.l.b16 %v1833
        %v2026 = vunpack.c.h.b16 %v1833
        %v2027 = vunpack.c.l.b16 %v1834
        %v2028 = vunpack.c.h.b16 %v1834
        %v2029 = vunpack.c.l.b16 %v1835
        %v2030 = vunpack.c.l.b16 %v1836
        %v2031 = vunpack.c.h.b16 %v1836
        %v2032 = vunpack.c.l.b16 %v1837
        %v2033 = vunpack.c.h.b16 %v1837
        %v2034 = vunpack.c.l.b16 %v1838
        %v2035 = vunpack.c.l.b16 %v1839
        %v2036 = vunpack.c.h.b16 %v1839
        %v2037 = vunpack.c.l.b16 %v1840
        %v2038 = vunpack.c.h.b16 %v1840
        %v2039 = vunpack.c.l.b16 %v1841
        %v2040 = vunpack.c.l.b16 %v1842
        %v2041 = vunpack.c.h.b16 %v1842
        %v2042 = vunpack.c.l.b16 %v1843
        %v2043 = vunpack.c.h.b16 %v1843
        %v2044 = vunpack.c.l.b16 %v1844
        %v2045 = vunpack.c.l.b16 %v1845
        %v2046 = vunpack.c.h.b16 %v1845
        %v2047 = vunpack.c.l.b16 %v1846
        %v2048 = vunpack.c.h.b16 %v1846
        %v2049 = vunpack.c.l.b16 %v1847
        %v2050 = vunpack.c.l.b16 %v1848
        %v2051 = vunpack.c.h.b16 %v1848
        %v2052 = vunpack.c.l.b16 %v1849
        %v2053 = vunpack.c.h.b16 %v1849
        %v2054 = vunpack.c.l.b16 %v1850
        %v2055 = vunpack.c.l.b16 %v1851
        %v2056 = vunpack.c.h.b16 %v1851
        %v2057 = vunpack.c.l.b16 %v1852
        %v2058 = vunpack.c.h.b16 %v1852
        %v2059 = vunpack.c.l.b16 %v1853
        %v2060 = vunpack.c.l.b16 %v1854
        %v2061 = vunpack.c.h.b16 %v1854
        %v2062 = vunpack.c.l.b16 %v1855
        %v2063 = vunpack.c.h.b16 %v1855
        %v2064 = vunpack.c.l.b16 %v1856
        %v2065 = vpack.c.b16 %v2030, %v2025
        %v2066 = vpack.c.b16 %v2031, %v2026
        %v2067 = vpack.c.b16 %v2032, %v2027
        %v2068 = vpack.c.b16 %v2033, %v2028
        %v2069 = vpack.c.b16 %v2034, %v2029
        %v2070 = vpack.c.b16 %v2040, %v2035
        %v2071 = vpack.c.b16 %v2041, %v2036
        %v2072 = vpack.c.b16 %v2042, %v2037
        %v2073 = vpack.c.b16 %v2043, %v2038
        %v2074 = vpack.c.b16 %v2044, %v2039
        %v2075 = vpack.c.b16 %v2050, %v2045
        %v2076 = vpack.c.b16 %v2051, %v2046
        %v2077 = vpack.c.b16 %v2052, %v2047
        %v2078 = vpack.c.b16 %v2053, %v2048
        %v2079 = vpack.c.b16 %v2054, %v2049
        %v2080 = vpack.c.b16 %v2060, %v2055
        %v2081 = vpack.c.b16 %v2061, %v2056
        %v2082 = vpack.c.b16 %v2062, %v2057
        %v2083 = vpack.c.b16 %v2063, %v2058
        %v2084 = vpack.c.b16 %v2064, %v2059
        %vm2101 = vcmask 523264
        %v2103 = vsel %vm2101, %v2069, 0
        %v2106 = vsel %vm2101, %v2074, 0
        %v2109 = vsel %vm2101, %v2079, 0
        %v2112 = vsel %vm2101, %v2084, 0
        %2114 = vmatprep.subr.bf16.mxu0 %v1858
        %2115 = vmatpush1.bf16.msra.mxu0 %v1857
        %2116 = vmatprep.subr.bf16.mxu0 %v1862
        %2117 = vmatpush1.bf16.msra.mxu0 %v1861
        %2118 = vmatprep.subr.bf16.mxu0 %v1866
        %2119 = vmatpush1.bf16.msra.mxu0 %v1865
        %2120 = vmatprep.subr.bf16.mxu0 %v1870
        %2121 = vmatpush1.bf16.msra.mxu0 %v1869
        %2122 = vmatprep.subr.bf16.mxu0 %v1874
        %2123 = vmatpush1.bf16.msra.mxu0 %v1873
        %2124 = vmatprep.subr.bf16.mxu0 %v1878
        %2125 = vmatpush1.bf16.msra.mxu0 %v1877
        %2126 = vmatprep.subr.bf16.mxu0 %v1882
        %2127 = vmatpush1.bf16.msra.mxu0 %v1881
        %2128 = vmatprep.subr.bf16.mxu0 %v1886
        %2129 = vmatpush1.bf16.msra.mxu0 %v1885
        %2130 = vmatprep.subr.bf16.mxu0 %v1890
        %2131 = vmatpush1.bf16.msra.mxu0 %v1889
        %2132 = vmatprep.subr.bf16.mxu0 %v1894
        %2133 = vmatpush1.bf16.msra.mxu0 %v1893
        %2134 = vmatprep.subr.bf16.mxu0 %v1898
        %2135 = vmatpush1.bf16.msra.mxu0 %v1897
        %2136 = vmatprep.subr.bf16.mxu0 %v1902
        %2137 = vmatpush1.bf16.msra.mxu0 %v1901
        %2138 = vmatprep.subr.bf16.mxu0 %v1906
        %2139 = vmatpush1.bf16.msra.mxu0 %v1905
        %2140 = vmatprep.subr.bf16.mxu0 %v1910
        %2141 = vmatpush1.bf16.msra.mxu0 %v1909
        %2142 = vmatprep.subr.bf16.mxu0 %v1914
        %2143 = vmatpush1.bf16.msra.mxu0 %v1913
        %2144 = vmatprep.subr.bf16.mxu0 %v1918
        %2145 = vmatpush1.bf16.msra.mxu0 %v1917
        %2146 = vmatprep.mubr.bf16.mxu0 %v2066
        %2147 = vmatmul.mubr.bf16.gmra.mrb[0].mxu0 %v2065
        %v2148 = vpop.f32.mrb[0].mxu0
        %v2149 = vadd.f32 0.0, %v2148
        %v2150 = vpop.f32.mrb[0].mxu0
        %v2151 = vadd.f32 0.0, %v2150
        %v2152 = vpop.f32.mrb[0].mxu0
        %v2153 = vadd.f32 0.0, %v2152
        %v2154 = vpop.f32.mrb[0].mxu0
        %v2155 = vadd.f32 0.0, %v2154
        %2156 = vmatprep.mubr.bf16.mxu0 %v2071
        %2157 = vmatmul.mubr.bf16.gmra.mrb[0].mxu0 %v2070
        %v2158 = vpop.f32.mrb[0].mxu0
        %v2159 = vadd.f32 0.0, %v2158
        %v2160 = vpop.f32.mrb[0].mxu0
        %v2161 = vadd.f32 0.0, %v2160
        %v2162 = vpop.f32.mrb[0].mxu0
        %v2163 = vadd.f32 0.0, %v2162
        %v2164 = vpop.f32.mrb[0].mxu0
        %v2165 = vadd.f32 0.0, %v2164
        %2166 = vmatprep.mubr.bf16.mxu0 %v2076
        %2167 = vmatmul.mubr.bf16.gmra.mrb[0].mxu0 %v2075
        %v2168 = vpop.f32.mrb[0].mxu0
        %v2169 = vadd.f32 0.0, %v2168
        %v2170 = vpop.f32.mrb[0].mxu0
        %v2171 = vadd.f32 0.0, %v2170
        %v2172 = vpop.f32.mrb[0].mxu0
        %v2173 = vadd.f32 0.0, %v2172
        %v2174 = vpop.f32.mrb[0].mxu0
        %v2175 = vadd.f32 0.0, %v2174
        %2176 = vmatprep.mubr.bf16.mxu0 %v2081
        %2177 = vmatmul.mubr.bf16.gmra.mrb[0].mxu0 %v2080
        %v2178 = vpop.f32.mrb[0].mxu0
        %v2179 = vadd.f32 0.0, %v2178
        %v2180 = vpop.f32.mrb[0].mxu0
        %v2181 = vadd.f32 0.0, %v2180
        %v2182 = vpop.f32.mrb[0].mxu0
        %v2183 = vadd.f32 0.0, %v2182
        %v2184 = vpop.f32.mrb[0].mxu0
        %v2185 = vadd.f32 0.0, %v2184
        %2186 = vdwg.mxu0
        %2187 = vmatprep.subr.bf16.mxu0 %v1922
        %2188 = vmatpush1.bf16.msra.mxu0 %v1921
        %2189 = vmatprep.subr.bf16.mxu0 %v1926
        %2190 = vmatpush1.bf16.msra.mxu0 %v1925
        %2191 = vmatprep.subr.bf16.mxu0 %v1930
        %2192 = vmatpush1.bf16.msra.mxu0 %v1929
        %2193 = vmatprep.subr.bf16.mxu0 %v1934
        %2194 = vmatpush1.bf16.msra.mxu0 %v1933
        %2195 = vmatprep.subr.bf16.mxu0 %v1938
        %2196 = vmatpush1.bf16.msra.mxu0 %v1937
        %2197 = vmatprep.subr.bf16.mxu0 %v1942
        %2198 = vmatpush1.bf16.msra.mxu0 %v1941
        %2199 = vmatprep.subr.bf16.mxu0 %v1946
        %2200 = vmatpush1.bf16.msra.mxu0 %v1945
        %2201 = vmatprep.subr.bf16.mxu0 %v1950
        %2202 = vmatpush1.bf16.msra.mxu0 %v1949
        %2203 = vmatprep.subr.bf16.mxu0 %v1954
        %2204 = vmatpush1.bf16.msra.mxu0 %v1953
        %2205 = vmatprep.subr.bf16.mxu0 %v1958
        %2206 = vmatpush1.bf16.msra.mxu0 %v1957
        %2207 = vmatprep.subr.bf16.mxu0 %v1962
        %2208 = vmatpush1.bf16.msra.mxu0 %v1961
        %2209 = vmatprep.subr.bf16.mxu0 %v1966
        %2210 = vmatpush1.bf16.msra.mxu0 %v1965
        %2211 = vmatprep.subr.bf16.mxu0 %v1970
        %2212 = vmatpush1.bf16.msra.mxu0 %v1969
        %2213 = vmatprep.subr.bf16.mxu0 %v1974
        %2214 = vmatpush1.bf16.msra.mxu0 %v1973
        %2215 = vmatprep.subr.bf16.mxu0 %v1978
        %2216 = vmatpush1.bf16.msra.mxu0 %v1977
        %2217 = vmatprep.subr.bf16.mxu0 %v1982
        %2218 = vmatpush1.bf16.msra.mxu0 %v1981
        %2219 = vmatprep.mubr.bf16.mxu0 %v2068
        %2220 = vmatmul.mubr.bf16.gmra.mrb[0].mxu0 %v2067
        %v2221 = vpop.f32.mrb[0].mxu0
        %v2222 = vadd.f32 %v2149, %v2221
        %v2223 = vpop.f32.mrb[0].mxu0
        %v2224 = vadd.f32 %v2151, %v2223
        %v2225 = vpop.f32.mrb[0].mxu0
        %v2226 = vadd.f32 %v2153, %v2225
        %v2227 = vpop.f32.mrb[0].mxu0
        %v2228 = vadd.f32 %v2155, %v2227
        %2229 = vmatprep.mubr.bf16.mxu0 %v2073
        %2230 = vmatmul.mubr.bf16.gmra.mrb[0].mxu0 %v2072
        %v2231 = vpop.f32.mrb[0].mxu0
        %v2232 = vadd.f32 %v2159, %v2231
        %v2233 = vpop.f32.mrb[0].mxu0
        %v2234 = vadd.f32 %v2161, %v2233
        %v2235 = vpop.f32.mrb[0].mxu0
        %v2236 = vadd.f32 %v2163, %v2235
        %v2237 = vpop.f32.mrb[0].mxu0
        %v2238 = vadd.f32 %v2165, %v2237
        %2239 = vmatprep.mubr.bf16.mxu0 %v2078
        %2240 = vmatmul.mubr.bf16.gmra.mrb[0].mxu0 %v2077
        %v2241 = vpop.f32.mrb[0].mxu0
        %v2242 = vadd.f32 %v2169, %v2241
        %v2243 = vpop.f32.mrb[0].mxu0
        %v2244 = vadd.f32 %v2171, %v2243
        %v2245 = vpop.f32.mrb[0].mxu0
        %v2246 = vadd.f32 %v2173, %v2245
        %v2247 = vpop.f32.mrb[0].mxu0
        %v2248 = vadd.f32 %v2175, %v2247
        %2249 = vmatprep.mubr.bf16.mxu0 %v2083
        %2250 = vmatmul.mubr.bf16.gmra.mrb[0].mxu0 %v2082
        %v2251 = vpop.f32.mrb[0].mxu0
        %v2252 = vadd.f32 %v2179, %v2251
        %v2253 = vpop.f32.mrb[0].mxu0
        %v2254 = vadd.f32 %v2181, %v2253
        %v2255 = vpop.f32.mrb[0].mxu0
        %v2256 = vadd.f32 %v2183, %v2255
        %v2257 = vpop.f32.mrb[0].mxu0
        %v2258 = vadd.f32 %v2185, %v2257
        %2259 = vdwg.mxu0
        %2260 = vmatprep.subr.bf16.mxu0 %v1986
        %2261 = vmatpush1.bf16.msra.mxu0 %v1985
        %2262 = vmatprep.subr.bf16.mxu0 %v1990
        %2263 = vmatpush1.bf16.msra.mxu0 %v1989
        %2264 = vmatprep.subr.bf16.mxu0 %v1994
        %2265 = vmatpush1.bf16.msra.mxu0 %v1993
        %2266 = vmatprep.subr.bf16.mxu0 %v1998
        %2267 = vmatpush1.bf16.msra.mxu0 %v1997
        %2268 = vmatprep.subr.bf16.mxu0 0
        %2269 = vmatpush1.bf16.msra.mxu0 0
        %2270 = vmatprep.subr.bf16.mxu0 0
        %2271 = vmatpush1.bf16.msra.mxu0 0
        %2272 = vmatprep.subr.bf16.mxu0 0
        %2273 = vmatpush1.bf16.msra.mxu0 0
        %2274 = vmatprep.subr.bf16.mxu0 0
        %2275 = vmatpush1.bf16.msra.mxu0 0
        %2276 = vmatprep.subr.bf16.mxu0 0
        %2277 = vmatpush1.bf16.msra.mxu0 0
        %2278 = vmatprep.subr.bf16.mxu0 0
        %2279 = vmatpush1.bf16.msra.mxu0 0
        %2280 = vmatprep.subr.bf16.mxu0 0
        %2281 = vmatpush1.bf16.msra.mxu0 0
        %2282 = vmatprep.subr.bf16.mxu0 0
        %2283 = vmatpush1.bf16.msra.mxu0 0
        %2284 = vmatprep.subr.bf16.mxu0 0
        %2285 = vmatpush1.bf16.msra.mxu0 0
        %2286 = vmatprep.subr.bf16.mxu0 0
        %2287 = vmatpush1.bf16.msra.mxu0 0
        %2288 = vmatprep.subr.bf16.mxu0 0
        %2289 = vmatpush1.bf16.msra.mxu0 0
        %2290 = vmatprep.subr.bf16.mxu0 0
        %2291 = vmatpush1.bf16.msra.mxu0 0
        %2292 = vmatprep.mubr.bf16.mxu0 0
        %2293 = vmatmul.mubr.bf16.gmra.mrb[0].mxu0 %v2103
        %v2294 = vpop.f32.mrb[0].mxu0
        %v2295 = vadd.f32 %v2222, %v2294
        %v2296 = vpop.f32.mrb[0].mxu0
        %v2297 = vadd.f32 %v2224, %v2296
        %v2298 = vpop.f32.mrb[0].mxu0
        %v2299 = vadd.f32 %v2226, %v2298
        %v2300 = vpop.f32.mrb[0].mxu0
        %v2301 = vadd.f32 %v2228, %v2300
        %2302 = vmatprep.mubr.bf16.mxu0 0
        %2303 = vmatmul.mubr.bf16.gmra.mrb[0].mxu0 %v2106
        %v2304 = vpop.f32.mrb[0].mxu0
        %v2305 = vadd.f32 %v2232, %v2304
        %v2306 = vpop.f32.mrb[0].mxu0
        %v2307 = vadd.f32 %v2234, %v2306
        %v2308 = vpop.f32.mrb[0].mxu0
        %v2309 = vadd.f32 %v2236, %v2308
        %v2310 = vpop.f32.mrb[0].mxu0
        %v2311 = vadd.f32 %v2238, %v2310
        %2312 = vmatprep.mubr.bf16.mxu0 0
        %2313 = vmatmul.mubr.bf16.gmra.mrb[0].mxu0 %v2109
        %v2314 = vpop.f32.mrb[0].mxu0
        %v2315 = vadd.f32 %v2242, %v2314
        %v2316 = vpop.f32.mrb[0].mxu0
        %v2317 = vadd.f32 %v2244, %v2316
        %v2318 = vpop.f32.mrb[0].mxu0
        %v2319 = vadd.f32 %v2246, %v2318
        %v2320 = vpop.f32.mrb[0].mxu0
        %v2321 = vadd.f32 %v2248, %v2320
        %2322 = vmatprep.mubr.bf16.mxu0 0
        %2323 = vmatmul.mubr.bf16.gmra.mrb[0].mxu0 %v2112
        %v2324 = vpop.f32.mrb[0].mxu0
        %v2325 = vadd.f32 %v2252, %v2324
        %v2326 = vpop.f32.mrb[0].mxu0
        %v2327 = vadd.f32 %v2254, %v2326
        %v2328 = vpop.f32.mrb[0].mxu0
        %v2329 = vadd.f32 %v2256, %v2328
        %v2330 = vpop.f32.mrb[0].mxu0
        %v2331 = vadd.f32 %v2258, %v2330
        %2332 = vdwg.mxu0
        %2333 = vmatprep.subr.bf16.mxu0 %v1860
        %2334 = vmatpush1.bf16.msra.mxu0 %v1859
        %2335 = vmatprep.subr.bf16.mxu0 %v1864
        %2336 = vmatpush1.bf16.msra.mxu0 %v1863
        %2337 = vmatprep.subr.bf16.mxu0 %v1868
        %2338 = vmatpush1.bf16.msra.mxu0 %v1867
        %2339 = vmatprep.subr.bf16.mxu0 %v1872
        %2340 = vmatpush1.bf16.msra.mxu0 %v1871
        %2341 = vmatprep.subr.bf16.mxu0 %v1876
        %2342 = vmatpush1.bf16.msra.mxu0 %v1875
        %2343 = vmatprep.subr.bf16.mxu0 %v1880
        %2344 = vmatpush1.bf16.msra.mxu0 %v1879
        %2345 = vmatprep.subr.bf16.mxu0 %v1884
        %2346 = vmatpush1.bf16.msra.mxu0 %v1883
        %2347 = vmatprep.subr.bf16.mxu0 %v1888
        %2348 = vmatpush1.bf16.msra.mxu0 %v1887
        %2349 = vmatprep.subr.bf16.mxu0 %v1892
        %2350 = vmatpush1.bf16.msra.mxu0 %v1891
        %2351 = vmatprep.subr.bf16.mxu0 %v1896
        %2352 = vmatpush1.bf16.msra.mxu0 %v1895
        %2353 = vmatprep.subr.bf16.mxu0 %v1900
        %2354 = vmatpush1.bf16.msra.mxu0 %v1899
        %2355 = vmatprep.subr.bf16.mxu0 %v1904
        %2356 = vmatpush1.bf16.msra.mxu0 %v1903
        %2357 = vmatprep.subr.bf16.mxu0 %v1908
        %2358 = vmatpush1.bf16.msra.mxu0 %v1907
        %2359 = vmatprep.subr.bf16.mxu0 %v1912
        %2360 = vmatpush1.bf16.msra.mxu0 %v1911
        %2361 = vmatprep.subr.bf16.mxu0 %v1916
        %2362 = vmatpush1.bf16.msra.mxu0 %v1915
        %2363 = vmatprep.subr.bf16.mxu0 %v1920
        %2364 = vmatpush1.bf16.msra.mxu0 %v1919
        %2365 = vmatprep.mubr.bf16.mxu0 %v2066
        %2366 = vmatmul.mubr.bf16.gmra.mrb[0].mxu0 %v2065
        %v2367 = vpop.f32.mrb[0].mxu0
        %v2368 = vadd.f32 0.0, %v2367
        %v2369 = vpop.f32.mrb[0].mxu0
        %v2370 = vadd.f32 0.0, %v2369
        %v2371 = vpop.f32.mrb[0].mxu0
        %v2372 = vadd.f32 0.0, %v2371
        %v2373 = vpop.f32.mrb[0].mxu0
        %v2374 = vadd.f32 0.0, %v2373
        %2375 = vmatprep.mubr.bf16.mxu0 %v2071
        %2376 = vmatmul.mubr.bf16.gmra.mrb[0].mxu0 %v2070
        %v2377 = vpop.f32.mrb[0].mxu0
        %v2378 = vadd.f32 0.0, %v2377
        %v2379 = vpop.f32.mrb[0].mxu0
        %v2380 = vadd.f32 0.0, %v2379
        %v2381 = vpop.f32.mrb[0].mxu0
        %v2382 = vadd.f32 0.0, %v2381
        %v2383 = vpop.f32.mrb[0].mxu0
        %v2384 = vadd.f32 0.0, %v2383
        %2385 = vmatprep.mubr.bf16.mxu0 %v2076
        %2386 = vmatmul.mubr.bf16.gmra.mrb[0].mxu0 %v2075
        %v2387 = vpop.f32.mrb[0].mxu0
        %v2388 = vadd.f32 0.0, %v2387
        %v2389 = vpop.f32.mrb[0].mxu0
        %v2390 = vadd.f32 0.0, %v2389
        %v2391 = vpop.f32.mrb[0].mxu0
        %v2392 = vadd.f32 0.0, %v2391
        %v2393 = vpop.f32.mrb[0].mxu0
        %v2394 = vadd.f32 0.0, %v2393
        %2395 = vmatprep.mubr.bf16.mxu0 %v2081
        %2396 = vmatmul.mubr.bf16.gmra.mrb[0].mxu0 %v2080
        %v2397 = vpop.f32.mrb[0].mxu0
        %v2398 = vadd.f32 0.0, %v2397
        %v2399 = vpop.f32.mrb[0].mxu0
        %v2400 = vadd.f32 0.0, %v2399
        %v2401 = vpop.f32.mrb[0].mxu0
        %v2402 = vadd.f32 0.0, %v2401
        %v2403 = vpop.f32.mrb[0].mxu0
        %v2404 = vadd.f32 0.0, %v2403
        %2405 = vdwg.mxu0
        %2406 = vmatprep.subr.bf16.mxu0 %v1924
        %2407 = vmatpush1.bf16.msra.mxu0 %v1923
        %2408 = vmatprep.subr.bf16.mxu0 %v1928
        %2409 = vmatpush1.bf16.msra.mxu0 %v1927
        %2410 = vmatprep.subr.bf16.mxu0 %v1932
        %2411 = vmatpush1.bf16.msra.mxu0 %v1931
        %2412 = vmatprep.subr.bf16.mxu0 %v1936
        %2413 = vmatpush1.bf16.msra.mxu0 %v1935
        %2414 = vmatprep.subr.bf16.mxu0 %v1940
        %2415 = vmatpush1.bf16.msra.mxu0 %v1939
        %2416 = vmatprep.subr.bf16.mxu0 %v1944
        %2417 = vmatpush1.bf16.msra.mxu0 %v1943
        %2418 = vmatprep.subr.bf16.mxu0 %v1948
        %2419 = vmatpush1.bf16.msra.mxu0 %v1947
        %2420 = vmatprep.subr.bf16.mxu0 %v1952
        %2421 = vmatpush1.bf16.msra.mxu0 %v1951
        %2422 = vmatprep.subr.bf16.mxu0 %v1956
        %2423 = vmatpush1.bf16.msra.mxu0 %v1955
        %2424 = vmatprep.subr.bf16.mxu0 %v1960
        %2425 = vmatpush1.bf16.msra.mxu0 %v1959
        %2426 = vmatprep.subr.bf16.mxu0 %v1964
        %2427 = vmatpush1.bf16.msra.mxu0 %v1963
        %2428 = vmatprep.subr.bf16.mxu0 %v1968
        %2429 = vmatpush1.bf16.msra.mxu0 %v1967
        %2430 = vmatprep.subr.bf16.mxu0 %v1972
        %2431 = vmatpush1.bf16.msra.mxu0 %v1971
        %2432 = vmatprep.subr.bf16.mxu0 %v1976
        %2433 = vmatpush1.bf16.msra.mxu0 %v1975
        %2434 = vmatprep.subr.bf16.mxu0 %v1980
        %2435 = vmatpush1.bf16.msra.mxu0 %v1979
        %2436 = vmatprep.subr.bf16.mxu0 %v1984
        %2437 = vmatpush1.bf16.msra.mxu0 %v1983
        %2438 = vmatprep.mubr.bf16.mxu0 %v2068
        %2439 = vmatmul.mubr.bf16.gmra.mrb[0].mxu0 %v2067
        %v2440 = vpop.f32.mrb[0].mxu0
        %v2441 = vadd.f32 %v2368, %v2440
        %v2442 = vpop.f32.mrb[0].mxu0
        %v2443 = vadd.f32 %v2370, %v2442
        %v2444 = vpop.f32.mrb[0].mxu0
        %v2445 = vadd.f32 %v2372, %v2444
        %v2446 = vpop.f32.mrb[0].mxu0
        %v2447 = vadd.f32 %v2374, %v2446
        %2448 = vmatprep.mubr.bf16.mxu0 %v2073
        %2449 = vmatmul.mubr.bf16.gmra.mrb[0].mxu0 %v2072
        %v2450 = vpop.f32.mrb[0].mxu0
        %v2451 = vadd.f32 %v2378, %v2450
        %v2452 = vpop.f32.mrb[0].mxu0
        %v2453 = vadd.f32 %v2380, %v2452
        %v2454 = vpop.f32.mrb[0].mxu0
        %v2455 = vadd.f32 %v2382, %v2454
        %v2456 = vpop.f32.mrb[0].mxu0
        %v2457 = vadd.f32 %v2384, %v2456
        %2458 = vmatprep.mubr.bf16.mxu0 %v2078
        %2459 = vmatmul.mubr.bf16.gmra.mrb[0].mxu0 %v2077
        %v2460 = vpop.f32.mrb[0].mxu0
        %v2461 = vadd.f32 %v2388, %v2460
        %v2462 = vpop.f32.mrb[0].mxu0
        %v2463 = vadd.f32 %v2390, %v2462
        %v2464 = vpop.f32.mrb[0].mxu0
        %v2465 = vadd.f32 %v2392, %v2464
        %v2466 = vpop.f32.mrb[0].mxu0
        %v2467 = vadd.f32 %v2394, %v2466
        %2468 = vmatprep.mubr.bf16.mxu0 %v2083
        %2469 = vmatmul.mubr.bf16.gmra.mrb[0].mxu0 %v2082
        %v2470 = vpop.f32.mrb[0].mxu0
        %v2471 = vadd.f32 %v2398, %v2470
        %v2472 = vpop.f32.mrb[0].mxu0
        %v2473 = vadd.f32 %v2400, %v2472
        %v2474 = vpop.f32.mrb[0].mxu0
        %v2475 = vadd.f32 %v2402, %v2474
        %v2476 = vpop.f32.mrb[0].mxu0
        %v2477 = vadd.f32 %v2404, %v2476
        %2478 = vdwg.mxu0
        %2479 = vmatprep.subr.bf16.mxu0 %v1988
        %2480 = vmatpush1.bf16.msra.mxu0 %v1987
        %2481 = vmatprep.subr.bf16.mxu0 %v1992
        %2482 = vmatpush1.bf16.msra.mxu0 %v1991
        %2483 = vmatprep.subr.bf16.mxu0 %v1996
        %2484 = vmatpush1.bf16.msra.mxu0 %v1995
        %2485 = vmatprep.subr.bf16.mxu0 %v2000
        %2486 = vmatpush1.bf16.msra.mxu0 %v1999
        %2487 = vmatprep.subr.bf16.mxu0 0
        %2488 = vmatpush1.bf16.msra.mxu0 0
        %2489 = vmatprep.subr.bf16.mxu0 0
        %2490 = vmatpush1.bf16.msra.mxu0 0
        %2491 = vmatprep.subr.bf16.mxu0 0
        %2492 = vmatpush1.bf16.msra.mxu0 0
        %2493 = vmatprep.subr.bf16.mxu0 0
        %2494 = vmatpush1.bf16.msra.mxu0 0
        %2495 = vmatprep.subr.bf16.mxu0 0
        %2496 = vmatpush1.bf16.msra.mxu0 0
        %2497 = vmatprep.subr.bf16.mxu0 0
        %2498 = vmatpush1.bf16.msra.mxu0 0
        %2499 = vmatprep.subr.bf16.mxu0 0
        %2500 = vmatpush1.bf16.msra.mxu0 0
        %2501 = vmatprep.subr.bf16.mxu0 0
        %2502 = vmatpush1.bf16.msra.mxu0 0
        %2503 = vmatprep.subr.bf16.mxu0 0
        %2504 = vmatpush1.bf16.msra.mxu0 0
        %2505 = vmatprep.subr.bf16.mxu0 0
        %2506 = vmatpush1.bf16.msra.mxu0 0
        %2507 = vmatprep.subr.bf16.mxu0 0
        %2508 = vmatpush1.bf16.msra.mxu0 0
        %2509 = vmatprep.subr.bf16.mxu0 0
        %2510 = vmatpush1.bf16.msra.mxu0 0
        %2511 = vmatprep.mubr.bf16.mxu0 0
        %2512 = vmatmul.mubr.bf16.gmra.mrb[0].mxu0 %v2103
        %v2513 = vpop.f32.mrb[0].mxu0
        %v2514 = vadd.f32 %v2441, %v2513
        %v2515 = vpop.f32.mrb[0].mxu0
        %v2516 = vadd.f32 %v2443, %v2515
        %v2517 = vpop.f32.mrb[0].mxu0
        %v2518 = vadd.f32 %v2445, %v2517
        %v2519 = vpop.f32.mrb[0].mxu0
        %v2520 = vadd.f32 %v2447, %v2519
        %2521 = vmatprep.mubr.bf16.mxu0 0
        %2522 = vmatmul.mubr.bf16.gmra.mrb[0].mxu0 %v2106
        %v2523 = vpop.f32.mrb[0].mxu0
        %v2524 = vadd.f32 %v2451, %v2523
        %v2525 = vpop.f32.mrb[0].mxu0
        %v2526 = vadd.f32 %v2453, %v2525
        %v2527 = vpop.f32.mrb[0].mxu0
        %v2528 = vadd.f32 %v2455, %v2527
        %v2529 = vpop.f32.mrb[0].mxu0
        %v2530 = vadd.f32 %v2457, %v2529
        %2531 = vmatprep.mubr.bf16.mxu0 0
        %2532 = vmatmul.mubr.bf16.gmra.mrb[0].mxu0 %v2109
        %v2533 = vpop.f32.mrb[0].mxu0
        %v2534 = vadd.f32 %v2461, %v2533
        %v2535 = vpop.f32.mrb[0].mxu0
        %v2536 = vadd.f32 %v2463, %v2535
        %v2537 = vpop.f32.mrb[0].mxu0
        %v2538 = vadd.f32 %v2465, %v2537
        %v2539 = vpop.f32.mrb[0].mxu0
        %v2540 = vadd.f32 %v2467, %v2539
        %2541 = vmatprep.mubr.bf16.mxu0 0
        %2542 = vmatmul.mubr.bf16.gmra.mrb[0].mxu0 %v2112
        %v2543 = vpop.f32.mrb[0].mxu0
        %v2544 = vadd.f32 %v2471, %v2543
        %v2545 = vpop.f32.mrb[0].mxu0
        %v2546 = vadd.f32 %v2473, %v2545
        %v2547 = vpop.f32.mrb[0].mxu0
        %v2548 = vadd.f32 %v2475, %v2547
        %v2549 = vpop.f32.mrb[0].mxu0
        %v2550 = vadd.f32 %v2477, %v2549
        %2551 = vdwg.mxu0
        %2552 = vst [vmem:[#allocation4] sm:$0xff] %v2295
        %2553 = vst [vmem:[#allocation4 + $0x8] sm:$0xff] %v2297
        %2554 = vst [vmem:[#allocation4 + $0x10] sm:$0xff] %v2514
        %2555 = vst [vmem:[#allocation4 + $0x18] sm:$0xff] %v2516
        %2556 = vst [vmem:[#allocation4 + $0x20] sm:$0xff] %v2299
        %2557 = vst [vmem:[#allocation4 + $0x28] sm:$0xff] %v2301
        %2558 = vst [vmem:[#allocation4 + $0x30] sm:$0xff] %v2518
        %2559 = vst [vmem:[#allocation4 + $0x38] sm:$0xff] %v2520
        %2560 = vst [vmem:[#allocation4 + $0x40] sm:$0xff] %v2305
        %2561 = vst [vmem:[#allocation4 + $0x48] sm:$0xff] %v2307
        %2562 = vst [vmem:[#allocation4 + $0x50] sm:$0xff] %v2524
        %2563 = vst [vmem:[#allocation4 + $0x58] sm:$0xff] %v2526
        %2564 = vst [vmem:[#allocation4 + $0x60] sm:$0xff] %v2309
        %2565 = vst [vmem:[#allocation4 + $0x68] sm:$0xff] %v2311
        %2566 = vst [vmem:[#allocation4 + $0x70] sm:$0xff] %v2528
        %2567 = vst [vmem:[#allocation4 + $0x78] sm:$0xff] %v2530
        %2568 = vst [vmem:[#allocation4 + $0x80] sm:$0xff] %v2315
        %2569 = vst [vmem:[#allocation4 + $0x88] sm:$0xff] %v2317
        %2570 = vst [vmem:[#allocation4 + $0x90] sm:$0xff] %v2534
        %2571 = vst [vmem:[#allocation4 + $0x98] sm:$0xff] %v2536
        %2572 = vst [vmem:[#allocation4 + $0xa0] sm:$0xff] %v2319
        %2573 = vst [vmem:[#allocation4 + $0xa8] sm:$0xff] %v2321
        %2574 = vst [vmem:[#allocation4 + $0xb0] sm:$0xff] %v2538
        %2575 = vst [vmem:[#allocation4 + $0xb8] sm:$0xff] %v2540
        %2576 = vst [vmem:[#allocation4 + $0xc0] sm:$0xff] %v2325
        %2577 = vst [vmem:[#allocation4 + $0xc8] sm:$0xff] %v2327
        %2578 = vst [vmem:[#allocation4 + $0xd0] sm:$0xff] %v2544
        %2579 = vst [vmem:[#allocation4 + $0xd8] sm:$0xff] %v2546
        %2580 = vst [vmem:[#allocation4 + $0xe0] sm:$0xff] %v2329
        %2581 = vst [vmem:[#allocation4 + $0xe8] sm:$0xff] %v2331
        %2582 = vst [vmem:[#allocation4 + $0xf0] sm:$0xff] %v2548
        %2583 = vst [vmem:[#allocation4 + $0xf8] sm:$0xff] %v2550
        %v2584 = vld [vmem:[%s2] sm:$0xff]
        %v2585 = vld [vmem:[%s2 + $0x8] sm:$0xff]
        %v2586 = vld [vmem:[%s2 + $0x10] sm:$0xff]
        %v2587 = vld [vmem:[%s2 + $0x18] sm:$0xff]
        %v2588 = vld [vmem:[%s2 + $0x20] sm:$0xff]
        %v2589 = vld [vmem:[%s2 + $0x28] sm:$0xff]
        %v2590 = vld [vmem:[%s2 + $0x30] sm:$0xff]
        %v2591 = vld [vmem:[%s2 + $0x38] sm:$0xff]
        %v2592 = vld [vmem:[#allocation4] sm:$0xff]
        %v2593 = vld [vmem:[#allocation4 + $0x8] sm:$0xff]
        %v2594 = vld [vmem:[#allocation4 + $0x20] sm:$0xff]
        %v2595 = vld [vmem:[#allocation4 + $0x28] sm:$0xff]
        %v2596 = vld [vmem:[#allocation4 + $0x40] sm:$0xff]
        %v2597 = vld [vmem:[#allocation4 + $0x48] sm:$0xff]
        %v2598 = vld [vmem:[#allocation4 + $0x60] sm:$0xff]
        %v2599 = vld [vmem:[#allocation4 + $0x68] sm:$0xff]
        %v2600 = vld [vmem:[#allocation4 + $0x80] sm:$0xff]
        %v2601 = vld [vmem:[#allocation4 + $0x88] sm:$0xff]
        %v2602 = vld [vmem:[#allocation4 + $0xa0] sm:$0xff]
        %v2603 = vld [vmem:[#allocation4 + $0xa8] sm:$0xff]
        %v2604 = vld [vmem:[#allocation4 + $0xc0] sm:$0xff]
        %v2605 = vld [vmem:[#allocation4 + $0xc8] sm:$0xff]
        %v2606 = vld [vmem:[#allocation4 + $0xe0] sm:$0xff]
        %v2607 = vld [vmem:[#allocation4 + $0xe8] sm:$0xff]
        %2609 = vset.pattern.permute.xlu0 0
        %2610 = vperm.xlu0 %2609, %v2584
        %v2611 = vpop.permute.xlu0 %2610
        %2614 = vset.pattern.permute.xlu0 0
        %2615 = vperm.xlu0 %2614, %v2585
        %v2616 = vpop.permute.xlu0 %2615
        %2619 = vset.pattern.permute.xlu0 0
        %2620 = vperm.xlu0 %2619, %v2586
        %v2621 = vpop.permute.xlu0 %2620
        %2624 = vset.pattern.permute.xlu0 0
        %2625 = vperm.xlu0 %2624, %v2587
        %v2626 = vpop.permute.xlu0 %2625
        %2629 = vset.pattern.permute.xlu0 0
        %2630 = vperm.xlu0 %2629, %v2588
        %v2631 = vpop.permute.xlu0 %2630
        %2634 = vset.pattern.permute.xlu0 0
        %2635 = vperm.xlu0 %2634, %v2589
        %v2636 = vpop.permute.xlu0 %2635
        %2639 = vset.pattern.permute.xlu0 0
        %2640 = vperm.xlu0 %2639, %v2590
        %v2641 = vpop.permute.xlu0 %2640
        %2644 = vset.pattern.permute.xlu0 0
        %2645 = vperm.xlu0 %2644, %v2591
        %v2646 = vpop.permute.xlu0 %2645
        %v2648 = vadd.f32 %v2592, %v2611
        %v2649 = vadd.f32 %v2593, %v2611
        %v2650 = vadd.f32 %v2594, %v2616
        %v2651 = vadd.f32 %v2595, %v2616
        %v2652 = vadd.f32 %v2596, %v2621
        %v2653 = vadd.f32 %v2597, %v2621
        %v2654 = vadd.f32 %v2598, %v2626
        %v2655 = vadd.f32 %v2599, %v2626
        %v2656 = vadd.f32 %v2600, %v2631
        %v2657 = vadd.f32 %v2601, %v2631
        %v2658 = vadd.f32 %v2602, %v2636
        %v2659 = vadd.f32 %v2603, %v2636
        %v2660 = vadd.f32 %v2604, %v2641
        %v2661 = vadd.f32 %v2605, %v2641
        %v2662 = vadd.f32 %v2606, %v2646
        %v2663 = vadd.f32 %v2607, %v2646
        %vm2664 = vcmp.ge.f32.partialorder %v2648, 0.0
        %vm2665 = vcmp.ge.f32.partialorder %v2649, 0.0
        %vm2666 = vcmp.ge.f32.partialorder %v2650, 0.0
        %vm2667 = vcmp.ge.f32.partialorder %v2651, 0.0
        %vm2668 = vcmp.ge.f32.partialorder %v2652, 0.0
        %vm2669 = vcmp.ge.f32.partialorder %v2653, 0.0
        %vm2670 = vcmp.ge.f32.partialorder %v2654, 0.0
        %vm2671 = vcmp.ge.f32.partialorder %v2655, 0.0
        %vm2672 = vcmp.ge.f32.partialorder %v2656, 0.0
        %vm2673 = vcmp.ge.f32.partialorder %v2657, 0.0
        %vm2674 = vcmp.ge.f32.partialorder %v2658, 0.0
        %vm2675 = vcmp.ge.f32.partialorder %v2659, 0.0
        %vm2676 = vcmp.ge.f32.partialorder %v2660, 0.0
        %vm2677 = vcmp.ge.f32.partialorder %v2661, 0.0
        %vm2678 = vcmp.ge.f32.partialorder %v2662, 0.0
        %vm2679 = vcmp.ge.f32.partialorder %v2663, 0.0
        %v2680 = vstv %s306
        %v2681 = vmul.f32 %v2680, %v2648
        %v2682 = vmul.f32 %v2680, %v2649
        %v2683 = vmul.f32 %v2680, %v2650
        %v2684 = vmul.f32 %v2680, %v2651
        %v2685 = vmul.f32 %v2680, %v2652
        %v2686 = vmul.f32 %v2680, %v2653
        %v2687 = vmul.f32 %v2680, %v2654
        %v2688 = vmul.f32 %v2680, %v2655
        %v2689 = vmul.f32 %v2680, %v2656
        %v2690 = vmul.f32 %v2680, %v2657
        %v2691 = vmul.f32 %v2680, %v2658
        %v2692 = vmul.f32 %v2680, %v2659
        %v2693 = vmul.f32 %v2680, %v2660
        %v2694 = vmul.f32 %v2680, %v2661
        %v2695 = vmul.f32 %v2680, %v2662
        %v2696 = vmul.f32 %v2680, %v2663
        %v2697 = vsel %vm2664, %v2648, %v2681
        %v2698 = vsel %vm2665, %v2649, %v2682
        %v2699 = vsel %vm2666, %v2650, %v2683
        %v2700 = vsel %vm2667, %v2651, %v2684
        %v2701 = vsel %vm2668, %v2652, %v2685
        %v2702 = vsel %vm2669, %v2653, %v2686
        %v2703 = vsel %vm2670, %v2654, %v2687
        %v2704 = vsel %vm2671, %v2655, %v2688
        %v2705 = vsel %vm2672, %v2656, %v2689
        %v2706 = vsel %vm2673, %v2657, %v2690
        %v2707 = vsel %vm2674, %v2658, %v2691
        %v2708 = vsel %vm2675, %v2659, %v2692
        %v2709 = vsel %vm2676, %v2660, %v2693
        %v2710 = vsel %vm2677, %v2661, %v2694
        %v2711 = vsel %vm2678, %v2662, %v2695
        %v2712 = vsel %vm2679, %v2663, %v2696
        %v2713 = vpack.c.bf16 %v2699, %v2697
        %v2714 = vpack.c.bf16 %v2700, %v2698
        %v2715 = vpack.c.bf16 %v2703, %v2701
        %v2716 = vpack.c.bf16 %v2704, %v2702
        %v2717 = vpack.c.bf16 %v2707, %v2705
        %v2718 = vpack.c.bf16 %v2708, %v2706
        %v2719 = vpack.c.bf16 %v2711, %v2709
        %v2720 = vpack.c.bf16 %v2712, %v2710
        %2721 = vst [vmem:[#allocation2 + $0x8] sm:$0xff] %v2713
        %2722 = vst [vmem:[#allocation2 + $0x10] sm:$0xff] %v2714
        %2723 = vst [vmem:[#allocation2 + $0x48] sm:$0xff] %v2715
        %2724 = vst [vmem:[#allocation2 + $0x50] sm:$0xff] %v2716
        %2725 = vst [vmem:[#allocation2 + $0x88] sm:$0xff] %v2717
        %2726 = vst [vmem:[#allocation2 + $0x90] sm:$0xff] %v2718
        %2727 = vst [vmem:[#allocation2 + $0xc8] sm:$0xff] %v2719
        %2728 = vst [vmem:[#allocation2 + $0xd0] sm:$0xff] %v2720
        %v2729 = vld [vmem:[#allocation4 + $0x10] sm:$0xff]
        %v2730 = vld [vmem:[#allocation4 + $0x18] sm:$0xff]
        %v2731 = vld [vmem:[#allocation4 + $0x30] sm:$0xff]
        %v2732 = vld [vmem:[#allocation4 + $0x38] sm:$0xff]
        %v2733 = vld [vmem:[#allocation4 + $0x50] sm:$0xff]
        %v2734 = vld [vmem:[#allocation4 + $0x58] sm:$0xff]
        %v2735 = vld [vmem:[#allocation4 + $0x70] sm:$0xff]
        %v2736 = vld [vmem:[#allocation4 + $0x78] sm:$0xff]
        %v2737 = vld [vmem:[#allocation4 + $0x90] sm:$0xff]
        %v2738 = vld [vmem:[#allocation4 + $0x98] sm:$0xff]
        %v2739 = vld [vmem:[#allocation4 + $0xb0] sm:$0xff]
        %v2740 = vld [vmem:[#allocation4 + $0xb8] sm:$0xff]
        %v2741 = vld [vmem:[#allocation4 + $0xd0] sm:$0xff]
        %v2742 = vld [vmem:[#allocation4 + $0xd8] sm:$0xff]
        %v2743 = vld [vmem:[#allocation4 + $0xf0] sm:$0xff]
        %v2744 = vld [vmem:[#allocation4 + $0xf8] sm:$0xff]
        %v2745 = vadd.f32 %v2729, %v2611
        %v2746 = vadd.f32 %v2730, %v2611
        %v2747 = vadd.f32 %v2731, %v2616
        %v2748 = vadd.f32 %v2732, %v2616
        %v2749 = vadd.f32 %v2733, %v2621
        %v2750 = vadd.f32 %v2734, %v2621
        %v2751 = vadd.f32 %v2735, %v2626
        %v2752 = vadd.f32 %v2736, %v2626
        %v2753 = vadd.f32 %v2737, %v2631
        %v2754 = vadd.f32 %v2738, %v2631
        %v2755 = vadd.f32 %v2739, %v2636
        %v2756 = vadd.f32 %v2740, %v2636
        %v2757 = vadd.f32 %v2741, %v2641
        %v2758 = vadd.f32 %v2742, %v2641
        %v2759 = vadd.f32 %v2743, %v2646
        %v2760 = vadd.f32 %v2744, %v2646
        %vm2761 = vcmp.ge.f32.partialorder %v2745, 0.0
        %vm2762 = vcmp.ge.f32.partialorder %v2746, 0.0
        %vm2763 = vcmp.ge.f32.partialorder %v2747, 0.0
        %vm2764 = vcmp.ge.f32.partialorder %v2748, 0.0
        %vm2765 = vcmp.ge.f32.partialorder %v2749, 0.0
        %vm2766 = vcmp.ge.f32.partialorder %v2750, 0.0
        %vm2767 = vcmp.ge.f32.partialorder %v2751, 0.0
        %vm2768 = vcmp.ge.f32.partialorder %v2752, 0.0
        %vm2769 = vcmp.ge.f32.partialorder %v2753, 0.0
        %vm2770 = vcmp.ge.f32.partialorder %v2754, 0.0
        %vm2771 = vcmp.ge.f32.partialorder %v2755, 0.0
        %vm2772 = vcmp.ge.f32.partialorder %v2756, 0.0
        %vm2773 = vcmp.ge.f32.partialorder %v2757, 0.0
        %vm2774 = vcmp.ge.f32.partialorder %v2758, 0.0
        %vm2775 = vcmp.ge.f32.partialorder %v2759, 0.0
        %vm2776 = vcmp.ge.f32.partialorder %v2760, 0.0
        %v2777 = vmul.f32 %v2680, %v2745
        %v2778 = vmul.f32 %v2680, %v2746
        %v2779 = vmul.f32 %v2680, %v2747
        %v2780 = vmul.f32 %v2680, %v2748
        %v2781 = vmul.f32 %v2680, %v2749
        %v2782 = vmul.f32 %v2680, %v2750
        %v2783 = vmul.f32 %v2680, %v2751
        %v2784 = vmul.f32 %v2680, %v2752
        %v2785 = vmul.f32 %v2680, %v2753
        %v2786 = vmul.f32 %v2680, %v2754
        %v2787 = vmul.f32 %v2680, %v2755
        %v2788 = vmul.f32 %v2680, %v2756
        %v2789 = vmul.f32 %v2680, %v2757
        %v2790 = vmul.f32 %v2680, %v2758
        %v2791 = vmul.f32 %v2680, %v2759
        %v2792 = vmul.f32 %v2680, %v2760
        %v2793 = vsel %vm2761, %v2745, %v2777
        %v2794 = vsel %vm2762, %v2746, %v2778
        %v2795 = vsel %vm2763, %v2747, %v2779
        %v2796 = vsel %vm2764, %v2748, %v2780
        %v2797 = vsel %vm2765, %v2749, %v2781
        %v2798 = vsel %vm2766, %v2750, %v2782
        %v2799 = vsel %vm2767, %v2751, %v2783
        %v2800 = vsel %vm2768, %v2752, %v2784
        %v2801 = vsel %vm2769, %v2753, %v2785
        %v2802 = vsel %vm2770, %v2754, %v2786
        %v2803 = vsel %vm2771, %v2755, %v2787
        %v2804 = vsel %vm2772, %v2756, %v2788
        %v2805 = vsel %vm2773, %v2757, %v2789
        %v2806 = vsel %vm2774, %v2758, %v2790
        %v2807 = vsel %vm2775, %v2759, %v2791
        %v2808 = vsel %vm2776, %v2760, %v2792
        %v2809 = vpack.c.bf16 %v2795, %v2793
        %v2810 = vpack.c.bf16 %v2796, %v2794
        %v2811 = vpack.c.bf16 %v2799, %v2797
        %v2812 = vpack.c.bf16 %v2800, %v2798
        %v2813 = vpack.c.bf16 %v2803, %v2801
        %v2814 = vpack.c.bf16 %v2804, %v2802
        %v2815 = vpack.c.bf16 %v2807, %v2805
        %v2816 = vpack.c.bf16 %v2808, %v2806
        %2817 = vst [vmem:[#allocation2 + $0x28] sm:$0xff] %v2809
        %2818 = vst [vmem:[#allocation2 + $0x30] sm:$0xff] %v2810
        %2819 = vst [vmem:[#allocation2 + $0x68] sm:$0xff] %v2811
        %2820 = vst [vmem:[#allocation2 + $0x70] sm:$0xff] %v2812
        %2821 = vst [vmem:[#allocation2 + $0xa8] sm:$0xff] %v2813
        %2822 = vst [vmem:[#allocation2 + $0xb0] sm:$0xff] %v2814
        %2823 = vst [vmem:[#allocation2 + $0xe8] sm:$0xff] %v2815
        %2824 = vst [vmem:[#allocation2 + $0xf0] sm:$0xff] %v2816
        %v2825 = vld [vmem:[#allocation2] sm:$0xff]
        %v2826 = vld [vmem:[#allocation2 + $0x8] sm:$0xff]
        %v2827 = vld [vmem:[#allocation2 + $0x10] sm:$0xff]
        %v2828 = vld [vmem:[#allocation2 + $0x40] sm:$0xff]
        %v2829 = vld [vmem:[#allocation2 + $0x48] sm:$0xff]
        %v2830 = vld [vmem:[#allocation2 + $0x50] sm:$0xff]
        %v2831 = vld [vmem:[#allocation2 + $0x80] sm:$0xff]
        %v2832 = vld [vmem:[#allocation2 + $0x88] sm:$0xff]
        %v2833 = vld [vmem:[#allocation2 + $0x90] sm:$0xff]
        %v2834 = vld [vmem:[#allocation2 + $0xc0] sm:$0xff]
        %v2835 = vld [vmem:[#allocation2 + $0xc8] sm:$0xff]
        %v2836 = vld [vmem:[#allocation2 + $0xd0] sm:$0xff]
        %v2837 = vsel %vm453, %v2825, 0
        %v2838 = vsel %vm454, %v2826, 0
        %v2839 = vsel %vm455, %v2827, 0
        %v2840 = vsel %vm453, %v2828, 0
        %v2841 = vsel %vm454, %v2829, 0
        %v2842 = vsel %vm455, %v2830, 0
        %v2843 = vsel %vm453, %v2831, 0
        %v2844 = vsel %vm454, %v2832, 0
        %v2845 = vsel %vm455, %v2833, 0
        %v2846 = vsel %vm453, %v2834, 0
        %v2847 = vsel %vm454, %v2835, 0
        %v2848 = vsel %vm455, %v2836, 0
        %2861 = vrot.lane.b32.xlu0 %v2837, 17
        %v2862 = vpop.permute.xlu0 %2861
        %2863 = vrot.lane.b32.xlu0 %v2838, 17
        %v2864 = vpop.permute.xlu0 %2863
        %2865 = vrot.lane.b32.xlu0 %v2839, 17
        %v2866 = vpop.permute.xlu0 %2865
        %2867 = vrot.lane.b32.xlu0 %v2840, 17
        %v2868 = vpop.permute.xlu0 %2867
        %2869 = vrot.lane.b32.xlu0 %v2841, 17
        %v2870 = vpop.permute.xlu0 %2869
        %2871 = vrot.lane.b32.xlu0 %v2842, 17
        %v2872 = vpop.permute.xlu0 %2871
        %2873 = vrot.lane.b32.xlu0 %v2843, 17
        %v2874 = vpop.permute.xlu0 %2873
        %2875 = vrot.lane.b32.xlu0 %v2844, 17
        %v2876 = vpop.permute.xlu0 %2875
        %2877 = vrot.lane.b32.xlu0 %v2845, 17
        %v2878 = vpop.permute.xlu0 %2877
        %2879 = vrot.lane.b32.xlu0 %v2846, 17
        %v2880 = vpop.permute.xlu0 %2879
        %2881 = vrot.lane.b32.xlu0 %v2847, 17
        %v2882 = vpop.permute.xlu0 %2881
        %2883 = vrot.lane.b32.xlu0 %v2848, 17
        %v2884 = vpop.permute.xlu0 %2883
        %v2885 = vsel %vm504, %v2862, %v2864
        %v2886 = vsel %vm504, %v2864, %v2866
        %v2887 = vsel %vm504, %v2868, %v2870
        %v2888 = vsel %vm504, %v2870, %v2872
        %v2889 = vsel %vm504, %v2874, %v2876
        %v2890 = vsel %vm504, %v2876, %v2878
        %v2891 = vsel %vm504, %v2880, %v2882
        %v2892 = vsel %vm504, %v2882, %v2884
        %2901 = vst [vmem:[#allocation3] sm:$0xff] %v2885
        %2902 = vst [vmem:[#allocation3 + $0x8] sm:$0xff] %v2886
        %2903 = vst [vmem:[#allocation3 + $0x20] sm:$0xff] %v2887
        %2904 = vst [vmem:[#allocation3 + $0x28] sm:$0xff] %v2888
        %2905 = vst [vmem:[#allocation3 + $0x40] sm:$0xff] %v2889
        %2906 = vst [vmem:[#allocation3 + $0x48] sm:$0xff] %v2890
        %2907 = vst [vmem:[#allocation3 + $0x60] sm:$0xff] %v2891
        %2908 = vst [vmem:[#allocation3 + $0x68] sm:$0xff] %v2892
        %v2909 = vld [vmem:[#allocation2] sm:$0xff]
        %v2910 = vld [vmem:[#allocation2 + $0x8] sm:$0xff]
        %v2911 = vld [vmem:[#allocation2 + $0x10] sm:$0xff]
        %v2912 = vld [vmem:[#allocation2 + $0x40] sm:$0xff]
        %v2913 = vld [vmem:[#allocation2 + $0x48] sm:$0xff]
        %v2914 = vld [vmem:[#allocation2 + $0x50] sm:$0xff]
        %v2915 = vld [vmem:[#allocation2 + $0x80] sm:$0xff]
        %v2916 = vld [vmem:[#allocation2 + $0x88] sm:$0xff]
        %v2917 = vld [vmem:[#allocation2 + $0x90] sm:$0xff]
        %v2918 = vld [vmem:[#allocation2 + $0xc0] sm:$0xff]
        %v2919 = vld [vmem:[#allocation2 + $0xc8] sm:$0xff]
        %v2920 = vld [vmem:[#allocation2 + $0xd0] sm:$0xff]
        %2933 = vrot.lane.b32.xlu0 %v2909, 16
        %v2934 = vpop.permute.xlu0 %2933
        %2935 = vrot.lane.b32.xlu0 %v2910, 16
        %v2936 = vpop.permute.xlu0 %2935
        %2937 = vrot.lane.b32.xlu0 %v2911, 16
        %v2938 = vpop.permute.xlu0 %2937
        %2939 = vrot.lane.b32.xlu0 %v2912, 16
        %v2940 = vpop.permute.xlu0 %2939
        %2941 = vrot.lane.b32.xlu0 %v2913, 16
        %v2942 = vpop.permute.xlu0 %2941
        %2943 = vrot.lane.b32.xlu0 %v2914, 16
        %v2944 = vpop.permute.xlu0 %2943
        %2945 = vrot.lane.b32.xlu0 %v2915, 16
        %v2946 = vpop.permute.xlu0 %2945
        %2947 = vrot.lane.b32.xlu0 %v2916, 16
        %v2948 = vpop.permute.xlu0 %2947
        %2949 = vrot.lane.b32.xlu0 %v2917, 16
        %v2950 = vpop.permute.xlu0 %2949
        %2951 = vrot.lane.b32.xlu0 %v2918, 16
        %v2952 = vpop.permute.xlu0 %2951
        %2953 = vrot.lane.b32.xlu0 %v2919, 16
        %v2954 = vpop.permute.xlu0 %2953
        %2955 = vrot.lane.b32.xlu0 %v2920, 16
        %v2956 = vpop.permute.xlu0 %2955
        %v2957 = vsel %vm577, %v2934, %v2936
        %v2958 = vsel %vm577, %v2936, %v2938
        %v2959 = vsel %vm577, %v2940, %v2942
        %v2960 = vsel %vm577, %v2942, %v2944
        %v2961 = vsel %vm577, %v2946, %v2948
        %v2962 = vsel %vm577, %v2948, %v2950
        %v2963 = vsel %vm577, %v2952, %v2954
        %v2964 = vsel %vm577, %v2954, %v2956
        %2973 = vst [vmem:[#allocation3 + $0x80] sm:$0xff] %v2957
        %2974 = vst [vmem:[#allocation3 + $0x88] sm:$0xff] %v2958
        %2975 = vst [vmem:[#allocation3 + $0xa0] sm:$0xff] %v2959
        %2976 = vst [vmem:[#allocation3 + $0xa8] sm:$0xff] %v2960
        %2977 = vst [vmem:[#allocation3 + $0xc0] sm:$0xff] %v2961
        %2978 = vst [vmem:[#allocation3 + $0xc8] sm:$0xff] %v2962
        %2979 = vst [vmem:[#allocation3 + $0xe0] sm:$0xff] %v2963
        %2980 = vst [vmem:[#allocation3 + $0xe8] sm:$0xff] %v2964
        %v2981 = vld [vmem:[#allocation2] sm:$0xff]
        %v2982 = vld [vmem:[#allocation2 + $0x8] sm:$0xff]
        %v2983 = vld [vmem:[#allocation2 + $0x10] sm:$0xff]
        %v2984 = vld [vmem:[#allocation2 + $0x40] sm:$0xff]
        %v2985 = vld [vmem:[#allocation2 + $0x48] sm:$0xff]
        %v2986 = vld [vmem:[#allocation2 + $0x50] sm:$0xff]
        %v2987 = vld [vmem:[#allocation2 + $0x80] sm:$0xff]
        %v2988 = vld [vmem:[#allocation2 + $0x88] sm:$0xff]
        %v2989 = vld [vmem:[#allocation2 + $0x90] sm:$0xff]
        %v2990 = vld [vmem:[#allocation2 + $0xc0] sm:$0xff]
        %v2991 = vld [vmem:[#allocation2 + $0xc8] sm:$0xff]
        %v2992 = vld [vmem:[#allocation2 + $0xd0] sm:$0xff]
        %v2993 = vsel %vm634, %v2981, 0
        %v2994 = vsel %vm635, %v2982, 0
        %v2995 = vsel %vm636, %v2983, 0
        %v2996 = vsel %vm634, %v2984, 0
        %v2997 = vsel %vm635, %v2985, 0
        %v2998 = vsel %vm636, %v2986, 0
        %v2999 = vsel %vm634, %v2987, 0
        %v3000 = vsel %vm635, %v2988, 0
        %v3001 = vsel %vm636, %v2989, 0
        %v3002 = vsel %vm634, %v2990, 0
        %v3003 = vsel %vm635, %v2991, 0
        %v3004 = vsel %vm636, %v2992, 0
        %3017 = vrot.lane.b32.xlu0 %v2993, 15
        %v3018 = vpop.permute.xlu0 %3017
        %3019 = vrot.lane.b32.xlu0 %v2994, 15
        %v3020 = vpop.permute.xlu0 %3019
        %3021 = vrot.lane.b32.xlu0 %v2995, 15
        %v3022 = vpop.permute.xlu0 %3021
        %3023 = vrot.lane.b32.xlu0 %v2996, 15
        %v3024 = vpop.permute.xlu0 %3023
        %3025 = vrot.lane.b32.xlu0 %v2997, 15
        %v3026 = vpop.permute.xlu0 %3025
        %3027 = vrot.lane.b32.xlu0 %v2998, 15
        %v3028 = vpop.permute.xlu0 %3027
        %3029 = vrot.lane.b32.xlu0 %v2999, 15
        %v3030 = vpop.permute.xlu0 %3029
        %3031 = vrot.lane.b32.xlu0 %v3000, 15
        %v3032 = vpop.permute.xlu0 %3031
        %3033 = vrot.lane.b32.xlu0 %v3001, 15
        %v3034 = vpop.permute.xlu0 %3033
        %3035 = vrot.lane.b32.xlu0 %v3002, 15
        %v3036 = vpop.permute.xlu0 %3035
        %3037 = vrot.lane.b32.xlu0 %v3003, 15
        %v3038 = vpop.permute.xlu0 %3037
        %3039 = vrot.lane.b32.xlu0 %v3004, 15
        %v3040 = vpop.permute.xlu0 %3039
        %v3041 = vsel %vm685, %v3018, %v3020
        %v3042 = vsel %vm685, %v3020, %v3022
        %v3043 = vsel %vm685, %v3024, %v3026
        %v3044 = vsel %vm685, %v3026, %v3028
        %v3045 = vsel %vm685, %v3030, %v3032
        %v3046 = vsel %vm685, %v3032, %v3034
        %v3047 = vsel %vm685, %v3036, %v3038
        %v3048 = vsel %vm685, %v3038, %v3040
        %3057 = vst [vmem:[#allocation3 + $0x100] sm:$0xff] %v3041
        %3058 = vst [vmem:[#allocation3 + $0x108] sm:$0xff] %v3042
        %3059 = vst [vmem:[#allocation3 + $0x120] sm:$0xff] %v3043
        %3060 = vst [vmem:[#allocation3 + $0x128] sm:$0xff] %v3044
        %3061 = vst [vmem:[#allocation3 + $0x140] sm:$0xff] %v3045
        %3062 = vst [vmem:[#allocation3 + $0x148] sm:$0xff] %v3046
        %3063 = vst [vmem:[#allocation3 + $0x160] sm:$0xff] %v3047
        %3064 = vst [vmem:[#allocation3 + $0x168] sm:$0xff] %v3048
        %v3065 = vld [vmem:[#allocation2] sm:$0xff]
        %v3066 = vld [vmem:[#allocation2 + $0x8] sm:$0xff]
        %v3067 = vld [vmem:[#allocation2 + $0x10] sm:$0xff]
        %v3068 = vld [vmem:[#allocation2 + $0x40] sm:$0xff]
        %v3069 = vld [vmem:[#allocation2 + $0x48] sm:$0xff]
        %v3070 = vld [vmem:[#allocation2 + $0x50] sm:$0xff]
        %v3071 = vld [vmem:[#allocation2 + $0x80] sm:$0xff]
        %v3072 = vld [vmem:[#allocation2 + $0x88] sm:$0xff]
        %v3073 = vld [vmem:[#allocation2 + $0x90] sm:$0xff]
        %v3074 = vld [vmem:[#allocation2 + $0xc0] sm:$0xff]
        %v3075 = vld [vmem:[#allocation2 + $0xc8] sm:$0xff]
        %v3076 = vld [vmem:[#allocation2 + $0xd0] sm:$0xff]
        %v3077 = vsel %vm728, %v3065, 0
        %v3078 = vsel %vm729, %v3066, 0
        %v3079 = vsel %vm730, %v3067, 0
        %v3080 = vsel %vm728, %v3068, 0
        %v3081 = vsel %vm729, %v3069, 0
        %v3082 = vsel %vm730, %v3070, 0
        %v3083 = vsel %vm728, %v3071, 0
        %v3084 = vsel %vm729, %v3072, 0
        %v3085 = vsel %vm730, %v3073, 0
        %v3086 = vsel %vm728, %v3074, 0
        %v3087 = vsel %vm729, %v3075, 0
        %v3088 = vsel %vm730, %v3076, 0
        %3101 = vrot.lane.b32.xlu0 %v3077, 1
        %v3102 = vpop.permute.xlu0 %3101
        %3103 = vrot.lane.b32.xlu0 %v3078, 1
        %v3104 = vpop.permute.xlu0 %3103
        %3105 = vrot.lane.b32.xlu0 %v3079, 1
        %v3106 = vpop.permute.xlu0 %3105
        %3107 = vrot.lane.b32.xlu0 %v3080, 1
        %v3108 = vpop.permute.xlu0 %3107
        %3109 = vrot.lane.b32.xlu0 %v3081, 1
        %v3110 = vpop.permute.xlu0 %3109
        %3111 = vrot.lane.b32.xlu0 %v3082, 1
        %v3112 = vpop.permute.xlu0 %3111
        %3113 = vrot.lane.b32.xlu0 %v3083, 1
        %v3114 = vpop.permute.xlu0 %3113
        %3115 = vrot.lane.b32.xlu0 %v3084, 1
        %v3116 = vpop.permute.xlu0 %3115
        %3117 = vrot.lane.b32.xlu0 %v3085, 1
        %v3118 = vpop.permute.xlu0 %3117
        %3119 = vrot.lane.b32.xlu0 %v3086, 1
        %v3120 = vpop.permute.xlu0 %3119
        %3121 = vrot.lane.b32.xlu0 %v3087, 1
        %v3122 = vpop.permute.xlu0 %3121
        %3123 = vrot.lane.b32.xlu0 %v3088, 1
        %v3124 = vpop.permute.xlu0 %3123
        %v3125 = vsel %vm779, %v3102, %v3104
        %v3126 = vsel %vm779, %v3104, %v3106
        %v3127 = vsel %vm779, %v3108, %v3110
        %v3128 = vsel %vm779, %v3110, %v3112
        %v3129 = vsel %vm779, %v3114, %v3116
        %v3130 = vsel %vm779, %v3116, %v3118
        %v3131 = vsel %vm779, %v3120, %v3122
        %v3132 = vsel %vm779, %v3122, %v3124
        %3141 = vst [vmem:[#allocation3 + $0x180] sm:$0xff] %v3125
        %3142 = vst [vmem:[#allocation3 + $0x188] sm:$0xff] %v3126
        %3143 = vst [vmem:[#allocation3 + $0x1a0] sm:$0xff] %v3127
        %3144 = vst [vmem:[#allocation3 + $0x1a8] sm:$0xff] %v3128
        %3145 = vst [vmem:[#allocation3 + $0x1c0] sm:$0xff] %v3129
        %3146 = vst [vmem:[#allocation3 + $0x1c8] sm:$0xff] %v3130
        %3147 = vst [vmem:[#allocation3 + $0x1e0] sm:$0xff] %v3131
        %3148 = vst [vmem:[#allocation3 + $0x1e8] sm:$0xff] %v3132
        %v3149 = vld [vmem:[#allocation2 + $0x8] sm:$0xff]
        %v3150 = vld [vmem:[#allocation2 + $0x10] sm:$0xff]
        %v3151 = vld [vmem:[#allocation2 + $0x48] sm:$0xff]
        %v3152 = vld [vmem:[#allocation2 + $0x50] sm:$0xff]
        %v3153 = vld [vmem:[#allocation2 + $0x88] sm:$0xff]
        %v3154 = vld [vmem:[#allocation2 + $0x90] sm:$0xff]
        %v3155 = vld [vmem:[#allocation2 + $0xc8] sm:$0xff]
        %v3156 = vld [vmem:[#allocation2 + $0xd0] sm:$0xff]
        %3157 = vst [vmem:[#allocation3 + $0x200] sm:$0xff] %v3149
        %3158 = vst [vmem:[#allocation3 + $0x208] sm:$0xff] %v3150
        %3159 = vst [vmem:[#allocation3 + $0x220] sm:$0xff] %v3151
        %3160 = vst [vmem:[#allocation3 + $0x228] sm:$0xff] %v3152
        %3161 = vst [vmem:[#allocation3 + $0x240] sm:$0xff] %v3153
        %3162 = vst [vmem:[#allocation3 + $0x248] sm:$0xff] %v3154
        %3163 = vst [vmem:[#allocation3 + $0x260] sm:$0xff] %v3155
        %3164 = vst [vmem:[#allocation3 + $0x268] sm:$0xff] %v3156
        %v3165 = vld [vmem:[#allocation2 + $0x8] sm:$0xff]
        %v3166 = vld [vmem:[#allocation2 + $0x10] sm:$0xff]
        %v3167 = vld [vmem:[#allocation2 + $0x18] sm:$0xff]
        %v3168 = vld [vmem:[#allocation2 + $0x48] sm:$0xff]
        %v3169 = vld [vmem:[#allocation2 + $0x50] sm:$0xff]
        %v3170 = vld [vmem:[#allocation2 + $0x58] sm:$0xff]
        %v3171 = vld [vmem:[#allocation2 + $0x88] sm:$0xff]
        %v3172 = vld [vmem:[#allocation2 + $0x90] sm:$0xff]
        %v3173 = vld [vmem:[#allocation2 + $0x98] sm:$0xff]
        %v3174 = vld [vmem:[#allocation2 + $0xc8] sm:$0xff]
        %v3175 = vld [vmem:[#allocation2 + $0xd0] sm:$0xff]
        %v3176 = vld [vmem:[#allocation2 + $0xd8] sm:$0xff]
        %v3177 = vsel %vm837, %v3165, 0
        %v3178 = vsel %vm838, %v3166, 0
        %v3179 = vsel %vm839, %v3167, 0
        %v3180 = vsel %vm837, %v3168, 0
        %v3181 = vsel %vm838, %v3169, 0
        %v3182 = vsel %vm839, %v3170, 0
        %v3183 = vsel %vm837, %v3171, 0
        %v3184 = vsel %vm838, %v3172, 0
        %v3185 = vsel %vm839, %v3173, 0
        %v3186 = vsel %vm837, %v3174, 0
        %v3187 = vsel %vm838, %v3175, 0
        %v3188 = vsel %vm839, %v3176, 0
        %3201 = vrot.lane.b32.xlu0 %v3177, 127
        %v3202 = vpop.permute.xlu0 %3201
        %3203 = vrot.lane.b32.xlu0 %v3178, 127
        %v3204 = vpop.permute.xlu0 %3203
        %3205 = vrot.lane.b32.xlu0 %v3179, 127
        %v3206 = vpop.permute.xlu0 %3205
        %3207 = vrot.lane.b32.xlu0 %v3180, 127
        %v3208 = vpop.permute.xlu0 %3207
        %3209 = vrot.lane.b32.xlu0 %v3181, 127
        %v3210 = vpop.permute.xlu0 %3209
        %3211 = vrot.lane.b32.xlu0 %v3182, 127
        %v3212 = vpop.permute.xlu0 %3211
        %3213 = vrot.lane.b32.xlu0 %v3183, 127
        %v3214 = vpop.permute.xlu0 %3213
        %3215 = vrot.lane.b32.xlu0 %v3184, 127
        %v3216 = vpop.permute.xlu0 %3215
        %3217 = vrot.lane.b32.xlu0 %v3185, 127
        %v3218 = vpop.permute.xlu0 %3217
        %3219 = vrot.lane.b32.xlu0 %v3186, 127
        %v3220 = vpop.permute.xlu0 %3219
        %3221 = vrot.lane.b32.xlu0 %v3187, 127
        %v3222 = vpop.permute.xlu0 %3221
        %3223 = vrot.lane.b32.xlu0 %v3188, 127
        %v3224 = vpop.permute.xlu0 %3223
        %v3225 = vsel %vm726, %v3202, %v3204
        %v3226 = vsel %vm726, %v3204, %v3206
        %v3227 = vsel %vm726, %v3208, %v3210
        %v3228 = vsel %vm726, %v3210, %v3212
        %v3229 = vsel %vm726, %v3214, %v3216
        %v3230 = vsel %vm726, %v3216, %v3218
        %v3231 = vsel %vm726, %v3220, %v3222
        %v3232 = vsel %vm726, %v3222, %v3224
        %3241 = vst [vmem:[#allocation3 + $0x280] sm:$0xff] %v3225
        %3242 = vst [vmem:[#allocation3 + $0x288] sm:$0xff] %v3226
        %3243 = vst [vmem:[#allocation3 + $0x2a0] sm:$0xff] %v3227
        %3244 = vst [vmem:[#allocation3 + $0x2a8] sm:$0xff] %v3228
        %3245 = vst [vmem:[#allocation3 + $0x2c0] sm:$0xff] %v3229
        %3246 = vst [vmem:[#allocation3 + $0x2c8] sm:$0xff] %v3230
        %3247 = vst [vmem:[#allocation3 + $0x2e0] sm:$0xff] %v3231
        %3248 = vst [vmem:[#allocation3 + $0x2e8] sm:$0xff] %v3232
        %v3249 = vld [vmem:[#allocation2 + $0x8] sm:$0xff]
        %v3250 = vld [vmem:[#allocation2 + $0x10] sm:$0xff]
        %v3251 = vld [vmem:[#allocation2 + $0x18] sm:$0xff]
        %v3252 = vld [vmem:[#allocation2 + $0x48] sm:$0xff]
        %v3253 = vld [vmem:[#allocation2 + $0x50] sm:$0xff]
        %v3254 = vld [vmem:[#allocation2 + $0x58] sm:$0xff]
        %v3255 = vld [vmem:[#allocation2 + $0x88] sm:$0xff]
        %v3256 = vld [vmem:[#allocation2 + $0x90] sm:$0xff]
        %v3257 = vld [vmem:[#allocation2 + $0x98] sm:$0xff]
        %v3258 = vld [vmem:[#allocation2 + $0xc8] sm:$0xff]
        %v3259 = vld [vmem:[#allocation2 + $0xd0] sm:$0xff]
        %v3260 = vld [vmem:[#allocation2 + $0xd8] sm:$0xff]
        %v3261 = vsel %vm929, %v3249, 0
        %v3262 = vsel %vm930, %v3250, 0
        %v3263 = vsel %vm931, %v3251, 0
        %v3264 = vsel %vm929, %v3252, 0
        %v3265 = vsel %vm930, %v3253, 0
        %v3266 = vsel %vm931, %v3254, 0
        %v3267 = vsel %vm929, %v3255, 0
        %v3268 = vsel %vm930, %v3256, 0
        %v3269 = vsel %vm931, %v3257, 0
        %v3270 = vsel %vm929, %v3258, 0
        %v3271 = vsel %vm930, %v3259, 0
        %v3272 = vsel %vm931, %v3260, 0
        %3285 = vrot.lane.b32.xlu0 %v3261, 113
        %v3286 = vpop.permute.xlu0 %3285
        %3287 = vrot.lane.b32.xlu0 %v3262, 113
        %v3288 = vpop.permute.xlu0 %3287
        %3289 = vrot.lane.b32.xlu0 %v3263, 113
        %v3290 = vpop.permute.xlu0 %3289
        %3291 = vrot.lane.b32.xlu0 %v3264, 113
        %v3292 = vpop.permute.xlu0 %3291
        %3293 = vrot.lane.b32.xlu0 %v3265, 113
        %v3294 = vpop.permute.xlu0 %3293
        %3295 = vrot.lane.b32.xlu0 %v3266, 113
        %v3296 = vpop.permute.xlu0 %3295
        %3297 = vrot.lane.b32.xlu0 %v3267, 113
        %v3298 = vpop.permute.xlu0 %3297
        %3299 = vrot.lane.b32.xlu0 %v3268, 113
        %v3300 = vpop.permute.xlu0 %3299
        %3301 = vrot.lane.b32.xlu0 %v3269, 113
        %v3302 = vpop.permute.xlu0 %3301
        %3303 = vrot.lane.b32.xlu0 %v3270, 113
        %v3304 = vpop.permute.xlu0 %3303
        %3305 = vrot.lane.b32.xlu0 %v3271, 113
        %v3306 = vpop.permute.xlu0 %3305
        %3307 = vrot.lane.b32.xlu0 %v3272, 113
        %v3308 = vpop.permute.xlu0 %3307
        %v3309 = vsel %vm632, %v3286, %v3288
        %v3310 = vsel %vm632, %v3288, %v3290
        %v3311 = vsel %vm632, %v3292, %v3294
        %v3312 = vsel %vm632, %v3294, %v3296
        %v3313 = vsel %vm632, %v3298, %v3300
        %v3314 = vsel %vm632, %v3300, %v3302
        %v3315 = vsel %vm632, %v3304, %v3306
        %v3316 = vsel %vm632, %v3306, %v3308
        %3325 = vst [vmem:[#allocation3 + $0x300] sm:$0xff] %v3309
        %3326 = vst [vmem:[#allocation3 + $0x308] sm:$0xff] %v3310
        %3327 = vst [vmem:[#allocation3 + $0x320] sm:$0xff] %v3311
        %3328 = vst [vmem:[#allocation3 + $0x328] sm:$0xff] %v3312
        %3329 = vst [vmem:[#allocation3 + $0x340] sm:$0xff] %v3313
        %3330 = vst [vmem:[#allocation3 + $0x348] sm:$0xff] %v3314
        %3331 = vst [vmem:[#allocation3 + $0x360] sm:$0xff] %v3315
        %3332 = vst [vmem:[#allocation3 + $0x368] sm:$0xff] %v3316
        %v3333 = vld [vmem:[#allocation2 + $0x8] sm:$0xff]
        %v3334 = vld [vmem:[#allocation2 + $0x10] sm:$0xff]
        %v3335 = vld [vmem:[#allocation2 + $0x18] sm:$0xff]
        %v3336 = vld [vmem:[#allocation2 + $0x48] sm:$0xff]
        %v3337 = vld [vmem:[#allocation2 + $0x50] sm:$0xff]
        %v3338 = vld [vmem:[#allocation2 + $0x58] sm:$0xff]
        %v3339 = vld [vmem:[#allocation2 + $0x88] sm:$0xff]
        %v3340 = vld [vmem:[#allocation2 + $0x90] sm:$0xff]
        %v3341 = vld [vmem:[#allocation2 + $0x98] sm:$0xff]
        %v3342 = vld [vmem:[#allocation2 + $0xc8] sm:$0xff]
        %v3343 = vld [vmem:[#allocation2 + $0xd0] sm:$0xff]
        %v3344 = vld [vmem:[#allocation2 + $0xd8] sm:$0xff]
        %3357 = vrot.lane.b32.xlu0 %v3333, 112
        %v3358 = vpop.permute.xlu0 %3357
        %3359 = vrot.lane.b32.xlu0 %v3334, 112
        %v3360 = vpop.permute.xlu0 %3359
        %3361 = vrot.lane.b32.xlu0 %v3335, 112
        %v3362 = vpop.permute.xlu0 %3361
        %3363 = vrot.lane.b32.xlu0 %v3336, 112
        %v3364 = vpop.permute.xlu0 %3363
        %3365 = vrot.lane.b32.xlu0 %v3337, 112
        %v3366 = vpop.permute.xlu0 %3365
        %3367 = vrot.lane.b32.xlu0 %v3338, 112
        %v3368 = vpop.permute.xlu0 %3367
        %3369 = vrot.lane.b32.xlu0 %v3339, 112
        %v3370 = vpop.permute.xlu0 %3369
        %3371 = vrot.lane.b32.xlu0 %v3340, 112
        %v3372 = vpop.permute.xlu0 %3371
        %3373 = vrot.lane.b32.xlu0 %v3341, 112
        %v3374 = vpop.permute.xlu0 %3373
        %3375 = vrot.lane.b32.xlu0 %v3342, 112
        %v3376 = vpop.permute.xlu0 %3375
        %3377 = vrot.lane.b32.xlu0 %v3343, 112
        %v3378 = vpop.permute.xlu0 %3377
        %3379 = vrot.lane.b32.xlu0 %v3344, 112
        %v3380 = vpop.permute.xlu0 %3379
        %v3381 = vsel %vm1052, %v3358, %v3360
        %v3382 = vsel %vm1052, %v3360, %v3362
        %v3383 = vsel %vm1052, %v3364, %v3366
        %v3384 = vsel %vm1052, %v3366, %v3368
        %v3385 = vsel %vm1052, %v3370, %v3372
        %v3386 = vsel %vm1052, %v3372, %v3374
        %v3387 = vsel %vm1052, %v3376, %v3378
        %v3388 = vsel %vm1052, %v3378, %v3380
        %3397 = vst [vmem:[#allocation3 + $0x380] sm:$0xff] %v3381
        %3398 = vst [vmem:[#allocation3 + $0x388] sm:$0xff] %v3382
        %3399 = vst [vmem:[#allocation3 + $0x3a0] sm:$0xff] %v3383
        %3400 = vst [vmem:[#allocation3 + $0x3a8] sm:$0xff] %v3384
        %3401 = vst [vmem:[#allocation3 + $0x3c0] sm:$0xff] %v3385
        %3402 = vst [vmem:[#allocation3 + $0x3c8] sm:$0xff] %v3386
        %3403 = vst [vmem:[#allocation3 + $0x3e0] sm:$0xff] %v3387
        %3404 = vst [vmem:[#allocation3 + $0x3e8] sm:$0xff] %v3388
        %v3405 = vld [vmem:[#allocation2 + $0x8] sm:$0xff]
        %v3406 = vld [vmem:[#allocation2 + $0x10] sm:$0xff]
        %v3407 = vld [vmem:[#allocation2 + $0x18] sm:$0xff]
        %v3408 = vld [vmem:[#allocation2 + $0x48] sm:$0xff]
        %v3409 = vld [vmem:[#allocation2 + $0x50] sm:$0xff]
        %v3410 = vld [vmem:[#allocation2 + $0x58] sm:$0xff]
        %v3411 = vld [vmem:[#allocation2 + $0x88] sm:$0xff]
        %v3412 = vld [vmem:[#allocation2 + $0x90] sm:$0xff]
        %v3413 = vld [vmem:[#allocation2 + $0x98] sm:$0xff]
        %v3414 = vld [vmem:[#allocation2 + $0xc8] sm:$0xff]
        %v3415 = vld [vmem:[#allocation2 + $0xd0] sm:$0xff]
        %v3416 = vld [vmem:[#allocation2 + $0xd8] sm:$0xff]
        %v3417 = vsel %vm1094, %v3405, 0
        %v3418 = vsel %vm1095, %v3406, 0
        %v3419 = vsel %vm1096, %v3407, 0
        %v3420 = vsel %vm1094, %v3408, 0
        %v3421 = vsel %vm1095, %v3409, 0
        %v3422 = vsel %vm1096, %v3410, 0
        %v3423 = vsel %vm1094, %v3411, 0
        %v3424 = vsel %vm1095, %v3412, 0
        %v3425 = vsel %vm1096, %v3413, 0
        %v3426 = vsel %vm1094, %v3414, 0
        %v3427 = vsel %vm1095, %v3415, 0
        %v3428 = vsel %vm1096, %v3416, 0
        %3441 = vrot.lane.b32.xlu0 %v3417, 111
        %v3442 = vpop.permute.xlu0 %3441
        %3443 = vrot.lane.b32.xlu0 %v3418, 111
        %v3444 = vpop.permute.xlu0 %3443
        %3445 = vrot.lane.b32.xlu0 %v3419, 111
        %v3446 = vpop.permute.xlu0 %3445
        %3447 = vrot.lane.b32.xlu0 %v3420, 111
        %v3448 = vpop.permute.xlu0 %3447
        %3449 = vrot.lane.b32.xlu0 %v3421, 111
        %v3450 = vpop.permute.xlu0 %3449
        %3451 = vrot.lane.b32.xlu0 %v3422, 111
        %v3452 = vpop.permute.xlu0 %3451
        %3453 = vrot.lane.b32.xlu0 %v3423, 111
        %v3454 = vpop.permute.xlu0 %3453
        %3455 = vrot.lane.b32.xlu0 %v3424, 111
        %v3456 = vpop.permute.xlu0 %3455
        %3457 = vrot.lane.b32.xlu0 %v3425, 111
        %v3458 = vpop.permute.xlu0 %3457
        %3459 = vrot.lane.b32.xlu0 %v3426, 111
        %v3460 = vpop.permute.xlu0 %3459
        %3461 = vrot.lane.b32.xlu0 %v3427, 111
        %v3462 = vpop.permute.xlu0 %3461
        %3463 = vrot.lane.b32.xlu0 %v3428, 111
        %v3464 = vpop.permute.xlu0 %3463
        %v3465 = vsel %vm451, %v3442, %v3444
        %v3466 = vsel %vm451, %v3444, %v3446
        %v3467 = vsel %vm451, %v3448, %v3450
        %v3468 = vsel %vm451, %v3450, %v3452
        %v3469 = vsel %vm451, %v3454, %v3456
        %v3470 = vsel %vm451, %v3456, %v3458
        %v3471 = vsel %vm451, %v3460, %v3462
        %v3472 = vsel %vm451, %v3462, %v3464
        %3481 = vst [vmem:[#allocation3 + $0x400] sm:$0xff] %v3465
        %3482 = vst [vmem:[#allocation3 + $0x408] sm:$0xff] %v3466
        %3483 = vst [vmem:[#allocation3 + $0x420] sm:$0xff] %v3467
        %3484 = vst [vmem:[#allocation3 + $0x428] sm:$0xff] %v3468
        %3485 = vst [vmem:[#allocation3 + $0x440] sm:$0xff] %v3469
        %3486 = vst [vmem:[#allocation3 + $0x448] sm:$0xff] %v3470
        %3487 = vst [vmem:[#allocation3 + $0x460] sm:$0xff] %v3471
        %3488 = vst [vmem:[#allocation3 + $0x468] sm:$0xff] %v3472
        %v3489 = vld [vmem:[#allocation2 + $0x20] sm:$0xff]
        %v3490 = vld [vmem:[#allocation2 + $0x28] sm:$0xff]
        %v3491 = vld [vmem:[#allocation2 + $0x30] sm:$0xff]
        %v3492 = vld [vmem:[#allocation2 + $0x60] sm:$0xff]
        %v3493 = vld [vmem:[#allocation2 + $0x68] sm:$0xff]
        %v3494 = vld [vmem:[#allocation2 + $0x70] sm:$0xff]
        %v3495 = vld [vmem:[#allocation2 + $0xa0] sm:$0xff]
        %v3496 = vld [vmem:[#allocation2 + $0xa8] sm:$0xff]
        %v3497 = vld [vmem:[#allocation2 + $0xb0] sm:$0xff]
        %v3498 = vld [vmem:[#allocation2 + $0xe0] sm:$0xff]
        %v3499 = vld [vmem:[#allocation2 + $0xe8] sm:$0xff]
        %v3500 = vld [vmem:[#allocation2 + $0xf0] sm:$0xff]
        %v3501 = vsel %vm453, %v3489, 0
        %v3502 = vsel %vm454, %v3490, 0
        %v3503 = vsel %vm455, %v3491, 0
        %v3504 = vsel %vm453, %v3492, 0
        %v3505 = vsel %vm454, %v3493, 0
        %v3506 = vsel %vm455, %v3494, 0
        %v3507 = vsel %vm453, %v3495, 0
        %v3508 = vsel %vm454, %v3496, 0
        %v3509 = vsel %vm455, %v3497, 0
        %v3510 = vsel %vm453, %v3498, 0
        %v3511 = vsel %vm454, %v3499, 0
        %v3512 = vsel %vm455, %v3500, 0
        %3525 = vrot.lane.b32.xlu0 %v3501, 17
        %v3526 = vpop.permute.xlu0 %3525
        %3527 = vrot.lane.b32.xlu0 %v3502, 17
        %v3528 = vpop.permute.xlu0 %3527
        %3529 = vrot.lane.b32.xlu0 %v3503, 17
        %v3530 = vpop.permute.xlu0 %3529
        %3531 = vrot.lane.b32.xlu0 %v3504, 17
        %v3532 = vpop.permute.xlu0 %3531
        %3533 = vrot.lane.b32.xlu0 %v3505, 17
        %v3534 = vpop.permute.xlu0 %3533
        %3535 = vrot.lane.b32.xlu0 %v3506, 17
        %v3536 = vpop.permute.xlu0 %3535
        %3537 = vrot.lane.b32.xlu0 %v3507, 17
        %v3538 = vpop.permute.xlu0 %3537
        %3539 = vrot.lane.b32.xlu0 %v3508, 17
        %v3540 = vpop.permute.xlu0 %3539
        %3541 = vrot.lane.b32.xlu0 %v3509, 17
        %v3542 = vpop.permute.xlu0 %3541
        %3543 = vrot.lane.b32.xlu0 %v3510, 17
        %v3544 = vpop.permute.xlu0 %3543
        %3545 = vrot.lane.b32.xlu0 %v3511, 17
        %v3546 = vpop.permute.xlu0 %3545
        %3547 = vrot.lane.b32.xlu0 %v3512, 17
        %v3548 = vpop.permute.xlu0 %3547
        %v3549 = vsel %vm504, %v3526, %v3528
        %v3550 = vsel %vm504, %v3528, %v3530
        %v3551 = vsel %vm504, %v3532, %v3534
        %v3552 = vsel %vm504, %v3534, %v3536
        %v3553 = vsel %vm504, %v3538, %v3540
        %v3554 = vsel %vm504, %v3540, %v3542
        %v3555 = vsel %vm504, %v3544, %v3546
        %v3556 = vsel %vm504, %v3546, %v3548
        %3565 = vst [vmem:[#allocation3 + $0x10] sm:$0xff] %v3549
        %3566 = vst [vmem:[#allocation3 + $0x18] sm:$0xff] %v3550
        %3567 = vst [vmem:[#allocation3 + $0x30] sm:$0xff] %v3551
        %3568 = vst [vmem:[#allocation3 + $0x38] sm:$0xff] %v3552
        %3569 = vst [vmem:[#allocation3 + $0x50] sm:$0xff] %v3553
        %3570 = vst [vmem:[#allocation3 + $0x58] sm:$0xff] %v3554
        %3571 = vst [vmem:[#allocation3 + $0x70] sm:$0xff] %v3555
        %3572 = vst [vmem:[#allocation3 + $0x78] sm:$0xff] %v3556
        %v3573 = vld [vmem:[#allocation2 + $0x20] sm:$0xff]
        %v3574 = vld [vmem:[#allocation2 + $0x28] sm:$0xff]
        %v3575 = vld [vmem:[#allocation2 + $0x30] sm:$0xff]
        %v3576 = vld [vmem:[#allocation2 + $0x60] sm:$0xff]
        %v3577 = vld [vmem:[#allocation2 + $0x68] sm:$0xff]
        %v3578 = vld [vmem:[#allocation2 + $0x70] sm:$0xff]
        %v3579 = vld [vmem:[#allocation2 + $0xa0] sm:$0xff]
        %v3580 = vld [vmem:[#allocation2 + $0xa8] sm:$0xff]
        %v3581 = vld [vmem:[#allocation2 + $0xb0] sm:$0xff]
        %v3582 = vld [vmem:[#allocation2 + $0xe0] sm:$0xff]
        %v3583 = vld [vmem:[#allocation2 + $0xe8] sm:$0xff]
        %v3584 = vld [vmem:[#allocation2 + $0xf0] sm:$0xff]
        %3597 = vrot.lane.b32.xlu0 %v3573, 16
        %v3598 = vpop.permute.xlu0 %3597
        %3599 = vrot.lane.b32.xlu0 %v3574, 16
        %v3600 = vpop.permute.xlu0 %3599
        %3601 = vrot.lane.b32.xlu0 %v3575, 16
        %v3602 = vpop.permute.xlu0 %3601
        %3603 = vrot.lane.b32.xlu0 %v3576, 16
        %v3604 = vpop.permute.xlu0 %3603
        %3605 = vrot.lane.b32.xlu0 %v3577, 16
        %v3606 = vpop.permute.xlu0 %3605
        %3607 = vrot.lane.b32.xlu0 %v3578, 16
        %v3608 = vpop.permute.xlu0 %3607
        %3609 = vrot.lane.b32.xlu0 %v3579, 16
        %v3610 = vpop.permute.xlu0 %3609
        %3611 = vrot.lane.b32.xlu0 %v3580, 16
        %v3612 = vpop.permute.xlu0 %3611
        %3613 = vrot.lane.b32.xlu0 %v3581, 16
        %v3614 = vpop.permute.xlu0 %3613
        %3615 = vrot.lane.b32.xlu0 %v3582, 16
        %v3616 = vpop.permute.xlu0 %3615
        %3617 = vrot.lane.b32.xlu0 %v3583, 16
        %v3618 = vpop.permute.xlu0 %3617
        %3619 = vrot.lane.b32.xlu0 %v3584, 16
        %v3620 = vpop.permute.xlu0 %3619
        %v3621 = vsel %vm577, %v3598, %v3600
        %v3622 = vsel %vm577, %v3600, %v3602
        %v3623 = vsel %vm577, %v3604, %v3606
        %v3624 = vsel %vm577, %v3606, %v3608
        %v3625 = vsel %vm577, %v3610, %v3612
        %v3626 = vsel %vm577, %v3612, %v3614
        %v3627 = vsel %vm577, %v3616, %v3618
        %v3628 = vsel %vm577, %v3618, %v3620
        %3637 = vst [vmem:[#allocation3 + $0x90] sm:$0xff] %v3621
        %3638 = vst [vmem:[#allocation3 + $0x98] sm:$0xff] %v3622
        %3639 = vst [vmem:[#allocation3 + $0xb0] sm:$0xff] %v3623
        %3640 = vst [vmem:[#allocation3 + $0xb8] sm:$0xff] %v3624
        %3641 = vst [vmem:[#allocation3 + $0xd0] sm:$0xff] %v3625
        %3642 = vst [vmem:[#allocation3 + $0xd8] sm:$0xff] %v3626
        %3643 = vst [vmem:[#allocation3 + $0xf0] sm:$0xff] %v3627
        %3644 = vst [vmem:[#allocation3 + $0xf8] sm:$0xff] %v3628
        %v3645 = vld [vmem:[#allocation2 + $0x20] sm:$0xff]
        %v3646 = vld [vmem:[#allocation2 + $0x28] sm:$0xff]
        %v3647 = vld [vmem:[#allocation2 + $0x30] sm:$0xff]
        %v3648 = vld [vmem:[#allocation2 + $0x60] sm:$0xff]
        %v3649 = vld [vmem:[#allocation2 + $0x68] sm:$0xff]
        %v3650 = vld [vmem:[#allocation2 + $0x70] sm:$0xff]
        %v3651 = vld [vmem:[#allocation2 + $0xa0] sm:$0xff]
        %v3652 = vld [vmem:[#allocation2 + $0xa8] sm:$0xff]
        %v3653 = vld [vmem:[#allocation2 + $0xb0] sm:$0xff]
        %v3654 = vld [vmem:[#allocation2 + $0xe0] sm:$0xff]
        %v3655 = vld [vmem:[#allocation2 + $0xe8] sm:$0xff]
        %v3656 = vld [vmem:[#allocation2 + $0xf0] sm:$0xff]
        %v3657 = vsel %vm634, %v3645, 0
        %v3658 = vsel %vm635, %v3646, 0
        %v3659 = vsel %vm636, %v3647, 0
        %v3660 = vsel %vm634, %v3648, 0
        %v3661 = vsel %vm635, %v3649, 0
        %v3662 = vsel %vm636, %v3650, 0
        %v3663 = vsel %vm634, %v3651, 0
        %v3664 = vsel %vm635, %v3652, 0
        %v3665 = vsel %vm636, %v3653, 0
        %v3666 = vsel %vm634, %v3654, 0
        %v3667 = vsel %vm635, %v3655, 0
        %v3668 = vsel %vm636, %v3656, 0
        %3681 = vrot.lane.b32.xlu0 %v3657, 15
        %v3682 = vpop.permute.xlu0 %3681
        %3683 = vrot.lane.b32.xlu0 %v3658, 15
        %v3684 = vpop.permute.xlu0 %3683
        %3685 = vrot.lane.b32.xlu0 %v3659, 15
        %v3686 = vpop.permute.xlu0 %3685
        %3687 = vrot.lane.b32.xlu0 %v3660, 15
        %v3688 = vpop.permute.xlu0 %3687
        %3689 = vrot.lane.b32.xlu0 %v3661, 15
        %v3690 = vpop.permute.xlu0 %3689
        %3691 = vrot.lane.b32.xlu0 %v3662, 15
        %v3692 = vpop.permute.xlu0 %3691
        %3693 = vrot.lane.b32.xlu0 %v3663, 15
        %v3694 = vpop.permute.xlu0 %3693
        %3695 = vrot.lane.b32.xlu0 %v3664, 15
        %v3696 = vpop.permute.xlu0 %3695
        %3697 = vrot.lane.b32.xlu0 %v3665, 15
        %v3698 = vpop.permute.xlu0 %3697
        %3699 = vrot.lane.b32.xlu0 %v3666, 15
        %v3700 = vpop.permute.xlu0 %3699
        %3701 = vrot.lane.b32.xlu0 %v3667, 15
        %v3702 = vpop.permute.xlu0 %3701
        %3703 = vrot.lane.b32.xlu0 %v3668, 15
        %v3704 = vpop.permute.xlu0 %3703
        %v3705 = vsel %vm685, %v3682, %v3684
        %v3706 = vsel %vm685, %v3684, %v3686
        %v3707 = vsel %vm685, %v3688, %v3690
        %v3708 = vsel %vm685, %v3690, %v3692
        %v3709 = vsel %vm685, %v3694, %v3696
        %v3710 = vsel %vm685, %v3696, %v3698
        %v3711 = vsel %vm685, %v3700, %v3702
        %v3712 = vsel %vm685, %v3702, %v3704
        %3721 = vst [vmem:[#allocation3 + $0x110] sm:$0xff] %v3705
        %3722 = vst [vmem:[#allocation3 + $0x118] sm:$0xff] %v3706
        %3723 = vst [vmem:[#allocation3 + $0x130] sm:$0xff] %v3707
        %3724 = vst [vmem:[#allocation3 + $0x138] sm:$0xff] %v3708
        %3725 = vst [vmem:[#allocation3 + $0x150] sm:$0xff] %v3709
        %3726 = vst [vmem:[#allocation3 + $0x158] sm:$0xff] %v3710
        %3727 = vst [vmem:[#allocation3 + $0x170] sm:$0xff] %v3711
        %3728 = vst [vmem:[#allocation3 + $0x178] sm:$0xff] %v3712
        %v3729 = vld [vmem:[#allocation2 + $0x20] sm:$0xff]
        %v3730 = vld [vmem:[#allocation2 + $0x28] sm:$0xff]
        %v3731 = vld [vmem:[#allocation2 + $0x30] sm:$0xff]
        %v3732 = vld [vmem:[#allocation2 + $0x60] sm:$0xff]
        %v3733 = vld [vmem:[#allocation2 + $0x68] sm:$0xff]
        %v3734 = vld [vmem:[#allocation2 + $0x70] sm:$0xff]
        %v3735 = vld [vmem:[#allocation2 + $0xa0] sm:$0xff]
        %v3736 = vld [vmem:[#allocation2 + $0xa8] sm:$0xff]
        %v3737 = vld [vmem:[#allocation2 + $0xb0] sm:$0xff]
        %v3738 = vld [vmem:[#allocation2 + $0xe0] sm:$0xff]
        %v3739 = vld [vmem:[#allocation2 + $0xe8] sm:$0xff]
        %v3740 = vld [vmem:[#allocation2 + $0xf0] sm:$0xff]
        %v3741 = vsel %vm728, %v3729, 0
        %v3742 = vsel %vm729, %v3730, 0
        %v3743 = vsel %vm730, %v3731, 0
        %v3744 = vsel %vm728, %v3732, 0
        %v3745 = vsel %vm729, %v3733, 0
        %v3746 = vsel %vm730, %v3734, 0
        %v3747 = vsel %vm728, %v3735, 0
        %v3748 = vsel %vm729, %v3736, 0
        %v3749 = vsel %vm730, %v3737, 0
        %v3750 = vsel %vm728, %v3738, 0
        %v3751 = vsel %vm729, %v3739, 0
        %v3752 = vsel %vm730, %v3740, 0
        %3765 = vrot.lane.b32.xlu0 %v3741, 1
        %v3766 = vpop.permute.xlu0 %3765
        %3767 = vrot.lane.b32.xlu0 %v3742, 1
        %v3768 = vpop.permute.xlu0 %3767
        %3769 = vrot.lane.b32.xlu0 %v3743, 1
        %v3770 = vpop.permute.xlu0 %3769
        %3771 = vrot.lane.b32.xlu0 %v3744, 1
        %v3772 = vpop.permute.xlu0 %3771
        %3773 = vrot.lane.b32.xlu0 %v3745, 1
        %v3774 = vpop.permute.xlu0 %3773
        %3775 = vrot.lane.b32.xlu0 %v3746, 1
        %v3776 = vpop.permute.xlu0 %3775
        %3777 = vrot.lane.b32.xlu0 %v3747, 1
        %v3778 = vpop.permute.xlu0 %3777
        %3779 = vrot.lane.b32.xlu0 %v3748, 1
        %v3780 = vpop.permute.xlu0 %3779
        %3781 = vrot.lane.b32.xlu0 %v3749, 1
        %v3782 = vpop.permute.xlu0 %3781
        %3783 = vrot.lane.b32.xlu0 %v3750, 1
        %v3784 = vpop.permute.xlu0 %3783
        %3785 = vrot.lane.b32.xlu0 %v3751, 1
        %v3786 = vpop.permute.xlu0 %3785
        %3787 = vrot.lane.b32.xlu0 %v3752, 1
        %v3788 = vpop.permute.xlu0 %3787
        %v3789 = vsel %vm779, %v3766, %v3768
        %v3790 = vsel %vm779, %v3768, %v3770
        %v3791 = vsel %vm779, %v3772, %v3774
        %v3792 = vsel %vm779, %v3774, %v3776
        %v3793 = vsel %vm779, %v3778, %v3780
        %v3794 = vsel %vm779, %v3780, %v3782
        %v3795 = vsel %vm779, %v3784, %v3786
        %v3796 = vsel %vm779, %v3786, %v3788
        %3805 = vst [vmem:[#allocation3 + $0x190] sm:$0xff] %v3789
        %3806 = vst [vmem:[#allocation3 + $0x198] sm:$0xff] %v3790
        %3807 = vst [vmem:[#allocation3 + $0x1b0] sm:$0xff] %v3791
        %3808 = vst [vmem:[#allocation3 + $0x1b8] sm:$0xff] %v3792
        %3809 = vst [vmem:[#allocation3 + $0x1d0] sm:$0xff] %v3793
        %3810 = vst [vmem:[#allocation3 + $0x1d8] sm:$0xff] %v3794
        %3811 = vst [vmem:[#allocation3 + $0x1f0] sm:$0xff] %v3795
        %3812 = vst [vmem:[#allocation3 + $0x1f8] sm:$0xff] %v3796
        %v3813 = vld [vmem:[#allocation2 + $0x28] sm:$0xff]
        %v3814 = vld [vmem:[#allocation2 + $0x30] sm:$0xff]
        %v3815 = vld [vmem:[#allocation2 + $0x68] sm:$0xff]
        %v3816 = vld [vmem:[#allocation2 + $0x70] sm:$0xff]
        %v3817 = vld [vmem:[#allocation2 + $0xa8] sm:$0xff]
        %v3818 = vld [vmem:[#allocation2 + $0xb0] sm:$0xff]
        %v3819 = vld [vmem:[#allocation2 + $0xe8] sm:$0xff]
        %v3820 = vld [vmem:[#allocation2 + $0xf0] sm:$0xff]
        %3821 = vst [vmem:[#allocation3 + $0x210] sm:$0xff] %v3813
        %3822 = vst [vmem:[#allocation3 + $0x218] sm:$0xff] %v3814
        %3823 = vst [vmem:[#allocation3 + $0x230] sm:$0xff] %v3815
        %3824 = vst [vmem:[#allocation3 + $0x238] sm:$0xff] %v3816
        %3825 = vst [vmem:[#allocation3 + $0x250] sm:$0xff] %v3817
        %3826 = vst [vmem:[#allocation3 + $0x258] sm:$0xff] %v3818
        %3827 = vst [vmem:[#allocation3 + $0x270] sm:$0xff] %v3819
        %3828 = vst [vmem:[#allocation3 + $0x278] sm:$0xff] %v3820
        %v3829 = vld [vmem:[#allocation2 + $0x28] sm:$0xff]
        %v3830 = vld [vmem:[#allocation2 + $0x30] sm:$0xff]
        %v3831 = vld [vmem:[#allocation2 + $0x38] sm:$0xff]
        %v3832 = vld [vmem:[#allocation2 + $0x68] sm:$0xff]
        %v3833 = vld [vmem:[#allocation2 + $0x70] sm:$0xff]
        %v3834 = vld [vmem:[#allocation2 + $0x78] sm:$0xff]
        %v3835 = vld [vmem:[#allocation2 + $0xa8] sm:$0xff]
        %v3836 = vld [vmem:[#allocation2 + $0xb0] sm:$0xff]
        %v3837 = vld [vmem:[#allocation2 + $0xb8] sm:$0xff]
        %v3838 = vld [vmem:[#allocation2 + $0xe8] sm:$0xff]
        %v3839 = vld [vmem:[#allocation2 + $0xf0] sm:$0xff]
        %v3840 = vld [vmem:[#allocation2 + $0xf8] sm:$0xff]
        %v3841 = vsel %vm837, %v3829, 0
        %v3842 = vsel %vm838, %v3830, 0
        %v3843 = vsel %vm839, %v3831, 0
        %v3844 = vsel %vm837, %v3832, 0
        %v3845 = vsel %vm838, %v3833, 0
        %v3846 = vsel %vm839, %v3834, 0
        %v3847 = vsel %vm837, %v3835, 0
        %v3848 = vsel %vm838, %v3836, 0
        %v3849 = vsel %vm839, %v3837, 0
        %v3850 = vsel %vm837, %v3838, 0
        %v3851 = vsel %vm838, %v3839, 0
        %v3852 = vsel %vm839, %v3840, 0
        %3865 = vrot.lane.b32.xlu0 %v3841, 127
        %v3866 = vpop.permute.xlu0 %3865
        %3867 = vrot.lane.b32.xlu0 %v3842, 127
        %v3868 = vpop.permute.xlu0 %3867
        %3869 = vrot.lane.b32.xlu0 %v3843, 127
        %v3870 = vpop.permute.xlu0 %3869
        %3871 = vrot.lane.b32.xlu0 %v3844, 127
        %v3872 = vpop.permute.xlu0 %3871
        %3873 = vrot.lane.b32.xlu0 %v3845, 127
        %v3874 = vpop.permute.xlu0 %3873
        %3875 = vrot.lane.b32.xlu0 %v3846, 127
        %v3876 = vpop.permute.xlu0 %3875
        %3877 = vrot.lane.b32.xlu0 %v3847, 127
        %v3878 = vpop.permute.xlu0 %3877
        %3879 = vrot.lane.b32.xlu0 %v3848, 127
        %v3880 = vpop.permute.xlu0 %3879
        %3881 = vrot.lane.b32.xlu0 %v3849, 127
        %v3882 = vpop.permute.xlu0 %3881
        %3883 = vrot.lane.b32.xlu0 %v3850, 127
        %v3884 = vpop.permute.xlu0 %3883
        %3885 = vrot.lane.b32.xlu0 %v3851, 127
        %v3886 = vpop.permute.xlu0 %3885
        %3887 = vrot.lane.b32.xlu0 %v3852, 127
        %v3888 = vpop.permute.xlu0 %3887
        %v3889 = vsel %vm726, %v3866, %v3868
        %v3890 = vsel %vm726, %v3868, %v3870
        %v3891 = vsel %vm726, %v3872, %v3874
        %v3892 = vsel %vm726, %v3874, %v3876
        %v3893 = vsel %vm726, %v3878, %v3880
        %v3894 = vsel %vm726, %v3880, %v3882
        %v3895 = vsel %vm726, %v3884, %v3886
        %v3896 = vsel %vm726, %v3886, %v3888
        %3905 = vst [vmem:[#allocation3 + $0x290] sm:$0xff] %v3889
        %3906 = vst [vmem:[#allocation3 + $0x298] sm:$0xff] %v3890
        %3907 = vst [vmem:[#allocation3 + $0x2b0] sm:$0xff] %v3891
        %3908 = vst [vmem:[#allocation3 + $0x2b8] sm:$0xff] %v3892
        %3909 = vst [vmem:[#allocation3 + $0x2d0] sm:$0xff] %v3893
        %3910 = vst [vmem:[#allocation3 + $0x2d8] sm:$0xff] %v3894
        %3911 = vst [vmem:[#allocation3 + $0x2f0] sm:$0xff] %v3895
        %3912 = vst [vmem:[#allocation3 + $0x2f8] sm:$0xff] %v3896
        %v3913 = vld [vmem:[#allocation2 + $0x28] sm:$0xff]
        %v3914 = vld [vmem:[#allocation2 + $0x30] sm:$0xff]
        %v3915 = vld [vmem:[#allocation2 + $0x38] sm:$0xff]
        %v3916 = vld [vmem:[#allocation2 + $0x68] sm:$0xff]
        %v3917 = vld [vmem:[#allocation2 + $0x70] sm:$0xff]
        %v3918 = vld [vmem:[#allocation2 + $0x78] sm:$0xff]
        %v3919 = vld [vmem:[#allocation2 + $0xa8] sm:$0xff]
        %v3920 = vld [vmem:[#allocation2 + $0xb0] sm:$0xff]
        %v3921 = vld [vmem:[#allocation2 + $0xb8] sm:$0xff]
        %v3922 = vld [vmem:[#allocation2 + $0xe8] sm:$0xff]
        %v3923 = vld [vmem:[#allocation2 + $0xf0] sm:$0xff]
        %v3924 = vld [vmem:[#allocation2 + $0xf8] sm:$0xff]
        %v3925 = vsel %vm929, %v3913, 0
        %v3926 = vsel %vm930, %v3914, 0
        %v3927 = vsel %vm931, %v3915, 0
        %v3928 = vsel %vm929, %v3916, 0
        %v3929 = vsel %vm930, %v3917, 0
        %v3930 = vsel %vm931, %v3918, 0
        %v3931 = vsel %vm929, %v3919, 0
        %v3932 = vsel %vm930, %v3920, 0
        %v3933 = vsel %vm931, %v3921, 0
        %v3934 = vsel %vm929, %v3922, 0
        %v3935 = vsel %vm930, %v3923, 0
        %v3936 = vsel %vm931, %v3924, 0
        %3949 = vrot.lane.b32.xlu0 %v3925, 113
        %v3950 = vpop.permute.xlu0 %3949
        %3951 = vrot.lane.b32.xlu0 %v3926, 113
        %v3952 = vpop.permute.xlu0 %3951
        %3953 = vrot.lane.b32.xlu0 %v3927, 113
        %v3954 = vpop.permute.xlu0 %3953
        %3955 = vrot.lane.b32.xlu0 %v3928, 113
        %v3956 = vpop.permute.xlu0 %3955
        %3957 = vrot.lane.b32.xlu0 %v3929, 113
        %v3958 = vpop.permute.xlu0 %3957
        %3959 = vrot.lane.b32.xlu0 %v3930, 113
        %v3960 = vpop.permute.xlu0 %3959
        %3961 = vrot.lane.b32.xlu0 %v3931, 113
        %v3962 = vpop.permute.xlu0 %3961
        %3963 = vrot.lane.b32.xlu0 %v3932, 113
        %v3964 = vpop.permute.xlu0 %3963
        %3965 = vrot.lane.b32.xlu0 %v3933, 113
        %v3966 = vpop.permute.xlu0 %3965
        %3967 = vrot.lane.b32.xlu0 %v3934, 113
        %v3968 = vpop.permute.xlu0 %3967
        %3969 = vrot.lane.b32.xlu0 %v3935, 113
        %v3970 = vpop.permute.xlu0 %3969
        %3971 = vrot.lane.b32.xlu0 %v3936, 113
        %v3972 = vpop.permute.xlu0 %3971
        %v3973 = vsel %vm632, %v3950, %v3952
        %v3974 = vsel %vm632, %v3952, %v3954
        %v3975 = vsel %vm632, %v3956, %v3958
        %v3976 = vsel %vm632, %v3958, %v3960
        %v3977 = vsel %vm632, %v3962, %v3964
        %v3978 = vsel %vm632, %v3964, %v3966
        %v3979 = vsel %vm632, %v3968, %v3970
        %v3980 = vsel %vm632, %v3970, %v3972
        %3989 = vst [vmem:[#allocation3 + $0x310] sm:$0xff] %v3973
        %3990 = vst [vmem:[#allocation3 + $0x318] sm:$0xff] %v3974
        %3991 = vst [vmem:[#allocation3 + $0x330] sm:$0xff] %v3975
        %3992 = vst [vmem:[#allocation3 + $0x338] sm:$0xff] %v3976
        %3993 = vst [vmem:[#allocation3 + $0x350] sm:$0xff] %v3977
        %3994 = vst [vmem:[#allocation3 + $0x358] sm:$0xff] %v3978
        %3995 = vst [vmem:[#allocation3 + $0x370] sm:$0xff] %v3979
        %3996 = vst [vmem:[#allocation3 + $0x378] sm:$0xff] %v3980
        %v3997 = vld [vmem:[#allocation2 + $0x28] sm:$0xff]
        %v3998 = vld [vmem:[#allocation2 + $0x30] sm:$0xff]
        %v3999 = vld [vmem:[#allocation2 + $0x38] sm:$0xff]
        %v4000 = vld [vmem:[#allocation2 + $0x68] sm:$0xff]
        %v4001 = vld [vmem:[#allocation2 + $0x70] sm:$0xff]
        %v4002 = vld [vmem:[#allocation2 + $0x78] sm:$0xff]
        %v4003 = vld [vmem:[#allocation2 + $0xa8] sm:$0xff]
        %v4004 = vld [vmem:[#allocation2 + $0xb0] sm:$0xff]
        %v4005 = vld [vmem:[#allocation2 + $0xb8] sm:$0xff]
        %v4006 = vld [vmem:[#allocation2 + $0xe8] sm:$0xff]
        %v4007 = vld [vmem:[#allocation2 + $0xf0] sm:$0xff]
        %v4008 = vld [vmem:[#allocation2 + $0xf8] sm:$0xff]
        %4021 = vrot.lane.b32.xlu0 %v3997, 112
        %v4022 = vpop.permute.xlu0 %4021
        %4023 = vrot.lane.b32.xlu0 %v3998, 112
        %v4024 = vpop.permute.xlu0 %4023
        %4025 = vrot.lane.b32.xlu0 %v3999, 112
        %v4026 = vpop.permute.xlu0 %4025
        %4027 = vrot.lane.b32.xlu0 %v4000, 112
        %v4028 = vpop.permute.xlu0 %4027
        %4029 = vrot.lane.b32.xlu0 %v4001, 112
        %v4030 = vpop.permute.xlu0 %4029
        %4031 = vrot.lane.b32.xlu0 %v4002, 112
        %v4032 = vpop.permute.xlu0 %4031
        %4033 = vrot.lane.b32.xlu0 %v4003, 112
        %v4034 = vpop.permute.xlu0 %4033
        %4035 = vrot.lane.b32.xlu0 %v4004, 112
        %v4036 = vpop.permute.xlu0 %4035
        %4037 = vrot.lane.b32.xlu0 %v4005, 112
        %v4038 = vpop.permute.xlu0 %4037
        %4039 = vrot.lane.b32.xlu0 %v4006, 112
        %v4040 = vpop.permute.xlu0 %4039
        %4041 = vrot.lane.b32.xlu0 %v4007, 112
        %v4042 = vpop.permute.xlu0 %4041
        %4043 = vrot.lane.b32.xlu0 %v4008, 112
        %v4044 = vpop.permute.xlu0 %4043
        %v4045 = vsel %vm1052, %v4022, %v4024
        %v4046 = vsel %vm1052, %v4024, %v4026
        %v4047 = vsel %vm1052, %v4028, %v4030
        %v4048 = vsel %vm1052, %v4030, %v4032
        %v4049 = vsel %vm1052, %v4034, %v4036
        %v4050 = vsel %vm1052, %v4036, %v4038
        %v4051 = vsel %vm1052, %v4040, %v4042
        %v4052 = vsel %vm1052, %v4042, %v4044
        %4061 = vst [vmem:[#allocation3 + $0x390] sm:$0xff] %v4045
        %4062 = vst [vmem:[#allocation3 + $0x398] sm:$0xff] %v4046
        %4063 = vst [vmem:[#allocation3 + $0x3b0] sm:$0xff] %v4047
        %4064 = vst [vmem:[#allocation3 + $0x3b8] sm:$0xff] %v4048
        %4065 = vst [vmem:[#allocation3 + $0x3d0] sm:$0xff] %v4049
        %4066 = vst [vmem:[#allocation3 + $0x3d8] sm:$0xff] %v4050
        %4067 = vst [vmem:[#allocation3 + $0x3f0] sm:$0xff] %v4051
        %4068 = vst [vmem:[#allocation3 + $0x3f8] sm:$0xff] %v4052
        %v4069 = vld [vmem:[#allocation2 + $0x28] sm:$0xff]
        %v4070 = vld [vmem:[#allocation2 + $0x30] sm:$0xff]
        %v4071 = vld [vmem:[#allocation2 + $0x38] sm:$0xff]
        %v4072 = vld [vmem:[#allocation2 + $0x68] sm:$0xff]
        %v4073 = vld [vmem:[#allocation2 + $0x70] sm:$0xff]
        %v4074 = vld [vmem:[#allocation2 + $0x78] sm:$0xff]
        %v4075 = vld [vmem:[#allocation2 + $0xa8] sm:$0xff]
        %v4076 = vld [vmem:[#allocation2 + $0xb0] sm:$0xff]
        %v4077 = vld [vmem:[#allocation2 + $0xb8] sm:$0xff]
        %v4078 = vld [vmem:[#allocation2 + $0xe8] sm:$0xff]
        %v4079 = vld [vmem:[#allocation2 + $0xf0] sm:$0xff]
        %v4080 = vld [vmem:[#allocation2 + $0xf8] sm:$0xff]
        %v4081 = vsel %vm1094, %v4069, 0
        %v4082 = vsel %vm1095, %v4070, 0
        %v4083 = vsel %vm1096, %v4071, 0
        %v4084 = vsel %vm1094, %v4072, 0
        %v4085 = vsel %vm1095, %v4073, 0
        %v4086 = vsel %vm1096, %v4074, 0
        %v4087 = vsel %vm1094, %v4075, 0
        %v4088 = vsel %vm1095, %v4076, 0
        %v4089 = vsel %vm1096, %v4077, 0
        %v4090 = vsel %vm1094, %v4078, 0
        %v4091 = vsel %vm1095, %v4079, 0
        %v4092 = vsel %vm1096, %v4080, 0
        %4105 = vrot.lane.b32.xlu0 %v4081, 111
        %v4106 = vpop.permute.xlu0 %4105
        %4107 = vrot.lane.b32.xlu0 %v4082, 111
        %v4108 = vpop.permute.xlu0 %4107
        %4109 = vrot.lane.b32.xlu0 %v4083, 111
        %v4110 = vpop.permute.xlu0 %4109
        %4111 = vrot.lane.b32.xlu0 %v4084, 111
        %v4112 = vpop.permute.xlu0 %4111
        %4113 = vrot.lane.b32.xlu0 %v4085, 111
        %v4114 = vpop.permute.xlu0 %4113
        %4115 = vrot.lane.b32.xlu0 %v4086, 111
        %v4116 = vpop.permute.xlu0 %4115
        %4117 = vrot.lane.b32.xlu0 %v4087, 111
        %v4118 = vpop.permute.xlu0 %4117
        %4119 = vrot.lane.b32.xlu0 %v4088, 111
        %v4120 = vpop.permute.xlu0 %4119
        %4121 = vrot.lane.b32.xlu0 %v4089, 111
        %v4122 = vpop.permute.xlu0 %4121
        %4123 = vrot.lane.b32.xlu0 %v4090, 111
        %v4124 = vpop.permute.xlu0 %4123
        %4125 = vrot.lane.b32.xlu0 %v4091, 111
        %v4126 = vpop.permute.xlu0 %4125
        %4127 = vrot.lane.b32.xlu0 %v4092, 111
        %v4128 = vpop.permute.xlu0 %4127
        %v4129 = vsel %vm451, %v4106, %v4108
        %v4130 = vsel %vm451, %v4108, %v4110
        %v4131 = vsel %vm451, %v4112, %v4114
        %v4132 = vsel %vm451, %v4114, %v4116
        %v4133 = vsel %vm451, %v4118, %v4120
        %v4134 = vsel %vm451, %v4120, %v4122
        %v4135 = vsel %vm451, %v4124, %v4126
        %v4136 = vsel %vm451, %v4126, %v4128
        %4145 = vst [vmem:[#allocation3 + $0x410] sm:$0xff] %v4129
        %4146 = vst [vmem:[#allocation3 + $0x418] sm:$0xff] %v4130
        %4147 = vst [vmem:[#allocation3 + $0x430] sm:$0xff] %v4131
        %4148 = vst [vmem:[#allocation3 + $0x438] sm:$0xff] %v4132
        %4149 = vst [vmem:[#allocation3 + $0x450] sm:$0xff] %v4133
        %4150 = vst [vmem:[#allocation3 + $0x458] sm:$0xff] %v4134
        %4151 = vst [vmem:[#allocation3 + $0x470] sm:$0xff] %v4135
        %4152 = vst [vmem:[#allocation3 + $0x478] sm:$0xff] %v4136
        %v4153 = vld [vmem:[#allocation11] sm:$0xff]
        %v4154 = vld [vmem:[#allocation11 + $0x8] sm:$0xff]
        %v4155 = vld [vmem:[#allocation11 + $0x10] sm:$0xf]
        %v4156 = vld [vmem:[#allocation11 + $0x14] sm:$0xff]
        %v4157 = vld [vmem:[#allocation11 + $0x1c] sm:$0xff]
        %v4158 = vld [vmem:[#allocation11 + $0x24] sm:$0xf]
        %v4159 = vld [vmem:[#allocation11 + $0x28] sm:$0xff]
        %v4160 = vld [vmem:[#allocation11 + $0x30] sm:$0xff]
        %v4161 = vld [vmem:[#allocation11 + $0x38] sm:$0xf]
        %v4162 = vld [vmem:[#allocation11 + $0x3c] sm:$0xff]
        %v4163 = vld [vmem:[#allocation11 + $0x44] sm:$0xff]
        %v4164 = vld [vmem:[#allocation11 + $0x4c] sm:$0xf]
        %v4165 = vld [vmem:[#allocation11 + $0x50] sm:$0xff]
        %v4166 = vld [vmem:[#allocation11 + $0x58] sm:$0xff]
        %v4167 = vld [vmem:[#allocation11 + $0x60] sm:$0xf]
        %v4168 = vld [vmem:[#allocation11 + $0x64] sm:$0xff]
        %v4169 = vld [vmem:[#allocation11 + $0x6c] sm:$0xff]
        %v4170 = vld [vmem:[#allocation11 + $0x74] sm:$0xf]
        %v4171 = vld [vmem:[#allocation11 + $0x78] sm:$0xff]
        %v4172 = vld [vmem:[#allocation11 + $0x80] sm:$0xff]
        %v4173 = vld [vmem:[#allocation11 + $0x88] sm:$0xf]
        %v4174 = vld [vmem:[#allocation11 + $0x8c] sm:$0xff]
        %v4175 = vld [vmem:[#allocation11 + $0x94] sm:$0xff]
        %v4176 = vld [vmem:[#allocation11 + $0x9c] sm:$0xf]
        %v4177 = vld [vmem:[#allocation3] sm:$0xff]
        %v4178 = vld [vmem:[#allocation3 + $0x8] sm:$0xff]
        %v4179 = vld [vmem:[#allocation3 + $0x10] sm:$0xff]
        %v4180 = vld [vmem:[#allocation3 + $0x18] sm:$0xff]
        %v4181 = vld [vmem:[#allocation3 + $0x20] sm:$0xff]
        %v4182 = vld [vmem:[#allocation3 + $0x28] sm:$0xff]
        %v4183 = vld [vmem:[#allocation3 + $0x30] sm:$0xff]
        %v4184 = vld [vmem:[#allocation3 + $0x38] sm:$0xff]
        %v4185 = vld [vmem:[#allocation3 + $0x40] sm:$0xff]
        %v4186 = vld [vmem:[#allocation3 + $0x48] sm:$0xff]
        %v4187 = vld [vmem:[#allocation3 + $0x50] sm:$0xff]
        %v4188 = vld [vmem:[#allocation3 + $0x58] sm:$0xff]
        %v4189 = vld [vmem:[#allocation3 + $0x60] sm:$0xff]
        %v4190 = vld [vmem:[#allocation3 + $0x68] sm:$0xff]
        %v4191 = vld [vmem:[#allocation3 + $0x70] sm:$0xff]
        %v4192 = vld [vmem:[#allocation3 + $0x78] sm:$0xff]
        %v4193 = vld [vmem:[#allocation3 + $0x80] sm:$0xff]
        %v4194 = vld [vmem:[#allocation3 + $0x88] sm:$0xff]
        %v4195 = vld [vmem:[#allocation3 + $0x90] sm:$0xff]
        %v4196 = vld [vmem:[#allocation3 + $0x98] sm:$0xff]
        %v4197 = vld [vmem:[#allocation3 + $0xa0] sm:$0xff]
        %v4198 = vld [vmem:[#allocation3 + $0xa8] sm:$0xff]
        %v4199 = vld [vmem:[#allocation3 + $0xb0] sm:$0xff]
        %v4200 = vld [vmem:[#allocation3 + $0xb8] sm:$0xff]
        %v4201 = vld [vmem:[#allocation3 + $0xc0] sm:$0xff]
        %v4202 = vld [vmem:[#allocation3 + $0xc8] sm:$0xff]
        %v4203 = vld [vmem:[#allocation3 + $0xd0] sm:$0xff]
        %v4204 = vld [vmem:[#allocation3 + $0xd8] sm:$0xff]
        %v4205 = vld [vmem:[#allocation3 + $0xe0] sm:$0xff]
        %v4206 = vld [vmem:[#allocation3 + $0xe8] sm:$0xff]
        %v4207 = vld [vmem:[#allocation3 + $0xf0] sm:$0xff]
        %v4208 = vld [vmem:[#allocation3 + $0xf8] sm:$0xff]
        %v4209 = vld [vmem:[#allocation3 + $0x100] sm:$0xff]
        %v4210 = vld [vmem:[#allocation3 + $0x108] sm:$0xff]
        %v4211 = vld [vmem:[#allocation3 + $0x110] sm:$0xff]
        %v4212 = vld [vmem:[#allocation3 + $0x118] sm:$0xff]
        %v4213 = vld [vmem:[#allocation3 + $0x120] sm:$0xff]
        %v4214 = vld [vmem:[#allocation3 + $0x128] sm:$0xff]
        %v4215 = vld [vmem:[#allocation3 + $0x130] sm:$0xff]
        %v4216 = vld [vmem:[#allocation3 + $0x138] sm:$0xff]
        %v4217 = vld [vmem:[#allocation3 + $0x140] sm:$0xff]
        %v4218 = vld [vmem:[#allocation3 + $0x148] sm:$0xff]
        %v4219 = vld [vmem:[#allocation3 + $0x150] sm:$0xff]
        %v4220 = vld [vmem:[#allocation3 + $0x158] sm:$0xff]
        %v4221 = vld [vmem:[#allocation3 + $0x160] sm:$0xff]
        %v4222 = vld [vmem:[#allocation3 + $0x168] sm:$0xff]
        %v4223 = vld [vmem:[#allocation3 + $0x170] sm:$0xff]
        %v4224 = vld [vmem:[#allocation3 + $0x178] sm:$0xff]
        %v4225 = vld [vmem:[#allocation3 + $0x180] sm:$0xff]
        %v4226 = vld [vmem:[#allocation3 + $0x188] sm:$0xff]
        %v4227 = vld [vmem:[#allocation3 + $0x190] sm:$0xff]
        %v4228 = vld [vmem:[#allocation3 + $0x198] sm:$0xff]
        %v4229 = vld [vmem:[#allocation3 + $0x1a0] sm:$0xff]
        %v4230 = vld [vmem:[#allocation3 + $0x1a8] sm:$0xff]
        %v4231 = vld [vmem:[#allocation3 + $0x1b0] sm:$0xff]
        %v4232 = vld [vmem:[#allocation3 + $0x1b8] sm:$0xff]
        %v4233 = vld [vmem:[#allocation3 + $0x1c0] sm:$0xff]
        %v4234 = vld [vmem:[#allocation3 + $0x1c8] sm:$0xff]
        %v4235 = vld [vmem:[#allocation3 + $0x1d0] sm:$0xff]
        %v4236 = vld [vmem:[#allocation3 + $0x1d8] sm:$0xff]
        %v4237 = vld [vmem:[#allocation3 + $0x1e0] sm:$0xff]
        %v4238 = vld [vmem:[#allocation3 + $0x1e8] sm:$0xff]
        %v4239 = vld [vmem:[#allocation3 + $0x1f0] sm:$0xff]
        %v4240 = vld [vmem:[#allocation3 + $0x1f8] sm:$0xff]
        %v4241 = vld [vmem:[#allocation3 + $0x200] sm:$0xff]
        %v4242 = vld [vmem:[#allocation3 + $0x208] sm:$0xff]
        %v4243 = vld [vmem:[#allocation3 + $0x210] sm:$0xff]
        %v4244 = vld [vmem:[#allocation3 + $0x218] sm:$0xff]
        %v4245 = vld [vmem:[#allocation3 + $0x220] sm:$0xff]
        %v4246 = vld [vmem:[#allocation3 + $0x228] sm:$0xff]
        %v4247 = vld [vmem:[#allocation3 + $0x230] sm:$0xff]
        %v4248 = vld [vmem:[#allocation3 + $0x238] sm:$0xff]
        %v4249 = vld [vmem:[#allocation3 + $0x240] sm:$0xff]
        %v4250 = vld [vmem:[#allocation3 + $0x248] sm:$0xff]
        %v4251 = vld [vmem:[#allocation3 + $0x250] sm:$0xff]
        %v4252 = vld [vmem:[#allocation3 + $0x258] sm:$0xff]
        %v4253 = vld [vmem:[#allocation3 + $0x260] sm:$0xff]
        %v4254 = vld [vmem:[#allocation3 + $0x268] sm:$0xff]
        %v4255 = vld [vmem:[#allocation3 + $0x270] sm:$0xff]
        %v4256 = vld [vmem:[#allocation3 + $0x278] sm:$0xff]
        %v4257 = vld [vmem:[#allocation3 + $0x280] sm:$0xff]
        %v4258 = vld [vmem:[#allocation3 + $0x288] sm:$0xff]
        %v4259 = vld [vmem:[#allocation3 + $0x290] sm:$0xff]
        %v4260 = vld [vmem:[#allocation3 + $0x298] sm:$0xff]
        %v4261 = vld [vmem:[#allocation3 + $0x2a0] sm:$0xff]
        %v4262 = vld [vmem:[#allocation3 + $0x2a8] sm:$0xff]
        %v4263 = vld [vmem:[#allocation3 + $0x2b0] sm:$0xff]
        %v4264 = vld [vmem:[#allocation3 + $0x2b8] sm:$0xff]
        %v4265 = vld [vmem:[#allocation3 + $0x2c0] sm:$0xff]
        %v4266 = vld [vmem:[#allocation3 + $0x2c8] sm:$0xff]
        %v4267 = vld [vmem:[#allocation3 + $0x2d0] sm:$0xff]
        %v4268 = vld [vmem:[#allocation3 + $0x2d8] sm:$0xff]
        %v4269 = vld [vmem:[#allocation3 + $0x2e0] sm:$0xff]
        %v4270 = vld [vmem:[#allocation3 + $0x2e8] sm:$0xff]
        %v4271 = vld [vmem:[#allocation3 + $0x2f0] sm:$0xff]
        %v4272 = vld [vmem:[#allocation3 + $0x2f8] sm:$0xff]
        %v4273 = vld [vmem:[#allocation3 + $0x300] sm:$0xff]
        %v4274 = vld [vmem:[#allocation3 + $0x308] sm:$0xff]
        %v4275 = vld [vmem:[#allocation3 + $0x310] sm:$0xff]
        %v4276 = vld [vmem:[#allocation3 + $0x318] sm:$0xff]
        %v4277 = vld [vmem:[#allocation3 + $0x320] sm:$0xff]
        %v4278 = vld [vmem:[#allocation3 + $0x328] sm:$0xff]
        %v4279 = vld [vmem:[#allocation3 + $0x330] sm:$0xff]
        %v4280 = vld [vmem:[#allocation3 + $0x338] sm:$0xff]
        %v4281 = vld [vmem:[#allocation3 + $0x340] sm:$0xff]
        %v4282 = vld [vmem:[#allocation3 + $0x348] sm:$0xff]
        %v4283 = vld [vmem:[#allocation3 + $0x350] sm:$0xff]
        %v4284 = vld [vmem:[#allocation3 + $0x358] sm:$0xff]
        %v4285 = vld [vmem:[#allocation3 + $0x360] sm:$0xff]
        %v4286 = vld [vmem:[#allocation3 + $0x368] sm:$0xff]
        %v4287 = vld [vmem:[#allocation3 + $0x370] sm:$0xff]
        %v4288 = vld [vmem:[#allocation3 + $0x378] sm:$0xff]
        %v4289 = vld [vmem:[#allocation3 + $0x380] sm:$0xff]
        %v4290 = vld [vmem:[#allocation3 + $0x388] sm:$0xff]
        %v4291 = vld [vmem:[#allocation3 + $0x390] sm:$0xff]
        %v4292 = vld [vmem:[#allocation3 + $0x398] sm:$0xff]
        %v4293 = vld [vmem:[#allocation3 + $0x3a0] sm:$0xff]
        %v4294 = vld [vmem:[#allocation3 + $0x3a8] sm:$0xff]
        %v4295 = vld [vmem:[#allocation3 + $0x3b0] sm:$0xff]
        %v4296 = vld [vmem:[#allocation3 + $0x3b8] sm:$0xff]
        %v4297 = vld [vmem:[#allocation3 + $0x3c0] sm:$0xff]
        %v4298 = vld [vmem:[#allocation3 + $0x3c8] sm:$0xff]
        %v4299 = vld [vmem:[#allocation3 + $0x3d0] sm:$0xff]
        %v4300 = vld [vmem:[#allocation3 + $0x3d8] sm:$0xff]
        %v4301 = vld [vmem:[#allocation3 + $0x3e0] sm:$0xff]
        %v4302 = vld [vmem:[#allocation3 + $0x3e8] sm:$0xff]
        %v4303 = vld [vmem:[#allocation3 + $0x3f0] sm:$0xff]
        %v4304 = vld [vmem:[#allocation3 + $0x3f8] sm:$0xff]
        %v4305 = vld [vmem:[#allocation3 + $0x400] sm:$0xff]
        %v4306 = vld [vmem:[#allocation3 + $0x408] sm:$0xff]
        %v4307 = vld [vmem:[#allocation3 + $0x410] sm:$0xff]
        %v4308 = vld [vmem:[#allocation3 + $0x418] sm:$0xff]
        %v4309 = vld [vmem:[#allocation3 + $0x420] sm:$0xff]
        %v4310 = vld [vmem:[#allocation3 + $0x428] sm:$0xff]
        %v4311 = vld [vmem:[#allocation3 + $0x430] sm:$0xff]
        %v4312 = vld [vmem:[#allocation3 + $0x438] sm:$0xff]
        %v4313 = vld [vmem:[#allocation3 + $0x440] sm:$0xff]
        %v4314 = vld [vmem:[#allocation3 + $0x448] sm:$0xff]
        %v4315 = vld [vmem:[#allocation3 + $0x450] sm:$0xff]
        %v4316 = vld [vmem:[#allocation3 + $0x458] sm:$0xff]
        %v4317 = vld [vmem:[#allocation3 + $0x460] sm:$0xff]
        %v4318 = vld [vmem:[#allocation3 + $0x468] sm:$0xff]
        %v4319 = vld [vmem:[#allocation3 + $0x470] sm:$0xff]
        %v4320 = vld [vmem:[#allocation3 + $0x478] sm:$0xff]
        %v4345 = vunpack.c.l.b16 %v4153
        %v4346 = vunpack.c.h.b16 %v4153
        %v4347 = vunpack.c.l.b16 %v4154
        %v4348 = vunpack.c.h.b16 %v4154
        %v4349 = vunpack.c.l.b16 %v4155
        %v4350 = vunpack.c.l.b16 %v4156
        %v4351 = vunpack.c.h.b16 %v4156
        %v4352 = vunpack.c.l.b16 %v4157
        %v4353 = vunpack.c.h.b16 %v4157
        %v4354 = vunpack.c.l.b16 %v4158
        %v4355 = vunpack.c.l.b16 %v4159
        %v4356 = vunpack.c.h.b16 %v4159
        %v4357 = vunpack.c.l.b16 %v4160
        %v4358 = vunpack.c.h.b16 %v4160
        %v4359 = vunpack.c.l.b16 %v4161
        %v4360 = vunpack.c.l.b16 %v4162
        %v4361 = vunpack.c.h.b16 %v4162
        %v4362 = vunpack.c.l.b16 %v4163
        %v4363 = vunpack.c.h.b16 %v4163
        %v4364 = vunpack.c.l.b16 %v4164
        %v4365 = vunpack.c.l.b16 %v4165
        %v4366 = vunpack.c.h.b16 %v4165
        %v4367 = vunpack.c.l.b16 %v4166
        %v4368 = vunpack.c.h.b16 %v4166
        %v4369 = vunpack.c.l.b16 %v4167
        %v4370 = vunpack.c.l.b16 %v4168
        %v4371 = vunpack.c.h.b16 %v4168
        %v4372 = vunpack.c.l.b16 %v4169
        %v4373 = vunpack.c.h.b16 %v4169
        %v4374 = vunpack.c.l.b16 %v4170
        %v4375 = vunpack.c.l.b16 %v4171
        %v4376 = vunpack.c.h.b16 %v4171
        %v4377 = vunpack.c.l.b16 %v4172
        %v4378 = vunpack.c.h.b16 %v4172
        %v4379 = vunpack.c.l.b16 %v4173
        %v4380 = vunpack.c.l.b16 %v4174
        %v4381 = vunpack.c.h.b16 %v4174
        %v4382 = vunpack.c.l.b16 %v4175
        %v4383 = vunpack.c.h.b16 %v4175
        %v4384 = vunpack.c.l.b16 %v4176
        %v4385 = vpack.c.b16 %v4350, %v4345
        %v4386 = vpack.c.b16 %v4351, %v4346
        %v4387 = vpack.c.b16 %v4352, %v4347
        %v4388 = vpack.c.b16 %v4353, %v4348
        %v4389 = vpack.c.b16 %v4354, %v4349
        %v4390 = vpack.c.b16 %v4360, %v4355
        %v4391 = vpack.c.b16 %v4361, %v4356
        %v4392 = vpack.c.b16 %v4362, %v4357
        %v4393 = vpack.c.b16 %v4363, %v4358
        %v4394 = vpack.c.b16 %v4364, %v4359
        %v4395 = vpack.c.b16 %v4370, %v4365
        %v4396 = vpack.c.b16 %v4371, %v4366
        %v4397 = vpack.c.b16 %v4372, %v4367
        %v4398 = vpack.c.b16 %v4373, %v4368
        %v4399 = vpack.c.b16 %v4374, %v4369
        %v4400 = vpack.c.b16 %v4380, %v4375
        %v4401 = vpack.c.b16 %v4381, %v4376
        %v4402 = vpack.c.b16 %v4382, %v4377
        %v4403 = vpack.c.b16 %v4383, %v4378
        %v4404 = vpack.c.b16 %v4384, %v4379
        %v4422 = vsel %vm2101, %v4389, 0
        %v4425 = vsel %vm2101, %v4394, 0
        %v4428 = vsel %vm2101, %v4399, 0
        %v4431 = vsel %vm2101, %v4404, 0
        %4433 = vmatprep.subr.bf16.mxu0 %v4178
        %4434 = vmatpush1.bf16.msra.mxu0 %v4177
        %4435 = vmatprep.subr.bf16.mxu0 %v4182
        %4436 = vmatpush1.bf16.msra.mxu0 %v4181
        %4437 = vmatprep.subr.bf16.mxu0 %v4186
        %4438 = vmatpush1.bf16.msra.mxu0 %v4185
        %4439 = vmatprep.subr.bf16.mxu0 %v4190
        %4440 = vmatpush1.bf16.msra.mxu0 %v4189
        %4441 = vmatprep.subr.bf16.mxu0 %v4194
        %4442 = vmatpush1.bf16.msra.mxu0 %v4193
        %4443 = vmatprep.subr.bf16.mxu0 %v4198
        %4444 = vmatpush1.bf16.msra.mxu0 %v4197
        %4445 = vmatprep.subr.bf16.mxu0 %v4202
        %4446 = vmatpush1.bf16.msra.mxu0 %v4201
        %4447 = vmatprep.subr.bf16.mxu0 %v4206
        %4448 = vmatpush1.bf16.msra.mxu0 %v4205
        %4449 = vmatprep.subr.bf16.mxu0 %v4210
        %4450 = vmatpush1.bf16.msra.mxu0 %v4209
        %4451 = vmatprep.subr.bf16.mxu0 %v4214
        %4452 = vmatpush1.bf16.msra.mxu0 %v4213
        %4453 = vmatprep.subr.bf16.mxu0 %v4218
        %4454 = vmatpush1.bf16.msra.mxu0 %v4217
        %4455 = vmatprep.subr.bf16.mxu0 %v4222
        %4456 = vmatpush1.bf16.msra.mxu0 %v4221
        %4457 = vmatprep.subr.bf16.mxu0 %v4226
        %4458 = vmatpush1.bf16.msra.mxu0 %v4225
        %4459 = vmatprep.subr.bf16.mxu0 %v4230
        %4460 = vmatpush1.bf16.msra.mxu0 %v4229
        %4461 = vmatprep.subr.bf16.mxu0 %v4234
        %4462 = vmatpush1.bf16.msra.mxu0 %v4233
        %4463 = vmatprep.subr.bf16.mxu0 %v4238
        %4464 = vmatpush1.bf16.msra.mxu0 %v4237
        %4465 = vmatprep.mubr.bf16.mxu0 %v4386
        %4466 = vmatmul.mubr.bf16.gmra.mrb[0].mxu0 %v4385
        %v4467 = vpop.f32.mrb[0].mxu0
        %v4468 = vadd.f32 0.0, %v4467
        %v4469 = vpop.f32.mrb[0].mxu0
        %v4470 = vadd.f32 0.0, %v4469
        %v4471 = vpop.f32.mrb[0].mxu0
        %v4472 = vadd.f32 0.0, %v4471
        %v4473 = vpop.f32.mrb[0].mxu0
        %v4474 = vadd.f32 0.0, %v4473
        %4475 = vmatprep.mubr.bf16.mxu0 %v4391
        %4476 = vmatmul.mubr.bf16.gmra.mrb[0].mxu0 %v4390
        %v4477 = vpop.f32.mrb[0].mxu0
        %v4478 = vadd.f32 0.0, %v4477
        %v4479 = vpop.f32.mrb[0].mxu0
        %v4480 = vadd.f32 0.0, %v4479
        %v4481 = vpop.f32.mrb[0].mxu0
        %v4482 = vadd.f32 0.0, %v4481
        %v4483 = vpop.f32.mrb[0].mxu0
        %v4484 = vadd.f32 0.0, %v4483
        %4485 = vmatprep.mubr.bf16.mxu0 %v4396
        %4486 = vmatmul.mubr.bf16.gmra.mrb[0].mxu0 %v4395
        %v4487 = vpop.f32.mrb[0].mxu0
        %v4488 = vadd.f32 0.0, %v4487
        %v4489 = vpop.f32.mrb[0].mxu0
        %v4490 = vadd.f32 0.0, %v4489
        %v4491 = vpop.f32.mrb[0].mxu0
        %v4492 = vadd.f32 0.0, %v4491
        %v4493 = vpop.f32.mrb[0].mxu0
        %v4494 = vadd.f32 0.0, %v4493
        %4495 = vmatprep.mubr.bf16.mxu0 %v4401
        %4496 = vmatmul.mubr.bf16.gmra.mrb[0].mxu0 %v4400
        %v4497 = vpop.f32.mrb[0].mxu0
        %v4498 = vadd.f32 0.0, %v4497
        %v4499 = vpop.f32.mrb[0].mxu0
        %v4500 = vadd.f32 0.0, %v4499
        %v4501 = vpop.f32.mrb[0].mxu0
        %v4502 = vadd.f32 0.0, %v4501
        %v4503 = vpop.f32.mrb[0].mxu0
        %v4504 = vadd.f32 0.0, %v4503
        %4505 = vdwg.mxu0
        %4506 = vmatprep.subr.bf16.mxu0 %v4242
        %4507 = vmatpush1.bf16.msra.mxu0 %v4241
        %4508 = vmatprep.subr.bf16.mxu0 %v4246
        %4509 = vmatpush1.bf16.msra.mxu0 %v4245
        %4510 = vmatprep.subr.bf16.mxu0 %v4250
        %4511 = vmatpush1.bf16.msra.mxu0 %v4249
        %4512 = vmatprep.subr.bf16.mxu0 %v4254
        %4513 = vmatpush1.bf16.msra.mxu0 %v4253
        %4514 = vmatprep.subr.bf16.mxu0 %v4258
        %4515 = vmatpush1.bf16.msra.mxu0 %v4257
        %4516 = vmatprep.subr.bf16.mxu0 %v4262
        %4517 = vmatpush1.bf16.msra.mxu0 %v4261
        %4518 = vmatprep.subr.bf16.mxu0 %v4266
        %4519 = vmatpush1.bf16.msra.mxu0 %v4265
        %4520 = vmatprep.subr.bf16.mxu0 %v4270
        %4521 = vmatpush1.bf16.msra.mxu0 %v4269
        %4522 = vmatprep.subr.bf16.mxu0 %v4274
        %4523 = vmatpush1.bf16.msra.mxu0 %v4273
        %4524 = vmatprep.subr.bf16.mxu0 %v4278
        %4525 = vmatpush1.bf16.msra.mxu0 %v4277
        %4526 = vmatprep.subr.bf16.mxu0 %v4282
        %4527 = vmatpush1.bf16.msra.mxu0 %v4281
        %4528 = vmatprep.subr.bf16.mxu0 %v4286
        %4529 = vmatpush1.bf16.msra.mxu0 %v4285
        %4530 = vmatprep.subr.bf16.mxu0 %v4290
        %4531 = vmatpush1.bf16.msra.mxu0 %v4289
        %4532 = vmatprep.subr.bf16.mxu0 %v4294
        %4533 = vmatpush1.bf16.msra.mxu0 %v4293
        %4534 = vmatprep.subr.bf16.mxu0 %v4298
        %4535 = vmatpush1.bf16.msra.mxu0 %v4297
        %4536 = vmatprep.subr.bf16.mxu0 %v4302
        %4537 = vmatpush1.bf16.msra.mxu0 %v4301
        %4538 = vmatprep.mubr.bf16.mxu0 %v4388
        %4539 = vmatmul.mubr.bf16.gmra.mrb[0].mxu0 %v4387
        %v4540 = vpop.f32.mrb[0].mxu0
        %v4541 = vadd.f32 %v4468, %v4540
        %v4542 = vpop.f32.mrb[0].mxu0
        %v4543 = vadd.f32 %v4470, %v4542
        %v4544 = vpop.f32.mrb[0].mxu0
        %v4545 = vadd.f32 %v4472, %v4544
        %v4546 = vpop.f32.mrb[0].mxu0
        %v4547 = vadd.f32 %v4474, %v4546
        %4548 = vmatprep.mubr.bf16.mxu0 %v4393
        %4549 = vmatmul.mubr.bf16.gmra.mrb[0].mxu0 %v4392
        %v4550 = vpop.f32.mrb[0].mxu0
        %v4551 = vadd.f32 %v4478, %v4550
        %v4552 = vpop.f32.mrb[0].mxu0
        %v4553 = vadd.f32 %v4480, %v4552
        %v4554 = vpop.f32.mrb[0].mxu0
        %v4555 = vadd.f32 %v4482, %v4554
        %v4556 = vpop.f32.mrb[0].mxu0
        %v4557 = vadd.f32 %v4484, %v4556
        %4558 = vmatprep.mubr.bf16.mxu0 %v4398
        %4559 = vmatmul.mubr.bf16.gmra.mrb[0].mxu0 %v4397
        %v4560 = vpop.f32.mrb[0].mxu0
        %v4561 = vadd.f32 %v4488, %v4560
        %v4562 = vpop.f32.mrb[0].mxu0
        %v4563 = vadd.f32 %v4490, %v4562
        %v4564 = vpop.f32.mrb[0].mxu0
        %v4565 = vadd.f32 %v4492, %v4564
        %v4566 = vpop.f32.mrb[0].mxu0
        %v4567 = vadd.f32 %v4494, %v4566
        %4568 = vmatprep.mubr.bf16.mxu0 %v4403
        %4569 = vmatmul.mubr.bf16.gmra.mrb[0].mxu0 %v4402
        %v4570 = vpop.f32.mrb[0].mxu0
        %v4571 = vadd.f32 %v4498, %v4570
        %v4572 = vpop.f32.mrb[0].mxu0
        %v4573 = vadd.f32 %v4500, %v4572
        %v4574 = vpop.f32.mrb[0].mxu0
        %v4575 = vadd.f32 %v4502, %v4574
        %v4576 = vpop.f32.mrb[0].mxu0
        %v4577 = vadd.f32 %v4504, %v4576
        %4578 = vdwg.mxu0
        %4579 = vmatprep.subr.bf16.mxu0 %v4306
        %4580 = vmatpush1.bf16.msra.mxu0 %v4305
        %4581 = vmatprep.subr.bf16.mxu0 %v4310
        %4582 = vmatpush1.bf16.msra.mxu0 %v4309
        %4583 = vmatprep.subr.bf16.mxu0 %v4314
        %4584 = vmatpush1.bf16.msra.mxu0 %v4313
        %4585 = vmatprep.subr.bf16.mxu0 %v4318
        %4586 = vmatpush1.bf16.msra.mxu0 %v4317
        %4587 = vmatprep.subr.bf16.mxu0 0
        %4588 = vmatpush1.bf16.msra.mxu0 0
        %4589 = vmatprep.subr.bf16.mxu0 0
        %4590 = vmatpush1.bf16.msra.mxu0 0
        %4591 = vmatprep.subr.bf16.mxu0 0
        %4592 = vmatpush1.bf16.msra.mxu0 0
        %4593 = vmatprep.subr.bf16.mxu0 0
        %4594 = vmatpush1.bf16.msra.mxu0 0
        %4595 = vmatprep.subr.bf16.mxu0 0
        %4596 = vmatpush1.bf16.msra.mxu0 0
        %4597 = vmatprep.subr.bf16.mxu0 0
        %4598 = vmatpush1.bf16.msra.mxu0 0
        %4599 = vmatprep.subr.bf16.mxu0 0
        %4600 = vmatpush1.bf16.msra.mxu0 0
        %4601 = vmatprep.subr.bf16.mxu0 0
        %4602 = vmatpush1.bf16.msra.mxu0 0
        %4603 = vmatprep.subr.bf16.mxu0 0
        %4604 = vmatpush1.bf16.msra.mxu0 0
        %4605 = vmatprep.subr.bf16.mxu0 0
        %4606 = vmatpush1.bf16.msra.mxu0 0
        %4607 = vmatprep.subr.bf16.mxu0 0
        %4608 = vmatpush1.bf16.msra.mxu0 0
        %4609 = vmatprep.subr.bf16.mxu0 0
        %4610 = vmatpush1.bf16.msra.mxu0 0
        %4611 = vmatprep.mubr.bf16.mxu0 0
        %4612 = vmatmul.mubr.bf16.gmra.mrb[0].mxu0 %v4422
        %v4613 = vpop.f32.mrb[0].mxu0
        %v4614 = vadd.f32 %v4541, %v4613
        %v4615 = vpop.f32.mrb[0].mxu0
        %v4616 = vadd.f32 %v4543, %v4615
        %v4617 = vpop.f32.mrb[0].mxu0
        %v4618 = vadd.f32 %v4545, %v4617
        %v4619 = vpop.f32.mrb[0].mxu0
        %v4620 = vadd.f32 %v4547, %v4619
        %4621 = vmatprep.mubr.bf16.mxu0 0
        %4622 = vmatmul.mubr.bf16.gmra.mrb[0].mxu0 %v4425
        %v4623 = vpop.f32.mrb[0].mxu0
        %v4624 = vadd.f32 %v4551, %v4623
        %v4625 = vpop.f32.mrb[0].mxu0
        %v4626 = vadd.f32 %v4553, %v4625
        %v4627 = vpop.f32.mrb[0].mxu0
        %v4628 = vadd.f32 %v4555, %v4627
        %v4629 = vpop.f32.mrb[0].mxu0
        %v4630 = vadd.f32 %v4557, %v4629
        %4631 = vmatprep.mubr.bf16.mxu0 0
        %4632 = vmatmul.mubr.bf16.gmra.mrb[0].mxu0 %v4428
        %v4633 = vpop.f32.mrb[0].mxu0
        %v4634 = vadd.f32 %v4561, %v4633
        %v4635 = vpop.f32.mrb[0].mxu0
        %v4636 = vadd.f32 %v4563, %v4635
        %v4637 = vpop.f32.mrb[0].mxu0
        %v4638 = vadd.f32 %v4565, %v4637
        %v4639 = vpop.f32.mrb[0].mxu0
        %v4640 = vadd.f32 %v4567, %v4639
        %4641 = vmatprep.mubr.bf16.mxu0 0
        %4642 = vmatmul.mubr.bf16.gmra.mrb[0].mxu0 %v4431
        %v4643 = vpop.f32.mrb[0].mxu0
        %v4644 = vadd.f32 %v4571, %v4643
        %v4645 = vpop.f32.mrb[0].mxu0
        %v4646 = vadd.f32 %v4573, %v4645
        %v4647 = vpop.f32.mrb[0].mxu0
        %v4648 = vadd.f32 %v4575, %v4647
        %v4649 = vpop.f32.mrb[0].mxu0
        %v4650 = vadd.f32 %v4577, %v4649
        %4651 = vdwg.mxu0
        %4652 = vmatprep.subr.bf16.mxu0 %v4180
        %4653 = vmatpush1.bf16.msra.mxu0 %v4179
        %4654 = vmatprep.subr.bf16.mxu0 %v4184
        %4655 = vmatpush1.bf16.msra.mxu0 %v4183
        %4656 = vmatprep.subr.bf16.mxu0 %v4188
        %4657 = vmatpush1.bf16.msra.mxu0 %v4187
        %4658 = vmatprep.subr.bf16.mxu0 %v4192
        %4659 = vmatpush1.bf16.msra.mxu0 %v4191
        %4660 = vmatprep.subr.bf16.mxu0 %v4196
        %4661 = vmatpush1.bf16.msra.mxu0 %v4195
        %4662 = vmatprep.subr.bf16.mxu0 %v4200
        %4663 = vmatpush1.bf16.msra.mxu0 %v4199
        %4664 = vmatprep.subr.bf16.mxu0 %v4204
        %4665 = vmatpush1.bf16.msra.mxu0 %v4203
        %4666 = vmatprep.subr.bf16.mxu0 %v4208
        %4667 = vmatpush1.bf16.msra.mxu0 %v4207
        %4668 = vmatprep.subr.bf16.mxu0 %v4212
        %4669 = vmatpush1.bf16.msra.mxu0 %v4211
        %4670 = vmatprep.subr.bf16.mxu0 %v4216
        %4671 = vmatpush1.bf16.msra.mxu0 %v4215
        %4672 = vmatprep.subr.bf16.mxu0 %v4220
        %4673 = vmatpush1.bf16.msra.mxu0 %v4219
        %4674 = vmatprep.subr.bf16.mxu0 %v4224
        %4675 = vmatpush1.bf16.msra.mxu0 %v4223
        %4676 = vmatprep.subr.bf16.mxu0 %v4228
        %4677 = vmatpush1.bf16.msra.mxu0 %v4227
        %4678 = vmatprep.subr.bf16.mxu0 %v4232
        %4679 = vmatpush1.bf16.msra.mxu0 %v4231
        %4680 = vmatprep.subr.bf16.mxu0 %v4236
        %4681 = vmatpush1.bf16.msra.mxu0 %v4235
        %4682 = vmatprep.subr.bf16.mxu0 %v4240
        %4683 = vmatpush1.bf16.msra.mxu0 %v4239
        %4684 = vmatprep.mubr.bf16.mxu0 %v4386
        %4685 = vmatmul.mubr.bf16.gmra.mrb[0].mxu0 %v4385
        %v4686 = vpop.f32.mrb[0].mxu0
        %v4687 = vadd.f32 0.0, %v4686
        %v4688 = vpop.f32.mrb[0].mxu0
        %v4689 = vadd.f32 0.0, %v4688
        %v4690 = vpop.f32.mrb[0].mxu0
        %v4691 = vadd.f32 0.0, %v4690
        %v4692 = vpop.f32.mrb[0].mxu0
        %v4693 = vadd.f32 0.0, %v4692
        %4694 = vmatprep.mubr.bf16.mxu0 %v4391
        %4695 = vmatmul.mubr.bf16.gmra.mrb[0].mxu0 %v4390
        %v4696 = vpop.f32.mrb[0].mxu0
        %v4697 = vadd.f32 0.0, %v4696
        %v4698 = vpop.f32.mrb[0].mxu0
        %v4699 = vadd.f32 0.0, %v4698
        %v4700 = vpop.f32.mrb[0].mxu0
        %v4701 = vadd.f32 0.0, %v4700
        %v4702 = vpop.f32.mrb[0].mxu0
        %v4703 = vadd.f32 0.0, %v4702
        %4704 = vmatprep.mubr.bf16.mxu0 %v4396
        %4705 = vmatmul.mubr.bf16.gmra.mrb[0].mxu0 %v4395
        %v4706 = vpop.f32.mrb[0].mxu0
        %v4707 = vadd.f32 0.0, %v4706
        %v4708 = vpop.f32.mrb[0].mxu0
        %v4709 = vadd.f32 0.0, %v4708
        %v4710 = vpop.f32.mrb[0].mxu0
        %v4711 = vadd.f32 0.0, %v4710
        %v4712 = vpop.f32.mrb[0].mxu0
        %v4713 = vadd.f32 0.0, %v4712
        %4714 = vmatprep.mubr.bf16.mxu0 %v4401
        %4715 = vmatmul.mubr.bf16.gmra.mrb[0].mxu0 %v4400
        %v4716 = vpop.f32.mrb[0].mxu0
        %v4717 = vadd.f32 0.0, %v4716
        %v4718 = vpop.f32.mrb[0].mxu0
        %v4719 = vadd.f32 0.0, %v4718
        %v4720 = vpop.f32.mrb[0].mxu0
        %v4721 = vadd.f32 0.0, %v4720
        %v4722 = vpop.f32.mrb[0].mxu0
        %v4723 = vadd.f32 0.0, %v4722
        %4724 = vdwg.mxu0
        %4725 = vmatprep.subr.bf16.mxu0 %v4244
        %4726 = vmatpush1.bf16.msra.mxu0 %v4243
        %4727 = vmatprep.subr.bf16.mxu0 %v4248
        %4728 = vmatpush1.bf16.msra.mxu0 %v4247
        %4729 = vmatprep.subr.bf16.mxu0 %v4252
        %4730 = vmatpush1.bf16.msra.mxu0 %v4251
        %4731 = vmatprep.subr.bf16.mxu0 %v4256
        %4732 = vmatpush1.bf16.msra.mxu0 %v4255
        %4733 = vmatprep.subr.bf16.mxu0 %v4260
        %4734 = vmatpush1.bf16.msra.mxu0 %v4259
        %4735 = vmatprep.subr.bf16.mxu0 %v4264
        %4736 = vmatpush1.bf16.msra.mxu0 %v4263
        %4737 = vmatprep.subr.bf16.mxu0 %v4268
        %4738 = vmatpush1.bf16.msra.mxu0 %v4267
        %4739 = vmatprep.subr.bf16.mxu0 %v4272
        %4740 = vmatpush1.bf16.msra.mxu0 %v4271
        %4741 = vmatprep.subr.bf16.mxu0 %v4276
        %4742 = vmatpush1.bf16.msra.mxu0 %v4275
        %4743 = vmatprep.subr.bf16.mxu0 %v4280
        %4744 = vmatpush1.bf16.msra.mxu0 %v4279
        %4745 = vmatprep.subr.bf16.mxu0 %v4284
        %4746 = vmatpush1.bf16.msra.mxu0 %v4283
        %4747 = vmatprep.subr.bf16.mxu0 %v4288
        %4748 = vmatpush1.bf16.msra.mxu0 %v4287
        %4749 = vmatprep.subr.bf16.mxu0 %v4292
        %4750 = vmatpush1.bf16.msra.mxu0 %v4291
        %4751 = vmatprep.subr.bf16.mxu0 %v4296
        %4752 = vmatpush1.bf16.msra.mxu0 %v4295
        %4753 = vmatprep.subr.bf16.mxu0 %v4300
        %4754 = vmatpush1.bf16.msra.mxu0 %v4299
        %4755 = vmatprep.subr.bf16.mxu0 %v4304
        %4756 = vmatpush1.bf16.msra.mxu0 %v4303
        %4757 = vmatprep.mubr.bf16.mxu0 %v4388
        %4758 = vmatmul.mubr.bf16.gmra.mrb[0].mxu0 %v4387
        %v4759 = vpop.f32.mrb[0].mxu0
        %v4760 = vadd.f32 %v4687, %v4759
        %v4761 = vpop.f32.mrb[0].mxu0
        %v4762 = vadd.f32 %v4689, %v4761
        %v4763 = vpop.f32.mrb[0].mxu0
        %v4764 = vadd.f32 %v4691, %v4763
        %v4765 = vpop.f32.mrb[0].mxu0
        %v4766 = vadd.f32 %v4693, %v4765
        %4767 = vmatprep.mubr.bf16.mxu0 %v4393
        %4768 = vmatmul.mubr.bf16.gmra.mrb[0].mxu0 %v4392
        %v4769 = vpop.f32.mrb[0].mxu0
        %v4770 = vadd.f32 %v4697, %v4769
        %v4771 = vpop.f32.mrb[0].mxu0
        %v4772 = vadd.f32 %v4699, %v4771
        %v4773 = vpop.f32.mrb[0].mxu0
        %v4774 = vadd.f32 %v4701, %v4773
        %v4775 = vpop.f32.mrb[0].mxu0
        %v4776 = vadd.f32 %v4703, %v4775
        %4777 = vmatprep.mubr.bf16.mxu0 %v4398
        %4778 = vmatmul.mubr.bf16.gmra.mrb[0].mxu0 %v4397
        %v4779 = vpop.f32.mrb[0].mxu0
        %v4780 = vadd.f32 %v4707, %v4779
        %v4781 = vpop.f32.mrb[0].mxu0
        %v4782 = vadd.f32 %v4709, %v4781
        %v4783 = vpop.f32.mrb[0].mxu0
        %v4784 = vadd.f32 %v4711, %v4783
        %v4785 = vpop.f32.mrb[0].mxu0
        %v4786 = vadd.f32 %v4713, %v4785
        %4787 = vmatprep.mubr.bf16.mxu0 %v4403
        %4788 = vmatmul.mubr.bf16.gmra.mrb[0].mxu0 %v4402
        %v4789 = vpop.f32.mrb[0].mxu0
        %v4790 = vadd.f32 %v4717, %v4789
        %v4791 = vpop.f32.mrb[0].mxu0
        %v4792 = vadd.f32 %v4719, %v4791
        %v4793 = vpop.f32.mrb[0].mxu0
        %v4794 = vadd.f32 %v4721, %v4793
        %v4795 = vpop.f32.mrb[0].mxu0
        %v4796 = vadd.f32 %v4723, %v4795
        %4797 = vdwg.mxu0
        %4798 = vmatprep.subr.bf16.mxu0 %v4308
        %4799 = vmatpush1.bf16.msra.mxu0 %v4307
        %4800 = vmatprep.subr.bf16.mxu0 %v4312
        %4801 = vmatpush1.bf16.msra.mxu0 %v4311
        %4802 = vmatprep.subr.bf16.mxu0 %v4316
        %4803 = vmatpush1.bf16.msra.mxu0 %v4315
        %4804 = vmatprep.subr.bf16.mxu0 %v4320
        %4805 = vmatpush1.bf16.msra.mxu0 %v4319
        %4806 = vmatprep.subr.bf16.mxu0 0
        %4807 = vmatpush1.bf16.msra.mxu0 0
        %4808 = vmatprep.subr.bf16.mxu0 0
        %4809 = vmatpush1.bf16.msra.mxu0 0
        %4810 = vmatprep.subr.bf16.mxu0 0
        %4811 = vmatpush1.bf16.msra.mxu0 0
        %4812 = vmatprep.subr.bf16.mxu0 0
        %4813 = vmatpush1.bf16.msra.mxu0 0
        %4814 = vmatprep.subr.bf16.mxu0 0
        %4815 = vmatpush1.bf16.msra.mxu0 0
        %4816 = vmatprep.subr.bf16.mxu0 0
        %4817 = vmatpush1.bf16.msra.mxu0 0
        %4818 = vmatprep.subr.bf16.mxu0 0
        %4819 = vmatpush1.bf16.msra.mxu0 0
        %4820 = vmatprep.subr.bf16.mxu0 0
        %4821 = vmatpush1.bf16.msra.mxu0 0
        %4822 = vmatprep.subr.bf16.mxu0 0
        %4823 = vmatpush1.bf16.msra.mxu0 0
        %4824 = vmatprep.subr.bf16.mxu0 0
        %4825 = vmatpush1.bf16.msra.mxu0 0
        %4826 = vmatprep.subr.bf16.mxu0 0
        %4827 = vmatpush1.bf16.msra.mxu0 0
        %4828 = vmatprep.subr.bf16.mxu0 0
        %4829 = vmatpush1.bf16.msra.mxu0 0
        %4830 = vmatprep.mubr.bf16.mxu0 0
        %4831 = vmatmul.mubr.bf16.gmra.mrb[0].mxu0 %v4422
        %v4832 = vpop.f32.mrb[0].mxu0
        %v4833 = vadd.f32 %v4760, %v4832
        %v4834 = vpop.f32.mrb[0].mxu0
        %v4835 = vadd.f32 %v4762, %v4834
        %v4836 = vpop.f32.mrb[0].mxu0
        %v4837 = vadd.f32 %v4764, %v4836
        %v4838 = vpop.f32.mrb[0].mxu0
        %v4839 = vadd.f32 %v4766, %v4838
        %4840 = vmatprep.mubr.bf16.mxu0 0
        %4841 = vmatmul.mubr.bf16.gmra.mrb[0].mxu0 %v4425
        %v4842 = vpop.f32.mrb[0].mxu0
        %v4843 = vadd.f32 %v4770, %v4842
        %v4844 = vpop.f32.mrb[0].mxu0
        %v4845 = vadd.f32 %v4772, %v4844
        %v4846 = vpop.f32.mrb[0].mxu0
        %v4847 = vadd.f32 %v4774, %v4846
        %v4848 = vpop.f32.mrb[0].mxu0
        %v4849 = vadd.f32 %v4776, %v4848
        %4850 = vmatprep.mubr.bf16.mxu0 0
        %4851 = vmatmul.mubr.bf16.gmra.mrb[0].mxu0 %v4428
        %v4852 = vpop.f32.mrb[0].mxu0
        %v4853 = vadd.f32 %v4780, %v4852
        %v4854 = vpop.f32.mrb[0].mxu0
        %v4855 = vadd.f32 %v4782, %v4854
        %v4856 = vpop.f32.mrb[0].mxu0
        %v4857 = vadd.f32 %v4784, %v4856
        %v4858 = vpop.f32.mrb[0].mxu0
        %v4859 = vadd.f32 %v4786, %v4858
        %4860 = vmatprep.mubr.bf16.mxu0 0
        %4861 = vmatmul.mubr.bf16.gmra.mrb[0].mxu0 %v4431
        %v4862 = vpop.f32.mrb[0].mxu0
        %v4863 = vadd.f32 %v4790, %v4862
        %v4864 = vpop.f32.mrb[0].mxu0
        %v4865 = vadd.f32 %v4792, %v4864
        %v4866 = vpop.f32.mrb[0].mxu0
        %v4867 = vadd.f32 %v4794, %v4866
        %v4868 = vpop.f32.mrb[0].mxu0
        %v4869 = vadd.f32 %v4796, %v4868
        %4870 = vdwg.mxu0
        %4871 = vst [vmem:[#allocation4] sm:$0xff] %v4614
        %4872 = vst [vmem:[#allocation4 + $0x8] sm:$0xff] %v4616
        %4873 = vst [vmem:[#allocation4 + $0x10] sm:$0xff] %v4833
        %4874 = vst [vmem:[#allocation4 + $0x18] sm:$0xff] %v4835
        %4875 = vst [vmem:[#allocation4 + $0x20] sm:$0xff] %v4618
        %4876 = vst [vmem:[#allocation4 + $0x28] sm:$0xff] %v4620
        %4877 = vst [vmem:[#allocation4 + $0x30] sm:$0xff] %v4837
        %4878 = vst [vmem:[#allocation4 + $0x38] sm:$0xff] %v4839
        %4879 = vst [vmem:[#allocation4 + $0x40] sm:$0xff] %v4624
        %4880 = vst [vmem:[#allocation4 + $0x48] sm:$0xff] %v4626
        %4881 = vst [vmem:[#allocation4 + $0x50] sm:$0xff] %v4843
        %4882 = vst [vmem:[#allocation4 + $0x58] sm:$0xff] %v4845
        %4883 = vst [vmem:[#allocation4 + $0x60] sm:$0xff] %v4628
        %4884 = vst [vmem:[#allocation4 + $0x68] sm:$0xff] %v4630
        %4885 = vst [vmem:[#allocation4 + $0x70] sm:$0xff] %v4847
        %4886 = vst [vmem:[#allocation4 + $0x78] sm:$0xff] %v4849
        %4887 = vst [vmem:[#allocation4 + $0x80] sm:$0xff] %v4634
        %4888 = vst [vmem:[#allocation4 + $0x88] sm:$0xff] %v4636
        %4889 = vst [vmem:[#allocation4 + $0x90] sm:$0xff] %v4853
        %4890 = vst [vmem:[#allocation4 + $0x98] sm:$0xff] %v4855
        %4891 = vst [vmem:[#allocation4 + $0xa0] sm:$0xff] %v4638
        %4892 = vst [vmem:[#allocation4 + $0xa8] sm:$0xff] %v4640
        %4893 = vst [vmem:[#allocation4 + $0xb0] sm:$0xff] %v4857
        %4894 = vst [vmem:[#allocation4 + $0xb8] sm:$0xff] %v4859
        %4895 = vst [vmem:[#allocation4 + $0xc0] sm:$0xff] %v4644
        %4896 = vst [vmem:[#allocation4 + $0xc8] sm:$0xff] %v4646
        %4897 = vst [vmem:[#allocation4 + $0xd0] sm:$0xff] %v4863
        %4898 = vst [vmem:[#allocation4 + $0xd8] sm:$0xff] %v4865
        %4899 = vst [vmem:[#allocation4 + $0xe0] sm:$0xff] %v4648
        %4900 = vst [vmem:[#allocation4 + $0xe8] sm:$0xff] %v4650
        %4901 = vst [vmem:[#allocation4 + $0xf0] sm:$0xff] %v4867
        %4902 = vst [vmem:[#allocation4 + $0xf8] sm:$0xff] %v4869
        %v4903 = vld [vmem:[%s4] sm:$0xff]
        %v4904 = vld [vmem:[%s4 + $0x8] sm:$0xff]
        %v4905 = vld [vmem:[%s4 + $0x10] sm:$0xff]
        %v4906 = vld [vmem:[%s4 + $0x18] sm:$0xff]
        %v4907 = vld [vmem:[%s4 + $0x20] sm:$0xff]
        %v4908 = vld [vmem:[%s4 + $0x28] sm:$0xff]
        %v4909 = vld [vmem:[%s4 + $0x30] sm:$0xff]
        %v4910 = vld [vmem:[%s4 + $0x38] sm:$0xff]
        %v4911 = vld [vmem:[#allocation4] sm:$0xff]
        %v4912 = vld [vmem:[#allocation4 + $0x8] sm:$0xff]
        %v4913 = vld [vmem:[#allocation4 + $0x20] sm:$0xff]
        %v4914 = vld [vmem:[#allocation4 + $0x28] sm:$0xff]
        %v4915 = vld [vmem:[#allocation4 + $0x40] sm:$0xff]
        %v4916 = vld [vmem:[#allocation4 + $0x48] sm:$0xff]
        %v4917 = vld [vmem:[#allocation4 + $0x60] sm:$0xff]
        %v4918 = vld [vmem:[#allocation4 + $0x68] sm:$0xff]
        %v4919 = vld [vmem:[#allocation4 + $0x80] sm:$0xff]
        %v4920 = vld [vmem:[#allocation4 + $0x88] sm:$0xff]
        %v4921 = vld [vmem:[#allocation4 + $0xa0] sm:$0xff]
        %v4922 = vld [vmem:[#allocation4 + $0xa8] sm:$0xff]
        %v4923 = vld [vmem:[#allocation4 + $0xc0] sm:$0xff]
        %v4924 = vld [vmem:[#allocation4 + $0xc8] sm:$0xff]
        %v4925 = vld [vmem:[#allocation4 + $0xe0] sm:$0xff]
        %v4926 = vld [vmem:[#allocation4 + $0xe8] sm:$0xff]
        %4928 = vset.pattern.permute.xlu0 0
        %4929 = vperm.xlu0 %4928, %v4903
        %v4930 = vpop.permute.xlu0 %4929
        %4933 = vset.pattern.permute.xlu0 0
        %4934 = vperm.xlu0 %4933, %v4904
        %v4935 = vpop.permute.xlu0 %4934
        %4938 = vset.pattern.permute.xlu0 0
        %4939 = vperm.xlu0 %4938, %v4905
        %v4940 = vpop.permute.xlu0 %4939
        %4943 = vset.pattern.permute.xlu0 0
        %4944 = vperm.xlu0 %4943, %v4906
        %v4945 = vpop.permute.xlu0 %4944
        %4948 = vset.pattern.permute.xlu0 0
        %4949 = vperm.xlu0 %4948, %v4907
        %v4950 = vpop.permute.xlu0 %4949
        %4953 = vset.pattern.permute.xlu0 0
        %4954 = vperm.xlu0 %4953, %v4908
        %v4955 = vpop.permute.xlu0 %4954
        %4958 = vset.pattern.permute.xlu0 0
        %4959 = vperm.xlu0 %4958, %v4909
        %v4960 = vpop.permute.xlu0 %4959
        %4963 = vset.pattern.permute.xlu0 0
        %4964 = vperm.xlu0 %4963, %v4910
        %v4965 = vpop.permute.xlu0 %4964
        %v4967 = vadd.f32 %v4911, %v4930
        %v4968 = vadd.f32 %v4912, %v4930
        %v4969 = vadd.f32 %v4913, %v4935
        %v4970 = vadd.f32 %v4914, %v4935
        %v4971 = vadd.f32 %v4915, %v4940
        %v4972 = vadd.f32 %v4916, %v4940
        %v4973 = vadd.f32 %v4917, %v4945
        %v4974 = vadd.f32 %v4918, %v4945
        %v4975 = vadd.f32 %v4919, %v4950
        %v4976 = vadd.f32 %v4920, %v4950
        %v4977 = vadd.f32 %v4921, %v4955
        %v4978 = vadd.f32 %v4922, %v4955
        %v4979 = vadd.f32 %v4923, %v4960
        %v4980 = vadd.f32 %v4924, %v4960
        %v4981 = vadd.f32 %v4925, %v4965
        %v4982 = vadd.f32 %v4926, %v4965
        %v4983 = vld [vmem:[%s264] sm:$0xff]
        %v4984 = vld [vmem:[%s264 + $0x8] sm:$0xff]
        %v4985 = vld [vmem:[%s264 + $0x10] sm:$0xff]
        %v4986 = vld [vmem:[%s264 + $0x18] sm:$0xff]
        %v4987 = vld [vmem:[%s264 + $0x20] sm:$0xff]
        %v4988 = vld [vmem:[%s264 + $0x28] sm:$0xff]
        %v4989 = vld [vmem:[%s264 + $0x30] sm:$0xff]
        %v4990 = vld [vmem:[%s264 + $0x38] sm:$0xff]
        %v4991 = vld [vmem:[%s264 + $0x40] sm:$0xff]
        %v4992 = vld [vmem:[%s264 + $0x48] sm:$0xff]
        %v4993 = vld [vmem:[%s264 + $0x50] sm:$0xff]
        %v4994 = vld [vmem:[%s264 + $0x58] sm:$0xff]
        %v4995 = vld [vmem:[%s264 + $0x60] sm:$0xff]
        %v4996 = vld [vmem:[%s264 + $0x68] sm:$0xff]
        %v4997 = vld [vmem:[%s264 + $0x70] sm:$0xff]
        %v4998 = vld [vmem:[%s264 + $0x78] sm:$0xff]
        %v4999 = vadd.f32 %v4967, %v4983
        %v5000 = vadd.f32 %v4968, %v4984
        %v5001 = vadd.f32 %v4969, %v4985
        %v5002 = vadd.f32 %v4970, %v4986
        %v5003 = vadd.f32 %v4971, %v4987
        %v5004 = vadd.f32 %v4972, %v4988
        %v5005 = vadd.f32 %v4973, %v4989
        %v5006 = vadd.f32 %v4974, %v4990
        %v5007 = vadd.f32 %v4975, %v4991
        %v5008 = vadd.f32 %v4976, %v4992
        %v5009 = vadd.f32 %v4977, %v4993
        %v5010 = vadd.f32 %v4978, %v4994
        %v5011 = vadd.f32 %v4979, %v4995
        %v5012 = vadd.f32 %v4980, %v4996
        %v5013 = vadd.f32 %v4981, %v4997
        %v5014 = vadd.f32 %v4982, %v4998
        %vm5015 = vcmp.ge.f32.partialorder %v4999, 0.0
        %vm5016 = vcmp.ge.f32.partialorder %v5000, 0.0
        %vm5017 = vcmp.ge.f32.partialorder %v5001, 0.0
        %vm5018 = vcmp.ge.f32.partialorder %v5002, 0.0
        %vm5019 = vcmp.ge.f32.partialorder %v5003, 0.0
        %vm5020 = vcmp.ge.f32.partialorder %v5004, 0.0
        %vm5021 = vcmp.ge.f32.partialorder %v5005, 0.0
        %vm5022 = vcmp.ge.f32.partialorder %v5006, 0.0
        %vm5023 = vcmp.ge.f32.partialorder %v5007, 0.0
        %vm5024 = vcmp.ge.f32.partialorder %v5008, 0.0
        %vm5025 = vcmp.ge.f32.partialorder %v5009, 0.0
        %vm5026 = vcmp.ge.f32.partialorder %v5010, 0.0
        %vm5027 = vcmp.ge.f32.partialorder %v5011, 0.0
        %vm5028 = vcmp.ge.f32.partialorder %v5012, 0.0
        %vm5029 = vcmp.ge.f32.partialorder %v5013, 0.0
        %vm5030 = vcmp.ge.f32.partialorder %v5014, 0.0
        %v5031 = vmul.f32 %v2680, %v4999
        %v5032 = vmul.f32 %v2680, %v5000
        %v5033 = vmul.f32 %v2680, %v5001
        %v5034 = vmul.f32 %v2680, %v5002
        %v5035 = vmul.f32 %v2680, %v5003
        %v5036 = vmul.f32 %v2680, %v5004
        %v5037 = vmul.f32 %v2680, %v5005
        %v5038 = vmul.f32 %v2680, %v5006
        %v5039 = vmul.f32 %v2680, %v5007
        %v5040 = vmul.f32 %v2680, %v5008
        %v5041 = vmul.f32 %v2680, %v5009
        %v5042 = vmul.f32 %v2680, %v5010
        %v5043 = vmul.f32 %v2680, %v5011
        %v5044 = vmul.f32 %v2680, %v5012
        %v5045 = vmul.f32 %v2680, %v5013
        %v5046 = vmul.f32 %v2680, %v5014
        %v5047 = vsel %vm5015, %v4999, %v5031
        %v5048 = vsel %vm5016, %v5000, %v5032
        %v5049 = vsel %vm5017, %v5001, %v5033
        %v5050 = vsel %vm5018, %v5002, %v5034
        %v5051 = vsel %vm5019, %v5003, %v5035
        %v5052 = vsel %vm5020, %v5004, %v5036
        %v5053 = vsel %vm5021, %v5005, %v5037
        %v5054 = vsel %vm5022, %v5006, %v5038
        %v5055 = vsel %vm5023, %v5007, %v5039
        %v5056 = vsel %vm5024, %v5008, %v5040
        %v5057 = vsel %vm5025, %v5009, %v5041
        %v5058 = vsel %vm5026, %v5010, %v5042
        %v5059 = vsel %vm5027, %v5011, %v5043
        %v5060 = vsel %vm5028, %v5012, %v5044
        %v5061 = vsel %vm5029, %v5013, %v5045
        %v5062 = vsel %vm5030, %v5014, %v5046
        %5063 = vst [vmem:[%s300] sm:$0xff] %v5047
        %5064 = vst [vmem:[%s300 + $0x8] sm:$0xff] %v5048
        %5065 = vst [vmem:[%s300 + $0x10] sm:$0xff] %v5049
        %5066 = vst [vmem:[%s300 + $0x18] sm:$0xff] %v5050
        %5067 = vst [vmem:[%s300 + $0x20] sm:$0xff] %v5051
        %5068 = vst [vmem:[%s300 + $0x28] sm:$0xff] %v5052
        %5069 = vst [vmem:[%s300 + $0x30] sm:$0xff] %v5053
        %5070 = vst [vmem:[%s300 + $0x38] sm:$0xff] %v5054
        %5071 = vst [vmem:[%s300 + $0x40] sm:$0xff] %v5055
        %5072 = vst [vmem:[%s300 + $0x48] sm:$0xff] %v5056
        %5073 = vst [vmem:[%s300 + $0x50] sm:$0xff] %v5057
        %5074 = vst [vmem:[%s300 + $0x58] sm:$0xff] %v5058
        %5075 = vst [vmem:[%s300 + $0x60] sm:$0xff] %v5059
        %5076 = vst [vmem:[%s300 + $0x68] sm:$0xff] %v5060
        %5077 = vst [vmem:[%s300 + $0x70] sm:$0xff] %v5061
        %5078 = vst [vmem:[%s300 + $0x78] sm:$0xff] %v5062
        %v5079 = vld [vmem:[#allocation4 + $0x10] sm:$0xff]
        %v5080 = vld [vmem:[#allocation4 + $0x18] sm:$0xff]
        %v5081 = vld [vmem:[#allocation4 + $0x30] sm:$0xff]
        %v5082 = vld [vmem:[#allocation4 + $0x38] sm:$0xff]
        %v5083 = vld [vmem:[#allocation4 + $0x50] sm:$0xff]
        %v5084 = vld [vmem:[#allocation4 + $0x58] sm:$0xff]
        %v5085 = vld [vmem:[#allocation4 + $0x70] sm:$0xff]
        %v5086 = vld [vmem:[#allocation4 + $0x78] sm:$0xff]
        %v5087 = vld [vmem:[#allocation4 + $0x90] sm:$0xff]
        %v5088 = vld [vmem:[#allocation4 + $0x98] sm:$0xff]
        %v5089 = vld [vmem:[#allocation4 + $0xb0] sm:$0xff]
        %v5090 = vld [vmem:[#allocation4 + $0xb8] sm:$0xff]
        %v5091 = vld [vmem:[#allocation4 + $0xd0] sm:$0xff]
        %v5092 = vld [vmem:[#allocation4 + $0xd8] sm:$0xff]
        %v5093 = vld [vmem:[#allocation4 + $0xf0] sm:$0xff]
        %v5094 = vld [vmem:[#allocation4 + $0xf8] sm:$0xff]
        %v5095 = vadd.f32 %v5079, %v4930
        %v5096 = vadd.f32 %v5080, %v4930
        %v5097 = vadd.f32 %v5081, %v4935
        %v5098 = vadd.f32 %v5082, %v4935
        %v5099 = vadd.f32 %v5083, %v4940
        %v5100 = vadd.f32 %v5084, %v4940
        %v5101 = vadd.f32 %v5085, %v4945
        %v5102 = vadd.f32 %v5086, %v4945
        %v5103 = vadd.f32 %v5087, %v4950
        %v5104 = vadd.f32 %v5088, %v4950
        %v5105 = vadd.f32 %v5089, %v4955
        %v5106 = vadd.f32 %v5090, %v4955
        %v5107 = vadd.f32 %v5091, %v4960
        %v5108 = vadd.f32 %v5092, %v4960
        %v5109 = vadd.f32 %v5093, %v4965
        %v5110 = vadd.f32 %v5094, %v4965
        %v5111 = vld [vmem:[%s388] sm:$0xff]
        %v5112 = vld [vmem:[%s388 + $0x8] sm:$0xff]
        %v5113 = vld [vmem:[%s388 + $0x10] sm:$0xff]
        %v5114 = vld [vmem:[%s388 + $0x18] sm:$0xff]
        %v5115 = vld [vmem:[%s388 + $0x20] sm:$0xff]
        %v5116 = vld [vmem:[%s388 + $0x28] sm:$0xff]
        %v5117 = vld [vmem:[%s388 + $0x30] sm:$0xff]
        %v5118 = vld [vmem:[%s388 + $0x38] sm:$0xff]
        %v5119 = vld [vmem:[%s388 + $0x40] sm:$0xff]
        %v5120 = vld [vmem:[%s388 + $0x48] sm:$0xff]
        %v5121 = vld [vmem:[%s388 + $0x50] sm:$0xff]
        %v5122 = vld [vmem:[%s388 + $0x58] sm:$0xff]
        %v5123 = vld [vmem:[%s388 + $0x60] sm:$0xff]
        %v5124 = vld [vmem:[%s388 + $0x68] sm:$0xff]
        %v5125 = vld [vmem:[%s388 + $0x70] sm:$0xff]
        %v5126 = vld [vmem:[%s388 + $0x78] sm:$0xff]
        %v5127 = vadd.f32 %v5095, %v5111
        %v5128 = vadd.f32 %v5096, %v5112
        %v5129 = vadd.f32 %v5097, %v5113
        %v5130 = vadd.f32 %v5098, %v5114
        %v5131 = vadd.f32 %v5099, %v5115
        %v5132 = vadd.f32 %v5100, %v5116
        %v5133 = vadd.f32 %v5101, %v5117
        %v5134 = vadd.f32 %v5102, %v5118
        %v5135 = vadd.f32 %v5103, %v5119
        %v5136 = vadd.f32 %v5104, %v5120
        %v5137 = vadd.f32 %v5105, %v5121
        %v5138 = vadd.f32 %v5106, %v5122
        %v5139 = vadd.f32 %v5107, %v5123
        %v5140 = vadd.f32 %v5108, %v5124
        %v5141 = vadd.f32 %v5109, %v5125
        %v5142 = vadd.f32 %v5110, %v5126
        %vm5143 = vcmp.ge.f32.partialorder %v5127, 0.0
        %vm5144 = vcmp.ge.f32.partialorder %v5128, 0.0
        %vm5145 = vcmp.ge.f32.partialorder %v5129, 0.0
        %vm5146 = vcmp.ge.f32.partialorder %v5130, 0.0
        %vm5147 = vcmp.ge.f32.partialorder %v5131, 0.0
        %vm5148 = vcmp.ge.f32.partialorder %v5132, 0.0
        %vm5149 = vcmp.ge.f32.partialorder %v5133, 0.0
        %vm5150 = vcmp.ge.f32.partialorder %v5134, 0.0
        %vm5151 = vcmp.ge.f32.partialorder %v5135, 0.0
        %vm5152 = vcmp.ge.f32.partialorder %v5136, 0.0
        %vm5153 = vcmp.ge.f32.partialorder %v5137, 0.0
        %vm5154 = vcmp.ge.f32.partialorder %v5138, 0.0
        %vm5155 = vcmp.ge.f32.partialorder %v5139, 0.0
        %vm5156 = vcmp.ge.f32.partialorder %v5140, 0.0
        %vm5157 = vcmp.ge.f32.partialorder %v5141, 0.0
        %vm5158 = vcmp.ge.f32.partialorder %v5142, 0.0
        %v5159 = vmul.f32 %v2680, %v5127
        %v5160 = vmul.f32 %v2680, %v5128
        %v5161 = vmul.f32 %v2680, %v5129
        %v5162 = vmul.f32 %v2680, %v5130
        %v5163 = vmul.f32 %v2680, %v5131
        %v5164 = vmul.f32 %v2680, %v5132
        %v5165 = vmul.f32 %v2680, %v5133
        %v5166 = vmul.f32 %v2680, %v5134
        %v5167 = vmul.f32 %v2680, %v5135
        %v5168 = vmul.f32 %v2680, %v5136
        %v5169 = vmul.f32 %v2680, %v5137
        %v5170 = vmul.f32 %v2680, %v5138
        %v5171 = vmul.f32 %v2680, %v5139
        %v5172 = vmul.f32 %v2680, %v5140
        %v5173 = vmul.f32 %v2680, %v5141
        %v5174 = vmul.f32 %v2680, %v5142
        %v5175 = vsel %vm5143, %v5127, %v5159
        %v5176 = vsel %vm5144, %v5128, %v5160
        %v5177 = vsel %vm5145, %v5129, %v5161
        %v5178 = vsel %vm5146, %v5130, %v5162
        %v5179 = vsel %vm5147, %v5131, %v5163
        %v5180 = vsel %vm5148, %v5132, %v5164
        %v5181 = vsel %vm5149, %v5133, %v5165
        %v5182 = vsel %vm5150, %v5134, %v5166
        %v5183 = vsel %vm5151, %v5135, %v5167
        %v5184 = vsel %vm5152, %v5136, %v5168
        %v5185 = vsel %vm5153, %v5137, %v5169
        %v5186 = vsel %vm5154, %v5138, %v5170
        %v5187 = vsel %vm5155, %v5139, %v5171
        %v5188 = vsel %vm5156, %v5140, %v5172
        %v5189 = vsel %vm5157, %v5141, %v5173
        %v5190 = vsel %vm5158, %v5142, %v5174
        %s5191 = scalar_lea.vmem %s300, 128 [#allocation12]
        %5192 = vst [vmem:[%s5191] sm:$0xff] %v5175
        %5193 = vst [vmem:[%s5191 + $0x8] sm:$0xff] %v5176
        %5194 = vst [vmem:[%s5191 + $0x10] sm:$0xff] %v5177
        %5195 = vst [vmem:[%s5191 + $0x18] sm:$0xff] %v5178
        %5196 = vst [vmem:[%s5191 + $0x20] sm:$0xff] %v5179
        %5197 = vst [vmem:[%s5191 + $0x28] sm:$0xff] %v5180
        %5198 = vst [vmem:[%s5191 + $0x30] sm:$0xff] %v5181
        %5199 = vst [vmem:[%s5191 + $0x38] sm:$0xff] %v5182
        %5200 = vst [vmem:[%s5191 + $0x40] sm:$0xff] %v5183
        %5201 = vst [vmem:[%s5191 + $0x48] sm:$0xff] %v5184
        %5202 = vst [vmem:[%s5191 + $0x50] sm:$0xff] %v5185
        %5203 = vst [vmem:[%s5191 + $0x58] sm:$0xff] %v5186
        %5204 = vst [vmem:[%s5191 + $0x60] sm:$0xff] %v5187
        %5205 = vst [vmem:[%s5191 + $0x68] sm:$0xff] %v5188
        %5206 = vst [vmem:[%s5191 + $0x70] sm:$0xff] %v5189
        %5207 = vst [vmem:[%s5191 + $0x78] sm:$0xff] %v5190
        %s5208 = sand.u32 %s164, 1
        %s5209 = scalar_lea.sflag [#allocation8], %s5208
        %s5210 = sand.u32 %s164, 1
        %s5211 = smul.addr %s5210, 256
        %s5212 = scalar_lea.vmem [#allocation12], %s5211
        // Predicated region
        $region57: #{tpu_custom_call.1} parent=43 // pred_check
          %p5213 = pneg %p174
        $region58: #{tpu_custom_call.1} parent=43 // pred_check_branch
          %5215 = sbr.rel (%p5213) target = $region60
        $region59: #{tpu_custom_call.1} parent=43 // pred_region
          %s5216 = smul.u32 2, %s25
          %s5218 = ssub.s32 4096, 4096
          %5219 = vsyncadd %s5209, %s5218
          %s5220 = smul.addr %s5216, 16
          %s5221 = smul.addr %s5220, 128
          %s5222 = scalar_lea.hbm %s6, %s5221
          %s5223 = sshll.u32 %s5212, 4
          %s5224 = int_to_ptr.vmem [resolvable:$true] %s5223
          %5229 = dma.vmem_to_hbm [thread:$0]  %s5224, 4096, %s5222, %s5209, 256, 256, 16
        $region60: #{tpu_custom_call.1} parent=43 // pred_fallthru
          _
      $region44: #{tpu_custom_call.1} parent=5 // pred_fallthru
        _
      %p5230 = scmp.le.s32.totalorder 2, %s20
      // Predicated region
      $region61: #{tpu_custom_call.1} parent=5 // pred_check
        %p5231 = pneg %p5230
      $region62: #{tpu_custom_call.1} parent=5 // pred_check_branch
        %5233 = sbr.rel (%p5231) target = $region64
      $region63: #{tpu_custom_call.1} parent=5 // pred_region
        %s5234 = ssub.s32 %s20, 2
        // Predicated region
        $region65: #{tpu_custom_call.1} parent=63 // pred_check
          %p5235 = pneg %p180
        $region66: #{tpu_custom_call.1} parent=63 // pred_check_branch
          %5237 = sbr.rel (%p5235) target = $region68
        $region67: #{tpu_custom_call.1} parent=63 // pred_region
          %s5238 = sand.u32 %s165, 1
          %s5239 = scalar_lea.sflag [#allocation8], %s5238
          %s5240 = sand.u32 %s165, 1
          %s5241 = smul.addr %s5240, 256
          %s5242 = scalar_lea.vmem [#allocation12], %s5241
          %5243 = dma.done %s5239, 4096
        $region68: #{tpu_custom_call.1} parent=63 // pred_fallthru
          _
      $region64: #{tpu_custom_call.1} parent=5 // pred_fallthru
        _
    $region6: #{tpu_custom_call.1} parent=1 // loop_footer
      %s24 = sadd.s32 1, %s20
    $region7: #{tpu_custom_call.1} parent=1 // loop_footer_branch
      %19 = sbr.rel target = $region3
    $region8: #{tpu_custom_call.1} parent=1 // loop_exit
      _
    %5244 = vsyncpa [#allocation7], 1
    %s5245 = scalar_lea.sflag [#allocation7], 1
    %5246 = vsyncpa %s5245, 1
    %5247 = vsyncpa [#allocation10], 1
    %5248 = vsyncpa [#allocation8], 1
    %s5249 = scalar_lea.sflag [#allocation8], 1
    %5250 = vsyncpa %s5249, 1

</llo_original>
